<compile_context>
chip_gen: v7x
topology: tpu7x:2x2x1
jax: 0.10.0
libtpu: 0.0.40
codegen_flags: <defaults>
</compile_context>

<pallas_src>
import jax
import jax.numpy as jnp
from jax.experimental import pallas as pl
from jax.experimental.pallas import tpu as pltpu

# Feature dims of the torchvision backbones referenced by EnsembleThree.__init__
FEATS1 = 2048   # models.resnet101().fc.in_features
FEATS2 = 2048   # models.resnext50_32x4d().fc.in_features
FEATS3 = 1920   # models.densenet201().classifier.in_features
D_FEATS = FEATS1 + FEATS2 + FEATS3          # 6016 = 47 * 128 (already lane-dense)
NUM_CLASSES = 10
OUT_PAD = 128                               # lane-dense padded logits width


def _round_up(x, m):
    return (x + m - 1) // m * m


# ---------------------------------------------------------------------------
# Fused kernel: pool-accumulate over HW chunks, then (proj -> ReLU -> classify)
# ---------------------------------------------------------------------------
def _fused_kernel(x_ref, w_all_ref, wc_ref, bc_ref, o_ref, acc_ref):
    # x_ref   : (TN, C, THW)  f32   input chunk (zero-padded in N and HW)
    # w_all   : (C, 6016)     bf16  concat backbone proj, pre-scaled by 1/HW
    # wc      : (6016, 128)   bf16  classifier weight (zero-padded cols)
    # bc      : (1, 128)      f32   classifier bias (zero-padded)
    # o_ref   : (TN, 128)     f32   padded logits
    # acc_ref : (TN, C)       f32   running spatial-sum accumulator
    k = pl.program_id(1)

    @pl.when(k == 0)
    def _():
        acc_ref[...] = jnp.zeros_like(acc_ref)

    # Partial spatial sum over this HW chunk (modest lane-tile reduce that
    # overlaps with the DMA of the next chunk).
    acc_ref[...] += jnp.sum(x_ref[...], axis=2)

    @pl.when(k == pl.num_programs(1) - 1)
    def _():
        # Global-avg-pool scale (1/HW) is folded into w_all.
        pooled = acc_ref[...].astype(jnp.bfloat16)                  # (TN, C)
        feats = jnp.dot(pooled, w_all_ref[...],
                        preferred_element_type=jnp.float32)         # (TN, 6016)
        feats = jnp.maximum(feats, 0.0).astype(jnp.bfloat16)        # ReLU
        o_ref[...] = (jnp.dot(feats, wc_ref[...],
                              preferred_element_type=jnp.float32)   # (TN, 128)
                      + bc_ref[...])


# ---------------------------------------------------------------------------
# Wrapper: padding / tiling / weight packing + pallas_call
# ---------------------------------------------------------------------------
@jax.jit
def ensemble_three_forward(x, params):
    w1, w2, w3, wc, bc = params
    n, c, h, w = x.shape
    hw = h * w

    # --- batch tiling: pad to sublane multiple, tile ("parallel" axis) ------
    n_pad = _round_up(n, 8)
    if n_pad > 128:
        n_pad = _round_up(n_pad, 128)
        tn = 128
    else:
        tn = n_pad

    # --- HW tiling: lane-multiple chunks, per-step x tile <= ~2 MiB ---------
    hw_pad = _round_up(hw, 128)
    max_thw = max(128, (2 * 1024 * 1024) // (tn * c * 4))
    max_thw -= max_thw % 128
    thw = min(hw_pad, max_thw)
    hw_pad = _round_up(hw_pad, thw)          # zero padding: no effect on sums

    x3 = x.reshape(n, c, hw)
    x3 = jnp.pad(x3, ((0, n_pad - n), (0, 0), (0, hw_pad - hw)))

    # --- weight packing: concat backbones, fold 1/HW, pad classifier, bf16 --
    w_all = (jnp.concatenate([w1, w2, w3], axis=1) * (1.0 / hw)).astype(jnp.bfloat16)
    wc_pad = jnp.pad(wc, ((0, 0), (0, OUT_PAD - NUM_CLASSES))).astype(jnp.bfloat16)
    bc_pad = jnp.pad(bc, ((0, 0), (0, OUT_PAD - NUM_CLASSES))).astype(jnp.float32)

    grid = (n_pad // tn, hw_pad // thw)

    x_tile_bytes = tn * c * thw * 4
    vmem_budget = min(48 * 1024 * 1024,
                      max(16 * 1024 * 1024, 4 * x_tile_bytes + 8 * 1024 * 1024))

    out_pad = pl.pallas_call(
        _fused_kernel,
        out_shape=jax.ShapeDtypeStruct((n_pad, OUT_PAD), jnp.float32),
        grid_spec=pltpu.PrefetchScalarGridSpec(
            num_scalar_prefetch=0,
            grid=grid,
            in_specs=[
                pl.BlockSpec((tn, c, thw), lambda i, k: (i, 0, k)),
                pl.BlockSpec((c, D_FEATS), lambda i, k: (0, 0)),
                pl.BlockSpec((D_FEATS, OUT_PAD), lambda i, k: (0, 0)),
                pl.BlockSpec((1, OUT_PAD), lambda i, k: (0, 0)),
            ],
            out_specs=pl.BlockSpec((tn, OUT_PAD), lambda i, k: (i, 0)),
            scratch_shapes=[pltpu.VMEM((tn, c), jnp.float32)],
        ),
        compiler_params=pltpu.CompilerParams(
            dimension_semantics=("parallel", "arbitrary"),
            vmem_limit_bytes=vmem_budget,
        ),
    )(x3, w_all, wc_pad, bc_pad)

    return out_pad[:n, :NUM_CLASSES]


# ---------------------------------------------------------------------------
# Parameter init (deterministic, synthetic weights)
# ---------------------------------------------------------------------------
def init_params(key, in_channels):
    k1, k2, k3, k4, k5 = jax.random.split(key, 5)
    s = 0.02
    w1 = s * jax.random.normal(k1, (in_channels, FEATS1), jnp.float32)
    w2 = s * jax.random.normal(k2, (in_channels, FEATS2), jnp.float32)
    w3 = s * jax.random.normal(k3, (in_channels, FEATS3), jnp.float32)
    wc = s * jax.random.normal(k4, (D_FEATS, NUM_CLASSES), jnp.float32)
    bc = s * jax.random.normal(k5, (1, NUM_CLASSES), jnp.float32)
    return w1, w2, w3, wc, bc


# Pure-JAX reference with the same bf16 weight casting (checks Pallas plumbing)
def _reference(x, params):
    w1, w2, w3, wc, bc = params
    n, c, h, w = x.shape
    pooled = jnp.mean(x.reshape(n, c, h * w), axis=2)
    w_all = jnp.concatenate([w1, w2, w3], axis=1).astype(jnp.bfloat16)
    feats = jnp.dot(pooled.astype(jnp.bfloat16), w_all,
                    preferred_element_type=jnp.float32)
    feats = jnp.maximum(feats, 0.0).astype(jnp.bfloat16)
    return (jnp.dot(feats, wc.astype(jnp.bfloat16),
                    preferred_element_type=jnp.float32) + bc)


if __name__ == "__main__":
    key = jax.random.PRNGKey(0)
    kx, kp = jax.random.split(key)
    N, C, H, W = 2, 4, 16, 16
    x = jax.random.normal(kx, (N, C, H, W), jnp.float32)
    params = init_params(kp, C)

    out = ensemble_three_forward(x, params)
    jax.block_until_ready(out)

    assert out.shape == (N, NUM_CLASSES) and out.dtype == jnp.float32
    ref = _reference(x, params)
    assert bool(jnp.all(jnp.isfinite(out)))
    assert bool(jnp.allclose(out, ref, rtol=5e-2, atol=1e-3))
    print("KERNEL_OK")
</pallas_src>

<mosaic_0001>
module attributes {stable_mosaic.version = 11 : i64} {
  func.func @_fused_kernel(%arg0: i32, %arg1: i32, %arg2: memref<8x4x256xf32, #tpu.memory_space<vmem>>, %arg3: memref<4x6016xbf16, #tpu.memory_space<vmem>>, %arg4: memref<6016x128xbf16, #tpu.memory_space<vmem>>, %arg5: memref<1x128xf32, #tpu.memory_space<vmem>>, %arg6: memref<8x128xf32, #tpu.memory_space<vmem>>, %arg7: memref<8x4xf32, #tpu.memory_space<vmem>>) attributes {dimension_semantics = [#tpu.dimension_semantics<parallel>, #tpu.dimension_semantics<arbitrary>], iteration_bounds = array<i64: 1, 1>, scalar_prefetch = 0 : i64, scratch_operands = 1 : i64, tpu.core_type = #tpu.core_type<tc>, window_params = [{transform_indices = @transform_0, window_bounds = array<i64: 8, 4, 256>}, {pipeline_mode = #tpu.pipeline_mode<synchronous>, transform_indices = @transform_1, window_bounds = array<i64: 4, 6016>}, {pipeline_mode = #tpu.pipeline_mode<synchronous>, transform_indices = @transform_2, window_bounds = array<i64: 6016, 128>}, {pipeline_mode = #tpu.pipeline_mode<synchronous>, transform_indices = @transform_3, window_bounds = array<i64: 1, 128>}, {transform_indices = @transform_4, window_bounds = array<i64: 8, 128>}]} {
    %c0_i32 = arith.constant 0 : i32
    %0 = arith.cmpi eq, %arg1, %c0_i32 : i32
    %1 = arith.extui %0 : i1 to i32
    %c0_i32_0 = arith.constant 0 : i32
    %2 = arith.cmpi ne, %1, %c0_i32_0 : i32
    scf.if %2 {
      %cst_9 = arith.constant 0.000000e+00 : f32
      %11 = vector.broadcast %cst_9 : f32 to vector<8x4xf32>
      %c0_10 = arith.constant 0 : index
      %c0_11 = arith.constant 0 : index
      %12 = vector.load %arg7[%c0_10, %c0_11] : memref<8x4xf32, #tpu.memory_space<vmem>>, vector<8x4xf32>
      tpu.vector_store %arg7[%c0_10, %c0_11], %11 {strides = array<i32>} : memref<8x4xf32, #tpu.memory_space<vmem>>, vector<8x4xf32>,
    } else {
    }
    %c0 = arith.constant 0 : index
    %c0_1 = arith.constant 0 : index
    %3 = vector.load %arg7[%c0, %c0_1] : memref<8x4xf32, #tpu.memory_space<vmem>>, vector<8x4xf32>
    %c0_2 = arith.constant 0 : index
    %c0_3 = arith.constant 0 : index
    %c0_4 = arith.constant 0 : index
    %4 = vector.load %arg2[%c0_2, %c0_3, %c0_4] : memref<8x4x256xf32, #tpu.memory_space<vmem>>, vector<8x4x256xf32>
    %cst = arith.constant dense<0.000000e+00> : vector<8x4xf32>
    %5 = vector.multi_reduction <add>, %4, %cst [2] : vector<8x4x256xf32> to vector<8x4xf32>
    %6 = arith.addf %3, %5 : vector<8x4xf32>
    %c0_5 = arith.constant 0 : index
    %c0_6 = arith.constant 0 : index
    %7 = vector.load %arg7[%c0_5, %c0_6] : memref<8x4xf32, #tpu.memory_space<vmem>>, vector<8x4xf32>
    tpu.vector_store %arg7[%c0_5, %c0_6], %6 {strides = array<i32>} : memref<8x4xf32, #tpu.memory_space<vmem>>, vector<8x4xf32>,
    %c0_i32_7 = arith.constant 0 : i32
    %8 = arith.cmpi eq, %arg1, %c0_i32_7 : i32
    %9 = arith.extui %8 : i1 to i32
    %c0_i32_8 = arith.constant 0 : i32
    %10 = arith.cmpi ne, %9, %c0_i32_8 : i32
    scf.if %10 {
      %c0_9 = arith.constant 0 : index
      %c0_10 = arith.constant 0 : index
      %11 = vector.load %arg7[%c0_9, %c0_10] : memref<8x4xf32, #tpu.memory_space<vmem>>, vector<8x4xf32>
      %12 = arith.truncf %11 : vector<8x4xf32> to vector<8x4xbf16>
      %c0_11 = arith.constant 0 : index
      %c0_12 = arith.constant 0 : index
      %13 = vector.load %arg3[%c0_11, %c0_12] : memref<4x6016xbf16, #tpu.memory_space<vmem>>, vector<4x6016xbf16>
      %cst_13 = arith.constant dense<0.000000e+00> : vector<8x6016xf32>
      %14 = tpu.matmul %12, %13, %cst_13 {dimension_numbers = #tpu.dot_dimension_numbers<[1], [0], [0], [1], [0, 0, 1, 1], [], []>} : vector<8x4xbf16>, vector<4x6016xbf16>, vector<8x6016xf32> -> vector<8x6016xf32>
      %cst_14 = arith.constant 0.000000e+00 : f32
      %15 = vector.broadcast %cst_14 : f32 to vector<8x6016xf32>
      %16 = arith.maximumf %14, %15 : vector<8x6016xf32>
      %17 = arith.truncf %16 : vector<8x6016xf32> to vector<8x6016xbf16>
      %c0_15 = arith.constant 0 : index
      %c0_16 = arith.constant 0 : index
      %18 = vector.load %arg4[%c0_15, %c0_16] : memref<6016x128xbf16, #tpu.memory_space<vmem>>, vector<6016x128xbf16>
      %cst_17 = arith.constant dense<0.000000e+00> : vector<8x128xf32>
      %19 = tpu.matmul %17, %18, %cst_17 {dimension_numbers = #tpu.dot_dimension_numbers<[1], [0], [0], [1], [0, 0, 1, 1], [], []>} : vector<8x6016xbf16>, vector<6016x128xbf16>, vector<8x128xf32> -> vector<8x128xf32>
      %c0_18 = arith.constant 0 : index
      %c0_19 = arith.constant 0 : index
      %20 = vector.load %arg5[%c0_18, %c0_19] : memref<1x128xf32, #tpu.memory_space<vmem>>, vector<1x128xf32>
      %21 = vector.broadcast %20 : vector<1x128xf32> to vector<8x128xf32>
      %22 = arith.addf %19, %21 : vector<8x128xf32>
      %c0_20 = arith.constant 0 : index
      %c0_21 = arith.constant 0 : index
      %23 = vector.load %arg6[%c0_20, %c0_21] : memref<8x128xf32, #tpu.memory_space<vmem>>, vector<8x128xf32>
      tpu.vector_store %arg6[%c0_20, %c0_21], %22 {strides = array<i32>} : memref<8x128xf32, #tpu.memory_space<vmem>>, vector<8x128xf32>,
    } else {
    }
    return
  }
  func.func @transform_0(%arg0: i32, %arg1: i32) -> (i32, i32, i32) {
    %c0_i32 = arith.constant 0 : i32
    %c0_i32_0 = arith.constant 0 : i32
    return %arg0, %c0_i32, %arg1 : i32, i32, i32
  }
  func.func @transform_1(%arg0: i32, %arg1: i32) -> (i32, i32) {
    %c0_i32 = arith.constant 0 : i32
    %c0_i32_0 = arith.constant 0 : i32
    %c0_i32_1 = arith.constant 0 : i32
    return %c0_i32, %c0_i32_0 : i32, i32
  }
  func.func @transform_2(%arg0: i32, %arg1: i32) -> (i32, i32) {
    %c0_i32 = arith.constant 0 : i32
    %c0_i32_0 = arith.constant 0 : i32
    %c0_i32_1 = arith.constant 0 : i32
    return %c0_i32, %c0_i32_0 : i32, i32
  }
  func.func @transform_3(%arg0: i32, %arg1: i32) -> (i32, i32) {
    %c0_i32 = arith.constant 0 : i32
    %c0_i32_0 = arith.constant 0 : i32
    %c0_i32_1 = arith.constant 0 : i32
    return %c0_i32, %c0_i32_0 : i32, i32
  }
  func.func @transform_4(%arg0: i32, %arg1: i32) -> (i32, i32) {
    %c0_i32 = arith.constant 0 : i32
    %c0_i32_0 = arith.constant 0 : i32
    return %arg0, %c0_i32 : i32, i32
  }
}

</mosaic_0001>

<llo_original>
// kernel: ensemble_three_forward.1
$region0: #{ensemble_three_forward.1}
  #allocation0 [shape = 'u32[]', space=smem, size = 0x4, offset = 0x4, fixed_abs, tag = 'smem constant byte address 0x4 - core index']
  #allocation1 [shape = 'u32[144,128]{1,0:T(1,128)}', space=vmem, size = 0x12000, scoped, tag = 'internal scratch']
  #allocation2 [shape = 'f32[8,4]{1,0:T(8,128)}', space=vmem, size = 0x1000, scoped, tag = 'scratch operand']
  %s0 = inlined_call_operand.vmem [shape: f32[8,4,256], index: 0, kind: input, shape index: {}]
  %s1 = inlined_call_operand.vmem [shape: bf16[4,6016], index: 1, kind: input, shape index: {}]
  %s2 = inlined_call_operand.vmem [shape: bf16[6016,128], index: 2, kind: input, shape index: {}]
  %s3 = inlined_call_operand.vmem [shape: f32[1,128], index: 3, kind: input, shape index: {}]
  %s4 = inlined_call_operand.vmem [shape: f32[8,128], index: 4, kind: output, shape index: {}]
  %s5 = sld [smem:[#allocation0]]
  $region34: #{ensemble_three_forward.1} parent=0
    _
  %s7 = ssub.s32 1, %s5
  %s8 = scalar_select 0, %s7, %s5
  // Predicated region
  $region2: #{ensemble_three_forward.1} parent=0 // pred_check
    _
  $region3: #{ensemble_three_forward.1} parent=0 // pred_check_branch
    %10 = sbr.rel (0) target = $region5
  $region4: #{ensemble_three_forward.1} parent=0 // pred_region
    _
  $region5: #{ensemble_three_forward.1} parent=0 // pred_fallthru
    _
  // Predicated region
  $region6: #{ensemble_three_forward.1} parent=0 // pred_check
    _
  $region7: #{ensemble_three_forward.1} parent=0 // pred_check_branch
    %12 = sbr.rel (0) target = $region9
  $region8: #{ensemble_three_forward.1} parent=0 // pred_region
    _
  $region9: #{ensemble_three_forward.1} parent=0 // pred_fallthru
    _
  // Predicated region
  $region10: #{ensemble_three_forward.1} parent=0 // pred_check
    _
  $region11: #{ensemble_three_forward.1} parent=0 // pred_check_branch
    %14 = sbr.rel (0) target = $region13
  $region12: #{ensemble_three_forward.1} parent=0 // pred_region
    _
  $region13: #{ensemble_three_forward.1} parent=0 // pred_fallthru
    _
  // Predicated region
  $region14: #{ensemble_three_forward.1} parent=0 // pred_check
    _
  $region15: #{ensemble_three_forward.1} parent=0 // pred_check_branch
    %16 = sbr.rel (0) target = $region17
  $region16: #{ensemble_three_forward.1} parent=0 // pred_region
    _
  $region17: #{ensemble_three_forward.1} parent=0 // pred_fallthru
    _
  %p18 = scmp.eq.s32.totalorder 0, 0
  // Predicated region
  $region18: #{ensemble_three_forward.1} parent=0 // pred_check
    %p19 = pneg %p18
  $region19: #{ensemble_three_forward.1} parent=0 // pred_check_branch
    %21 = sbr.rel (%p19) target = $region21
  $region20: #{ensemble_three_forward.1} parent=0 // pred_region
    %vm22 = vcmask 31744
    %23 = vst.msk [vmem:[#allocation2] sm:$0xff] %vm22, 0.0
  $region21: #{ensemble_three_forward.1} parent=0 // pred_fallthru
    _
  %v24 = vld [vmem:[#allocation2] sm:$0xff]
  %v25 = vld [vmem:[%s0] sm:$0xff]
  %v26 = vld [vmem:[%s0 + $0x8] sm:$0xff]
  %v27 = vld [vmem:[%s0 + $0x10] sm:$0xff]
  %v28 = vld [vmem:[%s0 + $0x18] sm:$0xff]
  %v29 = vld [vmem:[%s0 + $0x20] sm:$0xff]
  %v30 = vld [vmem:[%s0 + $0x28] sm:$0xff]
  %v31 = vld [vmem:[%s0 + $0x30] sm:$0xff]
  %v32 = vld [vmem:[%s0 + $0x38] sm:$0xff]
  %v41 = vcombine.high %v25, %v25
  %v42 = vcombine.high %v26, %v26
  %v43 = vcombine.high %v27, %v27
  %v44 = vcombine.high %v28, %v28
  %v45 = vcombine.high %v29, %v29
  %v46 = vcombine.high %v30, %v30
  %v47 = vcombine.high %v31, %v31
  %v48 = vcombine.high %v32, %v32
  %vm57 = vcmask 1043456
  %v58 = vsel %vm57, %v25, 0.0
  %v59 = vsel %vm57, %v41, 0.0
  %v60 = vadd.f32 %v58, %v59
  %61 = vadd.xlane.f32.xlu0 %v60
  %v62 = vpop.xlane.xlu0 %61
  %v63 = vsel %vm57, %v26, 0.0
  %v64 = vsel %vm57, %v42, 0.0
  %v65 = vadd.f32 %v63, %v64
  %66 = vadd.xlane.f32.xlu0 %v65
  %v67 = vpop.xlane.xlu0 %66
  %v68 = vsel %vm57, %v27, 0.0
  %v69 = vsel %vm57, %v43, 0.0
  %v70 = vadd.f32 %v68, %v69
  %71 = vadd.xlane.f32.xlu0 %v70
  %v72 = vpop.xlane.xlu0 %71
  %v73 = vsel %vm57, %v28, 0.0
  %v74 = vsel %vm57, %v44, 0.0
  %v75 = vadd.f32 %v73, %v74
  %76 = vadd.xlane.f32.xlu0 %v75
  %v77 = vpop.xlane.xlu0 %76
  %v78 = vsel %vm57, %v29, 0.0
  %v79 = vsel %vm57, %v45, 0.0
  %v80 = vadd.f32 %v78, %v79
  %81 = vadd.xlane.f32.xlu0 %v80
  %v82 = vpop.xlane.xlu0 %81
  %v83 = vsel %vm57, %v30, 0.0
  %v84 = vsel %vm57, %v46, 0.0
  %v85 = vadd.f32 %v83, %v84
  %86 = vadd.xlane.f32.xlu0 %v85
  %v87 = vpop.xlane.xlu0 %86
  %v88 = vsel %vm57, %v31, 0.0
  %v89 = vsel %vm57, %v47, 0.0
  %v90 = vadd.f32 %v88, %v89
  %91 = vadd.xlane.f32.xlu0 %v90
  %v92 = vpop.xlane.xlu0 %91
  %v93 = vsel %vm57, %v32, 0.0
  %v94 = vsel %vm57, %v48, 0.0
  %v95 = vadd.f32 %v93, %v94
  %96 = vadd.xlane.f32.xlu0 %v95
  %v97 = vpop.xlane.xlu0 %96
  %v106 = vlaneseq
  %v107 = vand.u32 %v106, 127
  %v108 = vlaneseq
  %v109 = vshrl.u32 %v108, 7
  %v110 = vsub.s32 %v107, %v109
  %v111 = vrot.slane %v62, %v110
  %v112 = vlaneseq
  %v113 = vshrl.u32 %v112, 7
  %v114 = vsub.s32 %v107, %v113
  %v115 = vrot.slane %v67, %v114
  %v116 = vlaneseq
  %v117 = vshrl.u32 %v116, 7
  %v118 = vsub.s32 %v107, %v117
  %v119 = vrot.slane %v72, %v118
  %v120 = vlaneseq
  %v121 = vshrl.u32 %v120, 7
  %v122 = vsub.s32 %v107, %v121
  %v123 = vrot.slane %v77, %v122
  %v124 = vlaneseq
  %v125 = vshrl.u32 %v124, 7
  %v126 = vsub.s32 %v107, %v125
  %v127 = vrot.slane %v82, %v126
  %v128 = vlaneseq
  %v129 = vshrl.u32 %v128, 7
  %v130 = vsub.s32 %v107, %v129
  %v131 = vrot.slane %v87, %v130
  %v132 = vlaneseq
  %v133 = vshrl.u32 %v132, 7
  %v134 = vsub.s32 %v107, %v133
  %v135 = vrot.slane %v92, %v134
  %v136 = vlaneseq
  %v137 = vshrl.u32 %v136, 7
  %v138 = vsub.s32 %v107, %v137
  %v139 = vrot.slane %v97, %v138
  %vm140 = vcmask 1041409
  %v141 = vsel %vm140, %v115, %v111
  %vm142 = vcmask 1042434
  %v143 = vsel %vm142, %v119, %v141
  %vm144 = vcmask 1043459
  %v145 = vsel %vm144, %v123, %v143
  %vm146 = vcmask 1044484
  %v147 = vsel %vm146, %v127, %v145
  %vm148 = vcmask 1045509
  %v149 = vsel %vm148, %v131, %v147
  %vm150 = vcmask 1046534
  %v151 = vsel %vm150, %v135, %v149
  %vm152 = vcmask 1047559
  %v153 = vsel %vm152, %v139, %v151
  %v155 = vadd.f32 %v24, %v153
  %vm156 = vcmask 31744
  %157 = vst.msk [vmem:[#allocation2] sm:$0xff] %vm156, %v155
  // Predicated region
  $region22: #{ensemble_three_forward.1} parent=0 // pred_check
    %p158 = pneg %p18
  $region23: #{ensemble_three_forward.1} parent=0 // pred_check_branch
    %160 = sbr.rel (%p158) target = $region25
  $region24: #{ensemble_three_forward.1} parent=0 // pred_region
    %v161 = vld [vmem:[#allocation2] sm:$0xff]
    %v162 = vpack.c.bf16 %v161, %v161
    %v163 = vld [vmem:[%s1] sm:$0xff]
    %v164 = vld [vmem:[%s1 + $0x8] sm:$0xff]
    %v165 = vld [vmem:[%s1 + $0x10] sm:$0xff]
    %v166 = vld [vmem:[%s1 + $0x18] sm:$0xff]
    %v167 = vld [vmem:[%s1 + $0x20] sm:$0xff]
    %v168 = vld [vmem:[%s1 + $0x28] sm:$0xff]
    %v169 = vld [vmem:[%s1 + $0x30] sm:$0xff]
    %v170 = vld [vmem:[%s1 + $0x38] sm:$0xff]
    %v171 = vld [vmem:[%s1 + $0x40] sm:$0xff]
    %v172 = vld [vmem:[%s1 + $0x48] sm:$0xff]
    %v173 = vld [vmem:[%s1 + $0x50] sm:$0xff]
    %v174 = vld [vmem:[%s1 + $0x58] sm:$0x3f]
    %v187 = vcombine.high %v163, %v163
    %v189 = vunpack.c.l.s4 1983009808
    %v190 = vunpack.c.0.s8 %v189
    %v191 = vlaneseq
    %v192 = vshrl.u32 %v191, 7
    %v193 = vsub.s32 %v190, %v192
    %v194 = vrot.slane %v163, %v193
    %v196 = vunpack.c.l.s4 1983009808
    %v197 = vunpack.c.0.s8 %v196
    %v198 = vlaneseq
    %v199 = vshrl.u32 %v198, 7
    %v200 = vsub.s32 %v197, %v199
    %v201 = vrot.slane %v187, %v200
    %v202 = vcombine.high %v194, %v194
    %v203 = vcombine.high %v201, %v201
    %v204 = vcombine.high %v164, %v164
    %v206 = vunpack.c.l.s4 1983009808
    %v207 = vunpack.c.0.s8 %v206
    %v208 = vlaneseq
    %v209 = vshrl.u32 %v208, 7
    %v210 = vsub.s32 %v207, %v209
    %v211 = vrot.slane %v164, %v210
    %v213 = vunpack.c.l.s4 1983009808
    %v214 = vunpack.c.0.s8 %v213
    %v215 = vlaneseq
    %v216 = vshrl.u32 %v215, 7
    %v217 = vsub.s32 %v214, %v216
    %v218 = vrot.slane %v204, %v217
    %v219 = vcombine.high %v211, %v211
    %v220 = vcombine.high %v218, %v218
    %v221 = vcombine.high %v165, %v165
    %v223 = vunpack.c.l.s4 1983009808
    %v224 = vunpack.c.0.s8 %v223
    %v225 = vlaneseq
    %v226 = vshrl.u32 %v225, 7
    %v227 = vsub.s32 %v224, %v226
    %v228 = vrot.slane %v165, %v227
    %v230 = vunpack.c.l.s4 1983009808
    %v231 = vunpack.c.0.s8 %v230
    %v232 = vlaneseq
    %v233 = vshrl.u32 %v232, 7
    %v234 = vsub.s32 %v231, %v233
    %v235 = vrot.slane %v221, %v234
    %v236 = vcombine.high %v228, %v228
    %v237 = vcombine.high %v235, %v235
    %v238 = vcombine.high %v166, %v166
    %v240 = vunpack.c.l.s4 1983009808
    %v241 = vunpack.c.0.s8 %v240
    %v242 = vlaneseq
    %v243 = vshrl.u32 %v242, 7
    %v244 = vsub.s32 %v241, %v243
    %v245 = vrot.slane %v166, %v244
    %v247 = vunpack.c.l.s4 1983009808
    %v248 = vunpack.c.0.s8 %v247
    %v249 = vlaneseq
    %v250 = vshrl.u32 %v249, 7
    %v251 = vsub.s32 %v248, %v250
    %v252 = vrot.slane %v238, %v251
    %v253 = vcombine.high %v245, %v245
    %v254 = vcombine.high %v252, %v252
    %v255 = vcombine.high %v167, %v167
    %v257 = vunpack.c.l.s4 1983009808
    %v258 = vunpack.c.0.s8 %v257
    %v259 = vlaneseq
    %v260 = vshrl.u32 %v259, 7
    %v261 = vsub.s32 %v258, %v260
    %v262 = vrot.slane %v167, %v261
    %v264 = vunpack.c.l.s4 1983009808
    %v265 = vunpack.c.0.s8 %v264
    %v266 = vlaneseq
    %v267 = vshrl.u32 %v266, 7
    %v268 = vsub.s32 %v265, %v267
    %v269 = vrot.slane %v255, %v268
    %v270 = vcombine.high %v262, %v262
    %v271 = vcombine.high %v269, %v269
    %v272 = vcombine.high %v168, %v168
    %v274 = vunpack.c.l.s4 1983009808
    %v275 = vunpack.c.0.s8 %v274
    %v276 = vlaneseq
    %v277 = vshrl.u32 %v276, 7
    %v278 = vsub.s32 %v275, %v277
    %v279 = vrot.slane %v168, %v278
    %v281 = vunpack.c.l.s4 1983009808
    %v282 = vunpack.c.0.s8 %v281
    %v283 = vlaneseq
    %v284 = vshrl.u32 %v283, 7
    %v285 = vsub.s32 %v282, %v284
    %v286 = vrot.slane %v272, %v285
    %v287 = vcombine.high %v279, %v279
    %v288 = vcombine.high %v286, %v286
    %v289 = vcombine.high %v169, %v169
    %v291 = vunpack.c.l.s4 1983009808
    %v292 = vunpack.c.0.s8 %v291
    %v293 = vlaneseq
    %v294 = vshrl.u32 %v293, 7
    %v295 = vsub.s32 %v292, %v294
    %v296 = vrot.slane %v169, %v295
    %v298 = vunpack.c.l.s4 1983009808
    %v299 = vunpack.c.0.s8 %v298
    %v300 = vlaneseq
    %v301 = vshrl.u32 %v300, 7
    %v302 = vsub.s32 %v299, %v301
    %v303 = vrot.slane %v289, %v302
    %v304 = vcombine.high %v296, %v296
    %v305 = vcombine.high %v303, %v303
    %v306 = vcombine.high %v170, %v170
    %v308 = vunpack.c.l.s4 1983009808
    %v309 = vunpack.c.0.s8 %v308
    %v310 = vlaneseq
    %v311 = vshrl.u32 %v310, 7
    %v312 = vsub.s32 %v309, %v311
    %v313 = vrot.slane %v170, %v312
    %v315 = vunpack.c.l.s4 1983009808
    %v316 = vunpack.c.0.s8 %v315
    %v317 = vlaneseq
    %v318 = vshrl.u32 %v317, 7
    %v319 = vsub.s32 %v316, %v318
    %v320 = vrot.slane %v306, %v319
    %v321 = vcombine.high %v313, %v313
    %v322 = vcombine.high %v320, %v320
    %v323 = vcombine.high %v171, %v171
    %v325 = vunpack.c.l.s4 1983009808
    %v326 = vunpack.c.0.s8 %v325
    %v327 = vlaneseq
    %v328 = vshrl.u32 %v327, 7
    %v329 = vsub.s32 %v326, %v328
    %v330 = vrot.slane %v171, %v329
    %v332 = vunpack.c.l.s4 1983009808
    %v333 = vunpack.c.0.s8 %v332
    %v334 = vlaneseq
    %v335 = vshrl.u32 %v334, 7
    %v336 = vsub.s32 %v333, %v335
    %v337 = vrot.slane %v323, %v336
    %v338 = vcombine.high %v330, %v330
    %v339 = vcombine.high %v337, %v337
    %v340 = vcombine.high %v172, %v172
    %v342 = vunpack.c.l.s4 1983009808
    %v343 = vunpack.c.0.s8 %v342
    %v344 = vlaneseq
    %v345 = vshrl.u32 %v344, 7
    %v346 = vsub.s32 %v343, %v345
    %v347 = vrot.slane %v172, %v346
    %v349 = vunpack.c.l.s4 1983009808
    %v350 = vunpack.c.0.s8 %v349
    %v351 = vlaneseq
    %v352 = vshrl.u32 %v351, 7
    %v353 = vsub.s32 %v350, %v352
    %v354 = vrot.slane %v340, %v353
    %v355 = vcombine.high %v347, %v347
    %v356 = vcombine.high %v354, %v354
    %v357 = vcombine.high %v173, %v173
    %v359 = vunpack.c.l.s4 1983009808
    %v360 = vunpack.c.0.s8 %v359
    %v361 = vlaneseq
    %v362 = vshrl.u32 %v361, 7
    %v363 = vsub.s32 %v360, %v362
    %v364 = vrot.slane %v173, %v363
    %v366 = vunpack.c.l.s4 1983009808
    %v367 = vunpack.c.0.s8 %v366
    %v368 = vlaneseq
    %v369 = vshrl.u32 %v368, 7
    %v370 = vsub.s32 %v367, %v369
    %v371 = vrot.slane %v357, %v370
    %v372 = vcombine.high %v364, %v364
    %v373 = vcombine.high %v371, %v371
    %v374 = vcombine.high %v174, %v174
    %v376 = vunpack.c.l.s4 1983009808
    %v377 = vunpack.c.0.s8 %v376
    %v378 = vlaneseq
    %v379 = vshrl.u32 %v378, 7
    %v380 = vsub.s32 %v377, %v379
    %v381 = vrot.slane %v174, %v380
    %v383 = vunpack.c.l.s4 1983009808
    %v384 = vunpack.c.0.s8 %v383
    %v385 = vlaneseq
    %v386 = vshrl.u32 %v385, 7
    %v387 = vsub.s32 %v384, %v386
    %v388 = vrot.slane %v374, %v387
    %v389 = vcombine.high %v381, %v381
    %v391 = vsel %vm156, %v162, 0
    %vm393 = vcmask 1041408
    %v395 = vsel %vm393, %v194, 0
    %v398 = vsel %vm393, %v202, 0
    %v401 = vsel %vm393, %v201, 0
    %v404 = vsel %vm393, %v203, 0
    %v407 = vsel %vm393, %v211, 0
    %v410 = vsel %vm393, %v219, 0
    %v413 = vsel %vm393, %v218, 0
    %v416 = vsel %vm393, %v220, 0
    %v419 = vsel %vm393, %v228, 0
    %v422 = vsel %vm393, %v236, 0
    %v425 = vsel %vm393, %v235, 0
    %v428 = vsel %vm393, %v237, 0
    %v431 = vsel %vm393, %v245, 0
    %v434 = vsel %vm393, %v253, 0
    %v437 = vsel %vm393, %v252, 0
    %v440 = vsel %vm393, %v254, 0
    %v443 = vsel %vm393, %v262, 0
    %v446 = vsel %vm393, %v270, 0
    %v449 = vsel %vm393, %v269, 0
    %v452 = vsel %vm393, %v271, 0
    %v455 = vsel %vm393, %v279, 0
    %v458 = vsel %vm393, %v287, 0
    %v461 = vsel %vm393, %v286, 0
    %v464 = vsel %vm393, %v288, 0
    %v467 = vsel %vm393, %v296, 0
    %v470 = vsel %vm393, %v304, 0
    %v473 = vsel %vm393, %v303, 0
    %v476 = vsel %vm393, %v305, 0
    %v479 = vsel %vm393, %v313, 0
    %v482 = vsel %vm393, %v321, 0
    %v485 = vsel %vm393, %v320, 0
    %v488 = vsel %vm393, %v322, 0
    %v491 = vsel %vm393, %v330, 0
    %v494 = vsel %vm393, %v338, 0
    %v497 = vsel %vm393, %v337, 0
    %v500 = vsel %vm393, %v339, 0
    %v503 = vsel %vm393, %v347, 0
    %v506 = vsel %vm393, %v355, 0
    %v509 = vsel %vm393, %v354, 0
    %v512 = vsel %vm393, %v356, 0
    %v515 = vsel %vm393, %v364, 0
    %v518 = vsel %vm393, %v372, 0
    %v521 = vsel %vm393, %v371, 0
    %v524 = vsel %vm393, %v373, 0
    %v527 = vsel %vm393, %v381, 0
    %v530 = vsel %vm393, %v389, 0
    %v533 = vsel %vm393, %v388, 0
    %535 = vmatprep.subr.bf16.mxu0 %v398
    %536 = vmatpush1.bf16.msra.mxu0 %v395
    %537 = vmatprep.subr.bf16.mxu0 0
    %538 = vmatpush1.bf16.msra.mxu0 0
    %539 = vmatprep.subr.bf16.mxu0 0
    %540 = vmatpush1.bf16.msra.mxu0 0
    %541 = vmatprep.subr.bf16.mxu0 0
    %542 = vmatpush1.bf16.msra.mxu0 0
    %543 = vmatprep.subr.bf16.mxu0 0
    %544 = vmatpush1.bf16.msra.mxu0 0
    %545 = vmatprep.subr.bf16.mxu0 0
    %546 = vmatpush1.bf16.msra.mxu0 0
    %547 = vmatprep.subr.bf16.mxu0 0
    %548 = vmatpush1.bf16.msra.mxu0 0
    %549 = vmatprep.subr.bf16.mxu0 0
    %550 = vmatpush1.bf16.msra.mxu0 0
    %551 = vmatprep.subr.bf16.mxu0 0
    %552 = vmatpush1.bf16.msra.mxu0 0
    %553 = vmatprep.subr.bf16.mxu0 0
    %554 = vmatpush1.bf16.msra.mxu0 0
    %555 = vmatprep.subr.bf16.mxu0 0
    %556 = vmatpush1.bf16.msra.mxu0 0
    %557 = vmatprep.subr.bf16.mxu0 0
    %558 = vmatpush1.bf16.msra.mxu0 0
    %559 = vmatprep.subr.bf16.mxu0 0
    %560 = vmatpush1.bf16.msra.mxu0 0
    %561 = vmatprep.subr.bf16.mxu0 0
    %562 = vmatpush1.bf16.msra.mxu0 0
    %563 = vmatprep.subr.bf16.mxu0 0
    %564 = vmatpush1.bf16.msra.mxu0 0
    %565 = vmatprep.subr.bf16.mxu0 0
    %566 = vmatpush1.bf16.msra.mxu0 0
    %567 = vmatprep.mubr.bf16.mxu0 0
    %568 = vmatmul.mubr.bf16.gmra.mrb[0].mxu0 %v391
    %v569 = vpop.f32.mrb[0].mxu0
    %v570 = vadd.f32 0.0, %v569
    %v571 = vpop.f32.mrb[0].mxu0
    %v572 = vadd.f32 0.0, %v571
    %v573 = vpop.f32.mrb[0].mxu0
    %v574 = vpop.f32.mrb[0].mxu0
    %575 = vdwg.mxu0
    %576 = vmatprep.subr.bf16.mxu0 %v404
    %577 = vmatpush1.bf16.msra.mxu0 %v401
    %578 = vmatprep.subr.bf16.mxu0 0
    %579 = vmatpush1.bf16.msra.mxu0 0
    %580 = vmatprep.subr.bf16.mxu0 0
    %581 = vmatpush1.bf16.msra.mxu0 0
    %582 = vmatprep.subr.bf16.mxu0 0
    %583 = vmatpush1.bf16.msra.mxu0 0
    %584 = vmatprep.subr.bf16.mxu0 0
    %585 = vmatpush1.bf16.msra.mxu0 0
    %586 = vmatprep.subr.bf16.mxu0 0
    %587 = vmatpush1.bf16.msra.mxu0 0
    %588 = vmatprep.subr.bf16.mxu0 0
    %589 = vmatpush1.bf16.msra.mxu0 0
    %590 = vmatprep.subr.bf16.mxu0 0
    %591 = vmatpush1.bf16.msra.mxu0 0
    %592 = vmatprep.subr.bf16.mxu0 0
    %593 = vmatpush1.bf16.msra.mxu0 0
    %594 = vmatprep.subr.bf16.mxu0 0
    %595 = vmatpush1.bf16.msra.mxu0 0
    %596 = vmatprep.subr.bf16.mxu0 0
    %597 = vmatpush1.bf16.msra.mxu0 0
    %598 = vmatprep.subr.bf16.mxu0 0
    %599 = vmatpush1.bf16.msra.mxu0 0
    %600 = vmatprep.subr.bf16.mxu0 0
    %601 = vmatpush1.bf16.msra.mxu0 0
    %602 = vmatprep.subr.bf16.mxu0 0
    %603 = vmatpush1.bf16.msra.mxu0 0
    %604 = vmatprep.subr.bf16.mxu0 0
    %605 = vmatpush1.bf16.msra.mxu0 0
    %606 = vmatprep.subr.bf16.mxu0 0
    %607 = vmatpush1.bf16.msra.mxu0 0
    %608 = vmatprep.mubr.bf16.mxu0 0
    %609 = vmatmul.mubr.bf16.gmra.mrb[0].mxu0 %v391
    %v610 = vpop.f32.mrb[0].mxu0
    %v611 = vadd.f32 0.0, %v610
    %v612 = vpop.f32.mrb[0].mxu0
    %v613 = vadd.f32 0.0, %v612
    %v614 = vpop.f32.mrb[0].mxu0
    %v615 = vpop.f32.mrb[0].mxu0
    %616 = vdwg.mxu0
    %617 = vmatprep.subr.bf16.mxu0 %v410
    %618 = vmatpush1.bf16.msra.mxu0 %v407
    %619 = vmatprep.subr.bf16.mxu0 0
    %620 = vmatpush1.bf16.msra.mxu0 0
    %621 = vmatprep.subr.bf16.mxu0 0
    %622 = vmatpush1.bf16.msra.mxu0 0
    %623 = vmatprep.subr.bf16.mxu0 0
    %624 = vmatpush1.bf16.msra.mxu0 0
    %625 = vmatprep.subr.bf16.mxu0 0
    %626 = vmatpush1.bf16.msra.mxu0 0
    %627 = vmatprep.subr.bf16.mxu0 0
    %628 = vmatpush1.bf16.msra.mxu0 0
    %629 = vmatprep.subr.bf16.mxu0 0
    %630 = vmatpush1.bf16.msra.mxu0 0
    %631 = vmatprep.subr.bf16.mxu0 0
    %632 = vmatpush1.bf16.msra.mxu0 0
    %633 = vmatprep.subr.bf16.mxu0 0
    %634 = vmatpush1.bf16.msra.mxu0 0
    %635 = vmatprep.subr.bf16.mxu0 0
    %636 = vmatpush1.bf16.msra.mxu0 0
    %637 = vmatprep.subr.bf16.mxu0 0
    %638 = vmatpush1.bf16.msra.mxu0 0
    %639 = vmatprep.subr.bf16.mxu0 0
    %640 = vmatpush1.bf16.msra.mxu0 0
    %641 = vmatprep.subr.bf16.mxu0 0
    %642 = vmatpush1.bf16.msra.mxu0 0
    %643 = vmatprep.subr.bf16.mxu0 0
    %644 = vmatpush1.bf16.msra.mxu0 0
    %645 = vmatprep.subr.bf16.mxu0 0
    %646 = vmatpush1.bf16.msra.mxu0 0
    %647 = vmatprep.subr.bf16.mxu0 0
    %648 = vmatpush1.bf16.msra.mxu0 0
    %649 = vmatprep.mubr.bf16.mxu0 0
    %650 = vmatmul.mubr.bf16.gmra.mrb[0].mxu0 %v391
    %v651 = vpop.f32.mrb[0].mxu0
    %v652 = vadd.f32 0.0, %v651
    %v653 = vpop.f32.mrb[0].mxu0
    %v654 = vadd.f32 0.0, %v653
    %v655 = vpop.f32.mrb[0].mxu0
    %v656 = vpop.f32.mrb[0].mxu0
    %657 = vdwg.mxu0
    %658 = vmatprep.subr.bf16.mxu0 %v416
    %659 = vmatpush1.bf16.msra.mxu0 %v413
    %660 = vmatprep.subr.bf16.mxu0 0
    %661 = vmatpush1.bf16.msra.mxu0 0
    %662 = vmatprep.subr.bf16.mxu0 0
    %663 = vmatpush1.bf16.msra.mxu0 0
    %664 = vmatprep.subr.bf16.mxu0 0
    %665 = vmatpush1.bf16.msra.mxu0 0
    %666 = vmatprep.subr.bf16.mxu0 0
    %667 = vmatpush1.bf16.msra.mxu0 0
    %668 = vmatprep.subr.bf16.mxu0 0
    %669 = vmatpush1.bf16.msra.mxu0 0
    %670 = vmatprep.subr.bf16.mxu0 0
    %671 = vmatpush1.bf16.msra.mxu0 0
    %672 = vmatprep.subr.bf16.mxu0 0
    %673 = vmatpush1.bf16.msra.mxu0 0
    %674 = vmatprep.subr.bf16.mxu0 0
    %675 = vmatpush1.bf16.msra.mxu0 0
    %676 = vmatprep.subr.bf16.mxu0 0
    %677 = vmatpush1.bf16.msra.mxu0 0
    %678 = vmatprep.subr.bf16.mxu0 0
    %679 = vmatpush1.bf16.msra.mxu0 0
    %680 = vmatprep.subr.bf16.mxu0 0
    %681 = vmatpush1.bf16.msra.mxu0 0
    %682 = vmatprep.subr.bf16.mxu0 0
    %683 = vmatpush1.bf16.msra.mxu0 0
    %684 = vmatprep.subr.bf16.mxu0 0
    %685 = vmatpush1.bf16.msra.mxu0 0
    %686 = vmatprep.subr.bf16.mxu0 0
    %687 = vmatpush1.bf16.msra.mxu0 0
    %688 = vmatprep.subr.bf16.mxu0 0
    %689 = vmatpush1.bf16.msra.mxu0 0
    %690 = vmatprep.mubr.bf16.mxu0 0
    %691 = vmatmul.mubr.bf16.gmra.mrb[0].mxu0 %v391
    %v692 = vpop.f32.mrb[0].mxu0
    %v693 = vadd.f32 0.0, %v692
    %v694 = vpop.f32.mrb[0].mxu0
    %v695 = vadd.f32 0.0, %v694
    %v696 = vpop.f32.mrb[0].mxu0
    %v697 = vpop.f32.mrb[0].mxu0
    %698 = vdwg.mxu0
    %699 = vmatprep.subr.bf16.mxu0 %v422
    %700 = vmatpush1.bf16.msra.mxu0 %v419
    %701 = vmatprep.subr.bf16.mxu0 0
    %702 = vmatpush1.bf16.msra.mxu0 0
    %703 = vmatprep.subr.bf16.mxu0 0
    %704 = vmatpush1.bf16.msra.mxu0 0
    %705 = vmatprep.subr.bf16.mxu0 0
    %706 = vmatpush1.bf16.msra.mxu0 0
    %707 = vmatprep.subr.bf16.mxu0 0
    %708 = vmatpush1.bf16.msra.mxu0 0
    %709 = vmatprep.subr.bf16.mxu0 0
    %710 = vmatpush1.bf16.msra.mxu0 0
    %711 = vmatprep.subr.bf16.mxu0 0
    %712 = vmatpush1.bf16.msra.mxu0 0
    %713 = vmatprep.subr.bf16.mxu0 0
    %714 = vmatpush1.bf16.msra.mxu0 0
    %715 = vmatprep.subr.bf16.mxu0 0
    %716 = vmatpush1.bf16.msra.mxu0 0
    %717 = vmatprep.subr.bf16.mxu0 0
    %718 = vmatpush1.bf16.msra.mxu0 0
    %719 = vmatprep.subr.bf16.mxu0 0
    %720 = vmatpush1.bf16.msra.mxu0 0
    %721 = vmatprep.subr.bf16.mxu0 0
    %722 = vmatpush1.bf16.msra.mxu0 0
    %723 = vmatprep.subr.bf16.mxu0 0
    %724 = vmatpush1.bf16.msra.mxu0 0
    %725 = vmatprep.subr.bf16.mxu0 0
    %726 = vmatpush1.bf16.msra.mxu0 0
    %727 = vmatprep.subr.bf16.mxu0 0
    %728 = vmatpush1.bf16.msra.mxu0 0
    %729 = vmatprep.subr.bf16.mxu0 0
    %730 = vmatpush1.bf16.msra.mxu0 0
    %731 = vmatprep.mubr.bf16.mxu0 0
    %732 = vmatmul.mubr.bf16.gmra.mrb[0].mxu0 %v391
    %v733 = vpop.f32.mrb[0].mxu0
    %v734 = vadd.f32 0.0, %v733
    %v735 = vpop.f32.mrb[0].mxu0
    %v736 = vadd.f32 0.0, %v735
    %v737 = vpop.f32.mrb[0].mxu0
    %v738 = vpop.f32.mrb[0].mxu0
    %739 = vdwg.mxu0
    %740 = vmatprep.subr.bf16.mxu0 %v428
    %741 = vmatpush1.bf16.msra.mxu0 %v425
    %742 = vmatprep.subr.bf16.mxu0 0
    %743 = vmatpush1.bf16.msra.mxu0 0
    %744 = vmatprep.subr.bf16.mxu0 0
    %745 = vmatpush1.bf16.msra.mxu0 0
    %746 = vmatprep.subr.bf16.mxu0 0
    %747 = vmatpush1.bf16.msra.mxu0 0
    %748 = vmatprep.subr.bf16.mxu0 0
    %749 = vmatpush1.bf16.msra.mxu0 0
    %750 = vmatprep.subr.bf16.mxu0 0
    %751 = vmatpush1.bf16.msra.mxu0 0
    %752 = vmatprep.subr.bf16.mxu0 0
    %753 = vmatpush1.bf16.msra.mxu0 0
    %754 = vmatprep.subr.bf16.mxu0 0
    %755 = vmatpush1.bf16.msra.mxu0 0
    %756 = vmatprep.subr.bf16.mxu0 0
    %757 = vmatpush1.bf16.msra.mxu0 0
    %758 = vmatprep.subr.bf16.mxu0 0
    %759 = vmatpush1.bf16.msra.mxu0 0
    %760 = vmatprep.subr.bf16.mxu0 0
    %761 = vmatpush1.bf16.msra.mxu0 0
    %762 = vmatprep.subr.bf16.mxu0 0
    %763 = vmatpush1.bf16.msra.mxu0 0
    %764 = vmatprep.subr.bf16.mxu0 0
    %765 = vmatpush1.bf16.msra.mxu0 0
    %766 = vmatprep.subr.bf16.mxu0 0
    %767 = vmatpush1.bf16.msra.mxu0 0
    %768 = vmatprep.subr.bf16.mxu0 0
    %769 = vmatpush1.bf16.msra.mxu0 0
    %770 = vmatprep.subr.bf16.mxu0 0
    %771 = vmatpush1.bf16.msra.mxu0 0
    %772 = vmatprep.mubr.bf16.mxu0 0
    %773 = vmatmul.mubr.bf16.gmra.mrb[0].mxu0 %v391
    %v774 = vpop.f32.mrb[0].mxu0
    %v775 = vadd.f32 0.0, %v774
    %v776 = vpop.f32.mrb[0].mxu0
    %v777 = vadd.f32 0.0, %v776
    %v778 = vpop.f32.mrb[0].mxu0
    %v779 = vpop.f32.mrb[0].mxu0
    %780 = vdwg.mxu0
    %781 = vmatprep.subr.bf16.mxu0 %v434
    %782 = vmatpush1.bf16.msra.mxu0 %v431
    %783 = vmatprep.subr.bf16.mxu0 0
    %784 = vmatpush1.bf16.msra.mxu0 0
    %785 = vmatprep.subr.bf16.mxu0 0
    %786 = vmatpush1.bf16.msra.mxu0 0
    %787 = vmatprep.subr.bf16.mxu0 0
    %788 = vmatpush1.bf16.msra.mxu0 0
    %789 = vmatprep.subr.bf16.mxu0 0
    %790 = vmatpush1.bf16.msra.mxu0 0
    %791 = vmatprep.subr.bf16.mxu0 0
    %792 = vmatpush1.bf16.msra.mxu0 0
    %793 = vmatprep.subr.bf16.mxu0 0
    %794 = vmatpush1.bf16.msra.mxu0 0
    %795 = vmatprep.subr.bf16.mxu0 0
    %796 = vmatpush1.bf16.msra.mxu0 0
    %797 = vmatprep.subr.bf16.mxu0 0
    %798 = vmatpush1.bf16.msra.mxu0 0
    %799 = vmatprep.subr.bf16.mxu0 0
    %800 = vmatpush1.bf16.msra.mxu0 0
    %801 = vmatprep.subr.bf16.mxu0 0
    %802 = vmatpush1.bf16.msra.mxu0 0
    %803 = vmatprep.subr.bf16.mxu0 0
    %804 = vmatpush1.bf16.msra.mxu0 0
    %805 = vmatprep.subr.bf16.mxu0 0
    %806 = vmatpush1.bf16.msra.mxu0 0
    %807 = vmatprep.subr.bf16.mxu0 0
    %808 = vmatpush1.bf16.msra.mxu0 0
    %809 = vmatprep.subr.bf16.mxu0 0
    %810 = vmatpush1.bf16.msra.mxu0 0
    %811 = vmatprep.subr.bf16.mxu0 0
    %812 = vmatpush1.bf16.msra.mxu0 0
    %813 = vmatprep.mubr.bf16.mxu0 0
    %814 = vmatmul.mubr.bf16.gmra.mrb[0].mxu0 %v391
    %v815 = vpop.f32.mrb[0].mxu0
    %v816 = vadd.f32 0.0, %v815
    %v817 = vpop.f32.mrb[0].mxu0
    %v818 = vadd.f32 0.0, %v817
    %v819 = vpop.f32.mrb[0].mxu0
    %v820 = vpop.f32.mrb[0].mxu0
    %821 = vdwg.mxu0
    %822 = vmatprep.subr.bf16.mxu0 %v440
    %823 = vmatpush1.bf16.msra.mxu0 %v437
    %824 = vmatprep.subr.bf16.mxu0 0
    %825 = vmatpush1.bf16.msra.mxu0 0
    %826 = vmatprep.subr.bf16.mxu0 0
    %827 = vmatpush1.bf16.msra.mxu0 0
    %828 = vmatprep.subr.bf16.mxu0 0
    %829 = vmatpush1.bf16.msra.mxu0 0
    %830 = vmatprep.subr.bf16.mxu0 0
    %831 = vmatpush1.bf16.msra.mxu0 0
    %832 = vmatprep.subr.bf16.mxu0 0
    %833 = vmatpush1.bf16.msra.mxu0 0
    %834 = vmatprep.subr.bf16.mxu0 0
    %835 = vmatpush1.bf16.msra.mxu0 0
    %836 = vmatprep.subr.bf16.mxu0 0
    %837 = vmatpush1.bf16.msra.mxu0 0
    %838 = vmatprep.subr.bf16.mxu0 0
    %839 = vmatpush1.bf16.msra.mxu0 0
    %840 = vmatprep.subr.bf16.mxu0 0
    %841 = vmatpush1.bf16.msra.mxu0 0
    %842 = vmatprep.subr.bf16.mxu0 0
    %843 = vmatpush1.bf16.msra.mxu0 0
    %844 = vmatprep.subr.bf16.mxu0 0
    %845 = vmatpush1.bf16.msra.mxu0 0
    %846 = vmatprep.subr.bf16.mxu0 0
    %847 = vmatpush1.bf16.msra.mxu0 0
    %848 = vmatprep.subr.bf16.mxu0 0
    %849 = vmatpush1.bf16.msra.mxu0 0
    %850 = vmatprep.subr.bf16.mxu0 0
    %851 = vmatpush1.bf16.msra.mxu0 0
    %852 = vmatprep.subr.bf16.mxu0 0
    %853 = vmatpush1.bf16.msra.mxu0 0
    %854 = vmatprep.mubr.bf16.mxu0 0
    %855 = vmatmul.mubr.bf16.gmra.mrb[0].mxu0 %v391
    %v856 = vpop.f32.mrb[0].mxu0
    %v857 = vadd.f32 0.0, %v856
    %v858 = vpop.f32.mrb[0].mxu0
    %v859 = vadd.f32 0.0, %v858
    %v860 = vpop.f32.mrb[0].mxu0
    %v861 = vpop.f32.mrb[0].mxu0
    %862 = vdwg.mxu0
    %863 = vmatprep.subr.bf16.mxu0 %v446
    %864 = vmatpush1.bf16.msra.mxu0 %v443
    %865 = vmatprep.subr.bf16.mxu0 0
    %866 = vmatpush1.bf16.msra.mxu0 0
    %867 = vmatprep.subr.bf16.mxu0 0
    %868 = vmatpush1.bf16.msra.mxu0 0
    %869 = vmatprep.subr.bf16.mxu0 0
    %870 = vmatpush1.bf16.msra.mxu0 0
    %871 = vmatprep.subr.bf16.mxu0 0
    %872 = vmatpush1.bf16.msra.mxu0 0
    %873 = vmatprep.subr.bf16.mxu0 0
    %874 = vmatpush1.bf16.msra.mxu0 0
    %875 = vmatprep.subr.bf16.mxu0 0
    %876 = vmatpush1.bf16.msra.mxu0 0
    %877 = vmatprep.subr.bf16.mxu0 0
    %878 = vmatpush1.bf16.msra.mxu0 0
    %879 = vmatprep.subr.bf16.mxu0 0
    %880 = vmatpush1.bf16.msra.mxu0 0
    %881 = vmatprep.subr.bf16.mxu0 0
    %882 = vmatpush1.bf16.msra.mxu0 0
    %883 = vmatprep.subr.bf16.mxu0 0
    %884 = vmatpush1.bf16.msra.mxu0 0
    %885 = vmatprep.subr.bf16.mxu0 0
    %886 = vmatpush1.bf16.msra.mxu0 0
    %887 = vmatprep.subr.bf16.mxu0 0
    %888 = vmatpush1.bf16.msra.mxu0 0
    %889 = vmatprep.subr.bf16.mxu0 0
    %890 = vmatpush1.bf16.msra.mxu0 0
    %891 = vmatprep.subr.bf16.mxu0 0
    %892 = vmatpush1.bf16.msra.mxu0 0
    %893 = vmatprep.subr.bf16.mxu0 0
    %894 = vmatpush1.bf16.msra.mxu0 0
    %895 = vmatprep.mubr.bf16.mxu0 0
    %896 = vmatmul.mubr.bf16.gmra.mrb[0].mxu0 %v391
    %v897 = vpop.f32.mrb[0].mxu0
    %v898 = vadd.f32 0.0, %v897
    %v899 = vpop.f32.mrb[0].mxu0
    %v900 = vadd.f32 0.0, %v899
    %v901 = vpop.f32.mrb[0].mxu0
    %v902 = vpop.f32.mrb[0].mxu0
    %903 = vdwg.mxu0
    %904 = vmatprep.subr.bf16.mxu0 %v452
    %905 = vmatpush1.bf16.msra.mxu0 %v449
    %906 = vmatprep.subr.bf16.mxu0 0
    %907 = vmatpush1.bf16.msra.mxu0 0
    %908 = vmatprep.subr.bf16.mxu0 0
    %909 = vmatpush1.bf16.msra.mxu0 0
    %910 = vmatprep.subr.bf16.mxu0 0
    %911 = vmatpush1.bf16.msra.mxu0 0
    %912 = vmatprep.subr.bf16.mxu0 0
    %913 = vmatpush1.bf16.msra.mxu0 0
    %914 = vmatprep.subr.bf16.mxu0 0
    %915 = vmatpush1.bf16.msra.mxu0 0
    %916 = vmatprep.subr.bf16.mxu0 0
    %917 = vmatpush1.bf16.msra.mxu0 0
    %918 = vmatprep.subr.bf16.mxu0 0
    %919 = vmatpush1.bf16.msra.mxu0 0
    %920 = vmatprep.subr.bf16.mxu0 0
    %921 = vmatpush1.bf16.msra.mxu0 0
    %922 = vmatprep.subr.bf16.mxu0 0
    %923 = vmatpush1.bf16.msra.mxu0 0
    %924 = vmatprep.subr.bf16.mxu0 0
    %925 = vmatpush1.bf16.msra.mxu0 0
    %926 = vmatprep.subr.bf16.mxu0 0
    %927 = vmatpush1.bf16.msra.mxu0 0
    %928 = vmatprep.subr.bf16.mxu0 0
    %929 = vmatpush1.bf16.msra.mxu0 0
    %930 = vmatprep.subr.bf16.mxu0 0
    %931 = vmatpush1.bf16.msra.mxu0 0
    %932 = vmatprep.subr.bf16.mxu0 0
    %933 = vmatpush1.bf16.msra.mxu0 0
    %934 = vmatprep.subr.bf16.mxu0 0
    %935 = vmatpush1.bf16.msra.mxu0 0
    %936 = vmatprep.mubr.bf16.mxu0 0
    %937 = vmatmul.mubr.bf16.gmra.mrb[0].mxu0 %v391
    %v938 = vpop.f32.mrb[0].mxu0
    %v939 = vadd.f32 0.0, %v938
    %v940 = vpop.f32.mrb[0].mxu0
    %v941 = vadd.f32 0.0, %v940
    %v942 = vpop.f32.mrb[0].mxu0
    %v943 = vpop.f32.mrb[0].mxu0
    %944 = vdwg.mxu0
    %945 = vmatprep.subr.bf16.mxu0 %v458
    %946 = vmatpush1.bf16.msra.mxu0 %v455
    %947 = vmatprep.subr.bf16.mxu0 0
    %948 = vmatpush1.bf16.msra.mxu0 0
    %949 = vmatprep.subr.bf16.mxu0 0
    %950 = vmatpush1.bf16.msra.mxu0 0
    %951 = vmatprep.subr.bf16.mxu0 0
    %952 = vmatpush1.bf16.msra.mxu0 0
    %953 = vmatprep.subr.bf16.mxu0 0
    %954 = vmatpush1.bf16.msra.mxu0 0
    %955 = vmatprep.subr.bf16.mxu0 0
    %956 = vmatpush1.bf16.msra.mxu0 0
    %957 = vmatprep.subr.bf16.mxu0 0
    %958 = vmatpush1.bf16.msra.mxu0 0
    %959 = vmatprep.subr.bf16.mxu0 0
    %960 = vmatpush1.bf16.msra.mxu0 0
    %961 = vmatprep.subr.bf16.mxu0 0
    %962 = vmatpush1.bf16.msra.mxu0 0
    %963 = vmatprep.subr.bf16.mxu0 0
    %964 = vmatpush1.bf16.msra.mxu0 0
    %965 = vmatprep.subr.bf16.mxu0 0
    %966 = vmatpush1.bf16.msra.mxu0 0
    %967 = vmatprep.subr.bf16.mxu0 0
    %968 = vmatpush1.bf16.msra.mxu0 0
    %969 = vmatprep.subr.bf16.mxu0 0
    %970 = vmatpush1.bf16.msra.mxu0 0
    %971 = vmatprep.subr.bf16.mxu0 0
    %972 = vmatpush1.bf16.msra.mxu0 0
    %973 = vmatprep.subr.bf16.mxu0 0
    %974 = vmatpush1.bf16.msra.mxu0 0
    %975 = vmatprep.subr.bf16.mxu0 0
    %976 = vmatpush1.bf16.msra.mxu0 0
    %977 = vmatprep.mubr.bf16.mxu0 0
    %978 = vmatmul.mubr.bf16.gmra.mrb[0].mxu0 %v391
    %v979 = vpop.f32.mrb[0].mxu0
    %v980 = vadd.f32 0.0, %v979
    %v981 = vpop.f32.mrb[0].mxu0
    %v982 = vadd.f32 0.0, %v981
    %v983 = vpop.f32.mrb[0].mxu0
    %v984 = vpop.f32.mrb[0].mxu0
    %985 = vdwg.mxu0
    %986 = vmatprep.subr.bf16.mxu0 %v464
    %987 = vmatpush1.bf16.msra.mxu0 %v461
    %988 = vmatprep.subr.bf16.mxu0 0
    %989 = vmatpush1.bf16.msra.mxu0 0
    %990 = vmatprep.subr.bf16.mxu0 0
    %991 = vmatpush1.bf16.msra.mxu0 0
    %992 = vmatprep.subr.bf16.mxu0 0
    %993 = vmatpush1.bf16.msra.mxu0 0
    %994 = vmatprep.subr.bf16.mxu0 0
    %995 = vmatpush1.bf16.msra.mxu0 0
    %996 = vmatprep.subr.bf16.mxu0 0
    %997 = vmatpush1.bf16.msra.mxu0 0
    %998 = vmatprep.subr.bf16.mxu0 0
    %999 = vmatpush1.bf16.msra.mxu0 0
    %1000 = vmatprep.subr.bf16.mxu0 0
    %1001 = vmatpush1.bf16.msra.mxu0 0
    %1002 = vmatprep.subr.bf16.mxu0 0
    %1003 = vmatpush1.bf16.msra.mxu0 0
    %1004 = vmatprep.subr.bf16.mxu0 0
    %1005 = vmatpush1.bf16.msra.mxu0 0
    %1006 = vmatprep.subr.bf16.mxu0 0
    %1007 = vmatpush1.bf16.msra.mxu0 0
    %1008 = vmatprep.subr.bf16.mxu0 0
    %1009 = vmatpush1.bf16.msra.mxu0 0
    %1010 = vmatprep.subr.bf16.mxu0 0
    %1011 = vmatpush1.bf16.msra.mxu0 0
    %1012 = vmatprep.subr.bf16.mxu0 0
    %1013 = vmatpush1.bf16.msra.mxu0 0
    %1014 = vmatprep.subr.bf16.mxu0 0
    %1015 = vmatpush1.bf16.msra.mxu0 0
    %1016 = vmatprep.subr.bf16.mxu0 0
    %1017 = vmatpush1.bf16.msra.mxu0 0
    %1018 = vmatprep.mubr.bf16.mxu0 0
    %1019 = vmatmul.mubr.bf16.gmra.mrb[0].mxu0 %v391
    %v1020 = vpop.f32.mrb[0].mxu0
    %v1021 = vadd.f32 0.0, %v1020
    %v1022 = vpop.f32.mrb[0].mxu0
    %v1023 = vadd.f32 0.0, %v1022
    %v1024 = vpop.f32.mrb[0].mxu0
    %v1025 = vpop.f32.mrb[0].mxu0
    %1026 = vdwg.mxu0
    %1027 = vmatprep.subr.bf16.mxu0 %v470
    %1028 = vmatpush1.bf16.msra.mxu0 %v467
    %1029 = vmatprep.subr.bf16.mxu0 0
    %1030 = vmatpush1.bf16.msra.mxu0 0
    %1031 = vmatprep.subr.bf16.mxu0 0
    %1032 = vmatpush1.bf16.msra.mxu0 0
    %1033 = vmatprep.subr.bf16.mxu0 0
    %1034 = vmatpush1.bf16.msra.mxu0 0
    %1035 = vmatprep.subr.bf16.mxu0 0
    %1036 = vmatpush1.bf16.msra.mxu0 0
    %1037 = vmatprep.subr.bf16.mxu0 0
    %1038 = vmatpush1.bf16.msra.mxu0 0
    %1039 = vmatprep.subr.bf16.mxu0 0
    %1040 = vmatpush1.bf16.msra.mxu0 0
    %1041 = vmatprep.subr.bf16.mxu0 0
    %1042 = vmatpush1.bf16.msra.mxu0 0
    %1043 = vmatprep.subr.bf16.mxu0 0
    %1044 = vmatpush1.bf16.msra.mxu0 0
    %1045 = vmatprep.subr.bf16.mxu0 0
    %1046 = vmatpush1.bf16.msra.mxu0 0
    %1047 = vmatprep.subr.bf16.mxu0 0
    %1048 = vmatpush1.bf16.msra.mxu0 0
    %1049 = vmatprep.subr.bf16.mxu0 0
    %1050 = vmatpush1.bf16.msra.mxu0 0
    %1051 = vmatprep.subr.bf16.mxu0 0
    %1052 = vmatpush1.bf16.msra.mxu0 0
    %1053 = vmatprep.subr.bf16.mxu0 0
    %1054 = vmatpush1.bf16.msra.mxu0 0
    %1055 = vmatprep.subr.bf16.mxu0 0
    %1056 = vmatpush1.bf16.msra.mxu0 0
    %1057 = vmatprep.subr.bf16.mxu0 0
    %1058 = vmatpush1.bf16.msra.mxu0 0
    %1059 = vmatprep.mubr.bf16.mxu0 0
    %1060 = vmatmul.mubr.bf16.gmra.mrb[0].mxu0 %v391
    %v1061 = vpop.f32.mrb[0].mxu0
    %v1062 = vadd.f32 0.0, %v1061
    %v1063 = vpop.f32.mrb[0].mxu0
    %v1064 = vadd.f32 0.0, %v1063
    %v1065 = vpop.f32.mrb[0].mxu0
    %v1066 = vpop.f32.mrb[0].mxu0
    %1067 = vdwg.mxu0
    %1068 = vmatprep.subr.bf16.mxu0 %v476
    %1069 = vmatpush1.bf16.msra.mxu0 %v473
    %1070 = vmatprep.subr.bf16.mxu0 0
    %1071 = vmatpush1.bf16.msra.mxu0 0
    %1072 = vmatprep.subr.bf16.mxu0 0
    %1073 = vmatpush1.bf16.msra.mxu0 0
    %1074 = vmatprep.subr.bf16.mxu0 0
    %1075 = vmatpush1.bf16.msra.mxu0 0
    %1076 = vmatprep.subr.bf16.mxu0 0
    %1077 = vmatpush1.bf16.msra.mxu0 0
    %1078 = vmatprep.subr.bf16.mxu0 0
    %1079 = vmatpush1.bf16.msra.mxu0 0
    %1080 = vmatprep.subr.bf16.mxu0 0
    %1081 = vmatpush1.bf16.msra.mxu0 0
    %1082 = vmatprep.subr.bf16.mxu0 0
    %1083 = vmatpush1.bf16.msra.mxu0 0
    %1084 = vmatprep.subr.bf16.mxu0 0
    %1085 = vmatpush1.bf16.msra.mxu0 0
    %1086 = vmatprep.subr.bf16.mxu0 0
    %1087 = vmatpush1.bf16.msra.mxu0 0
    %1088 = vmatprep.subr.bf16.mxu0 0
    %1089 = vmatpush1.bf16.msra.mxu0 0
    %1090 = vmatprep.subr.bf16.mxu0 0
    %1091 = vmatpush1.bf16.msra.mxu0 0
    %1092 = vmatprep.subr.bf16.mxu0 0
    %1093 = vmatpush1.bf16.msra.mxu0 0
    %1094 = vmatprep.subr.bf16.mxu0 0
    %1095 = vmatpush1.bf16.msra.mxu0 0
    %1096 = vmatprep.subr.bf16.mxu0 0
    %1097 = vmatpush1.bf16.msra.mxu0 0
    %1098 = vmatprep.subr.bf16.mxu0 0
    %1099 = vmatpush1.bf16.msra.mxu0 0
    %1100 = vmatprep.mubr.bf16.mxu0 0
    %1101 = vmatmul.mubr.bf16.gmra.mrb[0].mxu0 %v391
    %v1102 = vpop.f32.mrb[0].mxu0
    %v1103 = vadd.f32 0.0, %v1102
    %v1104 = vpop.f32.mrb[0].mxu0
    %v1105 = vadd.f32 0.0, %v1104
    %v1106 = vpop.f32.mrb[0].mxu0
    %v1107 = vpop.f32.mrb[0].mxu0
    %1108 = vdwg.mxu0
    %1109 = vmatprep.subr.bf16.mxu0 %v482
    %1110 = vmatpush1.bf16.msra.mxu0 %v479
    %1111 = vmatprep.subr.bf16.mxu0 0
    %1112 = vmatpush1.bf16.msra.mxu0 0
    %1113 = vmatprep.subr.bf16.mxu0 0
    %1114 = vmatpush1.bf16.msra.mxu0 0
    %1115 = vmatprep.subr.bf16.mxu0 0
    %1116 = vmatpush1.bf16.msra.mxu0 0
    %1117 = vmatprep.subr.bf16.mxu0 0
    %1118 = vmatpush1.bf16.msra.mxu0 0
    %1119 = vmatprep.subr.bf16.mxu0 0
    %1120 = vmatpush1.bf16.msra.mxu0 0
    %1121 = vmatprep.subr.bf16.mxu0 0
    %1122 = vmatpush1.bf16.msra.mxu0 0
    %1123 = vmatprep.subr.bf16.mxu0 0
    %1124 = vmatpush1.bf16.msra.mxu0 0
    %1125 = vmatprep.subr.bf16.mxu0 0
    %1126 = vmatpush1.bf16.msra.mxu0 0
    %1127 = vmatprep.subr.bf16.mxu0 0
    %1128 = vmatpush1.bf16.msra.mxu0 0
    %1129 = vmatprep.subr.bf16.mxu0 0
    %1130 = vmatpush1.bf16.msra.mxu0 0
    %1131 = vmatprep.subr.bf16.mxu0 0
    %1132 = vmatpush1.bf16.msra.mxu0 0
    %1133 = vmatprep.subr.bf16.mxu0 0
    %1134 = vmatpush1.bf16.msra.mxu0 0
    %1135 = vmatprep.subr.bf16.mxu0 0
    %1136 = vmatpush1.bf16.msra.mxu0 0
    %1137 = vmatprep.subr.bf16.mxu0 0
    %1138 = vmatpush1.bf16.msra.mxu0 0
    %1139 = vmatprep.subr.bf16.mxu0 0
    %1140 = vmatpush1.bf16.msra.mxu0 0
    %1141 = vmatprep.mubr.bf16.mxu0 0
    %1142 = vmatmul.mubr.bf16.gmra.mrb[0].mxu0 %v391
    %v1143 = vpop.f32.mrb[0].mxu0
    %v1144 = vadd.f32 0.0, %v1143
    %v1145 = vpop.f32.mrb[0].mxu0
    %v1146 = vadd.f32 0.0, %v1145
    %v1147 = vpop.f32.mrb[0].mxu0
    %v1148 = vpop.f32.mrb[0].mxu0
    %1149 = vdwg.mxu0
    %1150 = vmatprep.subr.bf16.mxu0 %v488
    %1151 = vmatpush1.bf16.msra.mxu0 %v485
    %1152 = vmatprep.subr.bf16.mxu0 0
    %1153 = vmatpush1.bf16.msra.mxu0 0
    %1154 = vmatprep.subr.bf16.mxu0 0
    %1155 = vmatpush1.bf16.msra.mxu0 0
    %1156 = vmatprep.subr.bf16.mxu0 0
    %1157 = vmatpush1.bf16.msra.mxu0 0
    %1158 = vmatprep.subr.bf16.mxu0 0
    %1159 = vmatpush1.bf16.msra.mxu0 0
    %1160 = vmatprep.subr.bf16.mxu0 0
    %1161 = vmatpush1.bf16.msra.mxu0 0
    %1162 = vmatprep.subr.bf16.mxu0 0
    %1163 = vmatpush1.bf16.msra.mxu0 0
    %1164 = vmatprep.subr.bf16.mxu0 0
    %1165 = vmatpush1.bf16.msra.mxu0 0
    %1166 = vmatprep.subr.bf16.mxu0 0
    %1167 = vmatpush1.bf16.msra.mxu0 0
    %1168 = vmatprep.subr.bf16.mxu0 0
    %1169 = vmatpush1.bf16.msra.mxu0 0
    %1170 = vmatprep.subr.bf16.mxu0 0
    %1171 = vmatpush1.bf16.msra.mxu0 0
    %1172 = vmatprep.subr.bf16.mxu0 0
    %1173 = vmatpush1.bf16.msra.mxu0 0
    %1174 = vmatprep.subr.bf16.mxu0 0
    %1175 = vmatpush1.bf16.msra.mxu0 0
    %1176 = vmatprep.subr.bf16.mxu0 0
    %1177 = vmatpush1.bf16.msra.mxu0 0
    %1178 = vmatprep.subr.bf16.mxu0 0
    %1179 = vmatpush1.bf16.msra.mxu0 0
    %1180 = vmatprep.subr.bf16.mxu0 0
    %1181 = vmatpush1.bf16.msra.mxu0 0
    %1182 = vmatprep.mubr.bf16.mxu0 0
    %1183 = vmatmul.mubr.bf16.gmra.mrb[0].mxu0 %v391
    %v1184 = vpop.f32.mrb[0].mxu0
    %v1185 = vadd.f32 0.0, %v1184
    %v1186 = vpop.f32.mrb[0].mxu0
    %v1187 = vadd.f32 0.0, %v1186
    %v1188 = vpop.f32.mrb[0].mxu0
    %v1189 = vpop.f32.mrb[0].mxu0
    %1190 = vdwg.mxu0
    %1191 = vmatprep.subr.bf16.mxu0 %v494
    %1192 = vmatpush1.bf16.msra.mxu0 %v491
    %1193 = vmatprep.subr.bf16.mxu0 0
    %1194 = vmatpush1.bf16.msra.mxu0 0
    %1195 = vmatprep.subr.bf16.mxu0 0
    %1196 = vmatpush1.bf16.msra.mxu0 0
    %1197 = vmatprep.subr.bf16.mxu0 0
    %1198 = vmatpush1.bf16.msra.mxu0 0
    %1199 = vmatprep.subr.bf16.mxu0 0
    %1200 = vmatpush1.bf16.msra.mxu0 0
    %1201 = vmatprep.subr.bf16.mxu0 0
    %1202 = vmatpush1.bf16.msra.mxu0 0
    %1203 = vmatprep.subr.bf16.mxu0 0
    %1204 = vmatpush1.bf16.msra.mxu0 0
    %1205 = vmatprep.subr.bf16.mxu0 0
    %1206 = vmatpush1.bf16.msra.mxu0 0
    %1207 = vmatprep.subr.bf16.mxu0 0
    %1208 = vmatpush1.bf16.msra.mxu0 0
    %1209 = vmatprep.subr.bf16.mxu0 0
    %1210 = vmatpush1.bf16.msra.mxu0 0
    %1211 = vmatprep.subr.bf16.mxu0 0
    %1212 = vmatpush1.bf16.msra.mxu0 0
    %1213 = vmatprep.subr.bf16.mxu0 0
    %1214 = vmatpush1.bf16.msra.mxu0 0
    %1215 = vmatprep.subr.bf16.mxu0 0
    %1216 = vmatpush1.bf16.msra.mxu0 0
    %1217 = vmatprep.subr.bf16.mxu0 0
    %1218 = vmatpush1.bf16.msra.mxu0 0
    %1219 = vmatprep.subr.bf16.mxu0 0
    %1220 = vmatpush1.bf16.msra.mxu0 0
    %1221 = vmatprep.subr.bf16.mxu0 0
    %1222 = vmatpush1.bf16.msra.mxu0 0
    %1223 = vmatprep.mubr.bf16.mxu0 0
    %1224 = vmatmul.mubr.bf16.gmra.mrb[0].mxu0 %v391
    %v1225 = vpop.f32.mrb[0].mxu0
    %v1226 = vadd.f32 0.0, %v1225
    %v1227 = vpop.f32.mrb[0].mxu0
    %v1228 = vadd.f32 0.0, %v1227
    %v1229 = vpop.f32.mrb[0].mxu0
    %v1230 = vpop.f32.mrb[0].mxu0
    %1231 = vdwg.mxu0
    %1232 = vmatprep.subr.bf16.mxu0 %v500
    %1233 = vmatpush1.bf16.msra.mxu0 %v497
    %1234 = vmatprep.subr.bf16.mxu0 0
    %1235 = vmatpush1.bf16.msra.mxu0 0
    %1236 = vmatprep.subr.bf16.mxu0 0
    %1237 = vmatpush1.bf16.msra.mxu0 0
    %1238 = vmatprep.subr.bf16.mxu0 0
    %1239 = vmatpush1.bf16.msra.mxu0 0
    %1240 = vmatprep.subr.bf16.mxu0 0
    %1241 = vmatpush1.bf16.msra.mxu0 0
    %1242 = vmatprep.subr.bf16.mxu0 0
    %1243 = vmatpush1.bf16.msra.mxu0 0
    %1244 = vmatprep.subr.bf16.mxu0 0
    %1245 = vmatpush1.bf16.msra.mxu0 0
    %1246 = vmatprep.subr.bf16.mxu0 0
    %1247 = vmatpush1.bf16.msra.mxu0 0
    %1248 = vmatprep.subr.bf16.mxu0 0
    %1249 = vmatpush1.bf16.msra.mxu0 0
    %1250 = vmatprep.subr.bf16.mxu0 0
    %1251 = vmatpush1.bf16.msra.mxu0 0
    %1252 = vmatprep.subr.bf16.mxu0 0
    %1253 = vmatpush1.bf16.msra.mxu0 0
    %1254 = vmatprep.subr.bf16.mxu0 0
    %1255 = vmatpush1.bf16.msra.mxu0 0
    %1256 = vmatprep.subr.bf16.mxu0 0
    %1257 = vmatpush1.bf16.msra.mxu0 0
    %1258 = vmatprep.subr.bf16.mxu0 0
    %1259 = vmatpush1.bf16.msra.mxu0 0
    %1260 = vmatprep.subr.bf16.mxu0 0
    %1261 = vmatpush1.bf16.msra.mxu0 0
    %1262 = vmatprep.subr.bf16.mxu0 0
    %1263 = vmatpush1.bf16.msra.mxu0 0
    %1264 = vmatprep.mubr.bf16.mxu0 0
    %1265 = vmatmul.mubr.bf16.gmra.mrb[0].mxu0 %v391
    %v1266 = vpop.f32.mrb[0].mxu0
    %v1267 = vadd.f32 0.0, %v1266
    %v1268 = vpop.f32.mrb[0].mxu0
    %v1269 = vadd.f32 0.0, %v1268
    %v1270 = vpop.f32.mrb[0].mxu0
    %v1271 = vpop.f32.mrb[0].mxu0
    %1272 = vdwg.mxu0
    %1273 = vmatprep.subr.bf16.mxu0 %v506
    %1274 = vmatpush1.bf16.msra.mxu0 %v503
    %1275 = vmatprep.subr.bf16.mxu0 0
    %1276 = vmatpush1.bf16.msra.mxu0 0
    %1277 = vmatprep.subr.bf16.mxu0 0
    %1278 = vmatpush1.bf16.msra.mxu0 0
    %1279 = vmatprep.subr.bf16.mxu0 0
    %1280 = vmatpush1.bf16.msra.mxu0 0
    %1281 = vmatprep.subr.bf16.mxu0 0
    %1282 = vmatpush1.bf16.msra.mxu0 0
    %1283 = vmatprep.subr.bf16.mxu0 0
    %1284 = vmatpush1.bf16.msra.mxu0 0
    %1285 = vmatprep.subr.bf16.mxu0 0
    %1286 = vmatpush1.bf16.msra.mxu0 0
    %1287 = vmatprep.subr.bf16.mxu0 0
    %1288 = vmatpush1.bf16.msra.mxu0 0
    %1289 = vmatprep.subr.bf16.mxu0 0
    %1290 = vmatpush1.bf16.msra.mxu0 0
    %1291 = vmatprep.subr.bf16.mxu0 0
    %1292 = vmatpush1.bf16.msra.mxu0 0
    %1293 = vmatprep.subr.bf16.mxu0 0
    %1294 = vmatpush1.bf16.msra.mxu0 0
    %1295 = vmatprep.subr.bf16.mxu0 0
    %1296 = vmatpush1.bf16.msra.mxu0 0
    %1297 = vmatprep.subr.bf16.mxu0 0
    %1298 = vmatpush1.bf16.msra.mxu0 0
    %1299 = vmatprep.subr.bf16.mxu0 0
    %1300 = vmatpush1.bf16.msra.mxu0 0
    %1301 = vmatprep.subr.bf16.mxu0 0
    %1302 = vmatpush1.bf16.msra.mxu0 0
    %1303 = vmatprep.subr.bf16.mxu0 0
    %1304 = vmatpush1.bf16.msra.mxu0 0
    %1305 = vmatprep.mubr.bf16.mxu0 0
    %1306 = vmatmul.mubr.bf16.gmra.mrb[0].mxu0 %v391
    %v1307 = vpop.f32.mrb[0].mxu0
    %v1308 = vadd.f32 0.0, %v1307
    %v1309 = vpop.f32.mrb[0].mxu0
    %v1310 = vadd.f32 0.0, %v1309
    %v1311 = vpop.f32.mrb[0].mxu0
    %v1312 = vpop.f32.mrb[0].mxu0
    %1313 = vdwg.mxu0
    %1314 = vmatprep.subr.bf16.mxu0 %v512
    %1315 = vmatpush1.bf16.msra.mxu0 %v509
    %1316 = vmatprep.subr.bf16.mxu0 0
    %1317 = vmatpush1.bf16.msra.mxu0 0
    %1318 = vmatprep.subr.bf16.mxu0 0
    %1319 = vmatpush1.bf16.msra.mxu0 0
    %1320 = vmatprep.subr.bf16.mxu0 0
    %1321 = vmatpush1.bf16.msra.mxu0 0
    %1322 = vmatprep.subr.bf16.mxu0 0
    %1323 = vmatpush1.bf16.msra.mxu0 0
    %1324 = vmatprep.subr.bf16.mxu0 0
    %1325 = vmatpush1.bf16.msra.mxu0 0
    %1326 = vmatprep.subr.bf16.mxu0 0
    %1327 = vmatpush1.bf16.msra.mxu0 0
    %1328 = vmatprep.subr.bf16.mxu0 0
    %1329 = vmatpush1.bf16.msra.mxu0 0
    %1330 = vmatprep.subr.bf16.mxu0 0
    %1331 = vmatpush1.bf16.msra.mxu0 0
    %1332 = vmatprep.subr.bf16.mxu0 0
    %1333 = vmatpush1.bf16.msra.mxu0 0
    %1334 = vmatprep.subr.bf16.mxu0 0
    %1335 = vmatpush1.bf16.msra.mxu0 0
    %1336 = vmatprep.subr.bf16.mxu0 0
    %1337 = vmatpush1.bf16.msra.mxu0 0
    %1338 = vmatprep.subr.bf16.mxu0 0
    %1339 = vmatpush1.bf16.msra.mxu0 0
    %1340 = vmatprep.subr.bf16.mxu0 0
    %1341 = vmatpush1.bf16.msra.mxu0 0
    %1342 = vmatprep.subr.bf16.mxu0 0
    %1343 = vmatpush1.bf16.msra.mxu0 0
    %1344 = vmatprep.subr.bf16.mxu0 0
    %1345 = vmatpush1.bf16.msra.mxu0 0
    %1346 = vmatprep.mubr.bf16.mxu0 0
    %1347 = vmatmul.mubr.bf16.gmra.mrb[0].mxu0 %v391
    %v1348 = vpop.f32.mrb[0].mxu0
    %v1349 = vadd.f32 0.0, %v1348
    %v1350 = vpop.f32.mrb[0].mxu0
    %v1351 = vadd.f32 0.0, %v1350
    %v1352 = vpop.f32.mrb[0].mxu0
    %v1353 = vpop.f32.mrb[0].mxu0
    %1354 = vdwg.mxu0
    %1355 = vmatprep.subr.bf16.mxu0 %v518
    %1356 = vmatpush1.bf16.msra.mxu0 %v515
    %1357 = vmatprep.subr.bf16.mxu0 0
    %1358 = vmatpush1.bf16.msra.mxu0 0
    %1359 = vmatprep.subr.bf16.mxu0 0
    %1360 = vmatpush1.bf16.msra.mxu0 0
    %1361 = vmatprep.subr.bf16.mxu0 0
    %1362 = vmatpush1.bf16.msra.mxu0 0
    %1363 = vmatprep.subr.bf16.mxu0 0
    %1364 = vmatpush1.bf16.msra.mxu0 0
    %1365 = vmatprep.subr.bf16.mxu0 0
    %1366 = vmatpush1.bf16.msra.mxu0 0
    %1367 = vmatprep.subr.bf16.mxu0 0
    %1368 = vmatpush1.bf16.msra.mxu0 0
    %1369 = vmatprep.subr.bf16.mxu0 0
    %1370 = vmatpush1.bf16.msra.mxu0 0
    %1371 = vmatprep.subr.bf16.mxu0 0
    %1372 = vmatpush1.bf16.msra.mxu0 0
    %1373 = vmatprep.subr.bf16.mxu0 0
    %1374 = vmatpush1.bf16.msra.mxu0 0
    %1375 = vmatprep.subr.bf16.mxu0 0
    %1376 = vmatpush1.bf16.msra.mxu0 0
    %1377 = vmatprep.subr.bf16.mxu0 0
    %1378 = vmatpush1.bf16.msra.mxu0 0
    %1379 = vmatprep.subr.bf16.mxu0 0
    %1380 = vmatpush1.bf16.msra.mxu0 0
    %1381 = vmatprep.subr.bf16.mxu0 0
    %1382 = vmatpush1.bf16.msra.mxu0 0
    %1383 = vmatprep.subr.bf16.mxu0 0
    %1384 = vmatpush1.bf16.msra.mxu0 0
    %1385 = vmatprep.subr.bf16.mxu0 0
    %1386 = vmatpush1.bf16.msra.mxu0 0
    %1387 = vmatprep.mubr.bf16.mxu0 0
    %1388 = vmatmul.mubr.bf16.gmra.mrb[0].mxu0 %v391
    %v1389 = vpop.f32.mrb[0].mxu0
    %v1390 = vadd.f32 0.0, %v1389
    %v1391 = vpop.f32.mrb[0].mxu0
    %v1392 = vadd.f32 0.0, %v1391
    %v1393 = vpop.f32.mrb[0].mxu0
    %v1394 = vpop.f32.mrb[0].mxu0
    %1395 = vdwg.mxu0
    %1396 = vmatprep.subr.bf16.mxu0 %v524
    %1397 = vmatpush1.bf16.msra.mxu0 %v521
    %1398 = vmatprep.subr.bf16.mxu0 0
    %1399 = vmatpush1.bf16.msra.mxu0 0
    %1400 = vmatprep.subr.bf16.mxu0 0
    %1401 = vmatpush1.bf16.msra.mxu0 0
    %1402 = vmatprep.subr.bf16.mxu0 0
    %1403 = vmatpush1.bf16.msra.mxu0 0
    %1404 = vmatprep.subr.bf16.mxu0 0
    %1405 = vmatpush1.bf16.msra.mxu0 0
    %1406 = vmatprep.subr.bf16.mxu0 0
    %1407 = vmatpush1.bf16.msra.mxu0 0
    %1408 = vmatprep.subr.bf16.mxu0 0
    %1409 = vmatpush1.bf16.msra.mxu0 0
    %1410 = vmatprep.subr.bf16.mxu0 0
    %1411 = vmatpush1.bf16.msra.mxu0 0
    %1412 = vmatprep.subr.bf16.mxu0 0
    %1413 = vmatpush1.bf16.msra.mxu0 0
    %1414 = vmatprep.subr.bf16.mxu0 0
    %1415 = vmatpush1.bf16.msra.mxu0 0
    %1416 = vmatprep.subr.bf16.mxu0 0
    %1417 = vmatpush1.bf16.msra.mxu0 0
    %1418 = vmatprep.subr.bf16.mxu0 0
    %1419 = vmatpush1.bf16.msra.mxu0 0
    %1420 = vmatprep.subr.bf16.mxu0 0
    %1421 = vmatpush1.bf16.msra.mxu0 0
    %1422 = vmatprep.subr.bf16.mxu0 0
    %1423 = vmatpush1.bf16.msra.mxu0 0
    %1424 = vmatprep.subr.bf16.mxu0 0
    %1425 = vmatpush1.bf16.msra.mxu0 0
    %1426 = vmatprep.subr.bf16.mxu0 0
    %1427 = vmatpush1.bf16.msra.mxu0 0
    %1428 = vmatprep.mubr.bf16.mxu0 0
    %1429 = vmatmul.mubr.bf16.gmra.mrb[0].mxu0 %v391
    %v1430 = vpop.f32.mrb[0].mxu0
    %v1431 = vadd.f32 0.0, %v1430
    %v1432 = vpop.f32.mrb[0].mxu0
    %v1433 = vadd.f32 0.0, %v1432
    %v1434 = vpop.f32.mrb[0].mxu0
    %v1435 = vpop.f32.mrb[0].mxu0
    %1436 = vdwg.mxu0
    %1437 = vmatprep.subr.bf16.mxu0 %v530
    %1438 = vmatpush1.bf16.msra.mxu0 %v527
    %1439 = vmatprep.subr.bf16.mxu0 0
    %1440 = vmatpush1.bf16.msra.mxu0 0
    %1441 = vmatprep.subr.bf16.mxu0 0
    %1442 = vmatpush1.bf16.msra.mxu0 0
    %1443 = vmatprep.subr.bf16.mxu0 0
    %1444 = vmatpush1.bf16.msra.mxu0 0
    %1445 = vmatprep.subr.bf16.mxu0 0
    %1446 = vmatpush1.bf16.msra.mxu0 0
    %1447 = vmatprep.subr.bf16.mxu0 0
    %1448 = vmatpush1.bf16.msra.mxu0 0
    %1449 = vmatprep.subr.bf16.mxu0 0
    %1450 = vmatpush1.bf16.msra.mxu0 0
    %1451 = vmatprep.subr.bf16.mxu0 0
    %1452 = vmatpush1.bf16.msra.mxu0 0
    %1453 = vmatprep.subr.bf16.mxu0 0
    %1454 = vmatpush1.bf16.msra.mxu0 0
    %1455 = vmatprep.subr.bf16.mxu0 0
    %1456 = vmatpush1.bf16.msra.mxu0 0
    %1457 = vmatprep.subr.bf16.mxu0 0
    %1458 = vmatpush1.bf16.msra.mxu0 0
    %1459 = vmatprep.subr.bf16.mxu0 0
    %1460 = vmatpush1.bf16.msra.mxu0 0
    %1461 = vmatprep.subr.bf16.mxu0 0
    %1462 = vmatpush1.bf16.msra.mxu0 0
    %1463 = vmatprep.subr.bf16.mxu0 0
    %1464 = vmatpush1.bf16.msra.mxu0 0
    %1465 = vmatprep.subr.bf16.mxu0 0
    %1466 = vmatpush1.bf16.msra.mxu0 0
    %1467 = vmatprep.subr.bf16.mxu0 0
    %1468 = vmatpush1.bf16.msra.mxu0 0
    %1469 = vmatprep.mubr.bf16.mxu0 0
    %1470 = vmatmul.mubr.bf16.gmra.mrb[0].mxu0 %v391
    %v1471 = vpop.f32.mrb[0].mxu0
    %v1472 = vadd.f32 0.0, %v1471
    %v1473 = vpop.f32.mrb[0].mxu0
    %v1474 = vadd.f32 0.0, %v1473
    %v1475 = vpop.f32.mrb[0].mxu0
    %v1476 = vpop.f32.mrb[0].mxu0
    %1477 = vdwg.mxu0
    %1478 = vmatprep.subr.bf16.mxu0 0
    %1479 = vmatpush1.bf16.msra.mxu0 %v533
    %1480 = vmatprep.subr.bf16.mxu0 0
    %1481 = vmatpush1.bf16.msra.mxu0 0
    %1482 = vmatprep.subr.bf16.mxu0 0
    %1483 = vmatpush1.bf16.msra.mxu0 0
    %1484 = vmatprep.subr.bf16.mxu0 0
    %1485 = vmatpush1.bf16.msra.mxu0 0
    %1486 = vmatprep.subr.bf16.mxu0 0
    %1487 = vmatpush1.bf16.msra.mxu0 0
    %1488 = vmatprep.subr.bf16.mxu0 0
    %1489 = vmatpush1.bf16.msra.mxu0 0
    %1490 = vmatprep.subr.bf16.mxu0 0
    %1491 = vmatpush1.bf16.msra.mxu0 0
    %1492 = vmatprep.subr.bf16.mxu0 0
    %1493 = vmatpush1.bf16.msra.mxu0 0
    %1494 = vmatprep.subr.bf16.mxu0 0
    %1495 = vmatpush1.bf16.msra.mxu0 0
    %1496 = vmatprep.subr.bf16.mxu0 0
    %1497 = vmatpush1.bf16.msra.mxu0 0
    %1498 = vmatprep.subr.bf16.mxu0 0
    %1499 = vmatpush1.bf16.msra.mxu0 0
    %1500 = vmatprep.subr.bf16.mxu0 0
    %1501 = vmatpush1.bf16.msra.mxu0 0
    %1502 = vmatprep.subr.bf16.mxu0 0
    %1503 = vmatpush1.bf16.msra.mxu0 0
    %1504 = vmatprep.subr.bf16.mxu0 0
    %1505 = vmatpush1.bf16.msra.mxu0 0
    %1506 = vmatprep.subr.bf16.mxu0 0
    %1507 = vmatpush1.bf16.msra.mxu0 0
    %1508 = vmatprep.subr.bf16.mxu0 0
    %1509 = vmatpush1.bf16.msra.mxu0 0
    %1510 = vmatprep.mubr.bf16.mxu0 0
    %1511 = vmatmul.mubr.bf16.gmra.mrb[0].mxu0 %v391
    %v1512 = vpop.f32.mrb[0].mxu0
    %v1513 = vadd.f32 0.0, %v1512
    %v1514 = vpop.f32.mrb[0].mxu0
    %v1515 = vpop.f32.mrb[0].mxu0
    %v1516 = vpop.f32.mrb[0].mxu0
    %1517 = vdwg.mxu0
    %v1518 = vmax.f32 %v570, 0.0
    %v1519 = vmax.f32 %v572, 0.0
    %v1520 = vmax.f32 %v611, 0.0
    %v1521 = vmax.f32 %v613, 0.0
    %v1522 = vmax.f32 %v652, 0.0
    %v1523 = vmax.f32 %v654, 0.0
    %v1524 = vmax.f32 %v693, 0.0
    %v1525 = vmax.f32 %v695, 0.0
    %v1526 = vmax.f32 %v734, 0.0
    %v1527 = vmax.f32 %v736, 0.0
    %v1528 = vmax.f32 %v775, 0.0
    %v1529 = vmax.f32 %v777, 0.0
    %v1530 = vmax.f32 %v816, 0.0
    %v1531 = vmax.f32 %v818, 0.0
    %v1532 = vmax.f32 %v857, 0.0
    %v1533 = vmax.f32 %v859, 0.0
    %v1534 = vmax.f32 %v898, 0.0
    %v1535 = vmax.f32 %v900, 0.0
    %v1536 = vmax.f32 %v939, 0.0
    %v1537 = vmax.f32 %v941, 0.0
    %v1538 = vmax.f32 %v980, 0.0
    %v1539 = vmax.f32 %v982, 0.0
    %v1540 = vmax.f32 %v1021, 0.0
    %v1541 = vmax.f32 %v1023, 0.0
    %v1542 = vmax.f32 %v1062, 0.0
    %v1543 = vmax.f32 %v1064, 0.0
    %v1544 = vmax.f32 %v1103, 0.0
    %v1545 = vmax.f32 %v1105, 0.0
    %v1546 = vmax.f32 %v1144, 0.0
    %v1547 = vmax.f32 %v1146, 0.0
    %v1548 = vmax.f32 %v1185, 0.0
    %v1549 = vmax.f32 %v1187, 0.0
    %v1550 = vmax.f32 %v1226, 0.0
    %v1551 = vmax.f32 %v1228, 0.0
    %v1552 = vmax.f32 %v1267, 0.0
    %v1553 = vmax.f32 %v1269, 0.0
    %v1554 = vmax.f32 %v1308, 0.0
    %v1555 = vmax.f32 %v1310, 0.0
    %v1556 = vmax.f32 %v1349, 0.0
    %v1557 = vmax.f32 %v1351, 0.0
    %v1558 = vmax.f32 %v1390, 0.0
    %v1559 = vmax.f32 %v1392, 0.0
    %v1560 = vmax.f32 %v1431, 0.0
    %v1561 = vmax.f32 %v1433, 0.0
    %v1562 = vmax.f32 %v1472, 0.0
    %v1563 = vmax.f32 %v1474, 0.0
    %v1564 = vmax.f32 %v1513, 0.0
    %v1565 = vpack.c.bf16 %v1518, %v1518
    %v1566 = vpack.c.bf16 %v1519, %v1519
    %v1567 = vpack.c.bf16 %v1520, %v1520
    %v1568 = vpack.c.bf16 %v1521, %v1521
    %v1569 = vpack.c.bf16 %v1522, %v1522
    %v1570 = vpack.c.bf16 %v1523, %v1523
    %v1571 = vpack.c.bf16 %v1524, %v1524
    %v1572 = vpack.c.bf16 %v1525, %v1525
    %v1573 = vpack.c.bf16 %v1526, %v1526
    %v1574 = vpack.c.bf16 %v1527, %v1527
    %v1575 = vpack.c.bf16 %v1528, %v1528
    %v1576 = vpack.c.bf16 %v1529, %v1529
    %v1577 = vpack.c.bf16 %v1530, %v1530
    %v1578 = vpack.c.bf16 %v1531, %v1531
    %v1579 = vpack.c.bf16 %v1532, %v1532
    %v1580 = vpack.c.bf16 %v1533, %v1533
    %v1581 = vpack.c.bf16 %v1534, %v1534
    %v1582 = vpack.c.bf16 %v1535, %v1535
    %v1583 = vpack.c.bf16 %v1536, %v1536
    %v1584 = vpack.c.bf16 %v1537, %v1537
    %v1585 = vpack.c.bf16 %v1538, %v1538
    %v1586 = vpack.c.bf16 %v1539, %v1539
    %v1587 = vpack.c.bf16 %v1540, %v1540
    %v1588 = vpack.c.bf16 %v1541, %v1541
    %v1589 = vpack.c.bf16 %v1542, %v1542
    %v1590 = vpack.c.bf16 %v1543, %v1543
    %v1591 = vpack.c.bf16 %v1544, %v1544
    %v1592 = vpack.c.bf16 %v1545, %v1545
    %v1593 = vpack.c.bf16 %v1546, %v1546
    %v1594 = vpack.c.bf16 %v1547, %v1547
    %v1595 = vpack.c.bf16 %v1548, %v1548
    %v1596 = vpack.c.bf16 %v1549, %v1549
    %v1597 = vpack.c.bf16 %v1550, %v1550
    %v1598 = vpack.c.bf16 %v1551, %v1551
    %v1599 = vpack.c.bf16 %v1552, %v1552
    %v1600 = vpack.c.bf16 %v1553, %v1553
    %v1601 = vpack.c.bf16 %v1554, %v1554
    %v1602 = vpack.c.bf16 %v1555, %v1555
    %v1603 = vpack.c.bf16 %v1556, %v1556
    %v1604 = vpack.c.bf16 %v1557, %v1557
    %v1605 = vpack.c.bf16 %v1558, %v1558
    %v1606 = vpack.c.bf16 %v1559, %v1559
    %v1607 = vpack.c.bf16 %v1560, %v1560
    %v1608 = vpack.c.bf16 %v1561, %v1561
    %v1609 = vpack.c.bf16 %v1562, %v1562
    %v1610 = vpack.c.bf16 %v1563, %v1563
    %v1611 = vpack.c.bf16 %v1564, %v1564
    %v1612 = vld [vmem:[%s2] sm:$0xf]
    %v1613 = vld [vmem:[%s2 + $0x4] sm:$0xf]
    %v1614 = vld [vmem:[%s2 + $0x8] sm:$0xf]
    %v1615 = vld [vmem:[%s2 + $0xc] sm:$0xf]
    %v1616 = vld [vmem:[%s2 + $0x10] sm:$0xf]
    %v1617 = vld [vmem:[%s2 + $0x14] sm:$0xf]
    %v1618 = vld [vmem:[%s2 + $0x18] sm:$0xf]
    %v1619 = vld [vmem:[%s2 + $0x1c] sm:$0xf]
    %v1620 = vld [vmem:[%s2 + $0x20] sm:$0xf]
    %v1621 = vld [vmem:[%s2 + $0x24] sm:$0xf]
    %v1622 = vld [vmem:[%s2 + $0x28] sm:$0xf]
    %v1623 = vld [vmem:[%s2 + $0x2c] sm:$0xf]
    %v1624 = vld [vmem:[%s2 + $0x30] sm:$0xf]
    %v1625 = vld [vmem:[%s2 + $0x34] sm:$0xf]
    %v1626 = vld [vmem:[%s2 + $0x38] sm:$0xf]
    %v1627 = vld [vmem:[%s2 + $0x3c] sm:$0xf]
    %v1628 = vld [vmem:[%s2 + $0x40] sm:$0xf]
    %v1629 = vld [vmem:[%s2 + $0x44] sm:$0xf]
    %v1630 = vld [vmem:[%s2 + $0x48] sm:$0xf]
    %v1631 = vld [vmem:[%s2 + $0x4c] sm:$0xf]
    %v1632 = vld [vmem:[%s2 + $0x50] sm:$0xf]
    %v1633 = vld [vmem:[%s2 + $0x54] sm:$0xf]
    %v1634 = vld [vmem:[%s2 + $0x58] sm:$0xf]
    %v1635 = vld [vmem:[%s2 + $0x5c] sm:$0xf]
    %v1636 = vld [vmem:[%s2 + $0x60] sm:$0xf]
    %v1637 = vld [vmem:[%s2 + $0x64] sm:$0xf]
    %v1638 = vld [vmem:[%s2 + $0x68] sm:$0xf]
    %v1639 = vld [vmem:[%s2 + $0x6c] sm:$0xf]
    %v1640 = vld [vmem:[%s2 + $0x70] sm:$0xf]
    %v1641 = vld [vmem:[%s2 + $0x74] sm:$0xf]
    %v1642 = vld [vmem:[%s2 + $0x78] sm:$0xf]
    %v1643 = vld [vmem:[%s2 + $0x7c] sm:$0xf]
    %v1644 = vld [vmem:[%s2 + $0x80] sm:$0xf]
    %v1645 = vld [vmem:[%s2 + $0x84] sm:$0xf]
    %v1646 = vld [vmem:[%s2 + $0x88] sm:$0xf]
    %v1647 = vld [vmem:[%s2 + $0x8c] sm:$0xf]
    %v1648 = vld [vmem:[%s2 + $0x90] sm:$0xf]
    %v1649 = vld [vmem:[%s2 + $0x94] sm:$0xf]
    %v1650 = vld [vmem:[%s2 + $0x98] sm:$0xf]
    %v1651 = vld [vmem:[%s2 + $0x9c] sm:$0xf]
    %v1652 = vld [vmem:[%s2 + $0xa0] sm:$0xf]
    %v1653 = vld [vmem:[%s2 + $0xa4] sm:$0xf]
    %v1654 = vld [vmem:[%s2 + $0xa8] sm:$0xf]
    %v1655 = vld [vmem:[%s2 + $0xac] sm:$0xf]
    %v1656 = vld [vmem:[%s2 + $0xb0] sm:$0xf]
    %v1657 = vld [vmem:[%s2 + $0xb4] sm:$0xf]
    %v1658 = vld [vmem:[%s2 + $0xb8] sm:$0xf]
    %v1659 = vld [vmem:[%s2 + $0xbc] sm:$0xf]
    %v1660 = vld [vmem:[%s2 + $0xc0] sm:$0xf]
    %v1661 = vld [vmem:[%s2 + $0xc4] sm:$0xf]
    %v1662 = vld [vmem:[%s2 + $0xc8] sm:$0xf]
    %v1663 = vld [vmem:[%s2 + $0xcc] sm:$0xf]
    %v1664 = vld [vmem:[%s2 + $0xd0] sm:$0xf]
    %v1665 = vld [vmem:[%s2 + $0xd4] sm:$0xf]
    %v1666 = vld [vmem:[%s2 + $0xd8] sm:$0xf]
    %v1667 = vld [vmem:[%s2 + $0xdc] sm:$0xf]
    %v1668 = vld [vmem:[%s2 + $0xe0] sm:$0xf]
    %v1669 = vld [vmem:[%s2 + $0xe4] sm:$0xf]
    %v1670 = vld [vmem:[%s2 + $0xe8] sm:$0xf]
    %v1671 = vld [vmem:[%s2 + $0xec] sm:$0xf]
    %v1672 = vld [vmem:[%s2 + $0xf0] sm:$0xf]
    %v1673 = vld [vmem:[%s2 + $0xf4] sm:$0xf]
    %v1674 = vld [vmem:[%s2 + $0xf8] sm:$0xf]
    %v1675 = vld [vmem:[%s2 + $0xfc] sm:$0xf]
    %v1676 = vld [vmem:[%s2 + $0x100] sm:$0xf]
    %v1677 = vld [vmem:[%s2 + $0x104] sm:$0xf]
    %v1678 = vld [vmem:[%s2 + $0x108] sm:$0xf]
    %v1679 = vld [vmem:[%s2 + $0x10c] sm:$0xf]
    %v1680 = vld [vmem:[%s2 + $0x110] sm:$0xf]
    %v1681 = vld [vmem:[%s2 + $0x114] sm:$0xf]
    %v1682 = vld [vmem:[%s2 + $0x118] sm:$0xf]
    %v1683 = vld [vmem:[%s2 + $0x11c] sm:$0xf]
    %v1684 = vld [vmem:[%s2 + $0x120] sm:$0xf]
    %v1685 = vld [vmem:[%s2 + $0x124] sm:$0xf]
    %v1686 = vld [vmem:[%s2 + $0x128] sm:$0xf]
    %v1687 = vld [vmem:[%s2 + $0x12c] sm:$0xf]
    %v1688 = vld [vmem:[%s2 + $0x130] sm:$0xf]
    %v1689 = vld [vmem:[%s2 + $0x134] sm:$0xf]
    %v1690 = vld [vmem:[%s2 + $0x138] sm:$0xf]
    %v1691 = vld [vmem:[%s2 + $0x13c] sm:$0xf]
    %v1692 = vld [vmem:[%s2 + $0x140] sm:$0xf]
    %v1693 = vld [vmem:[%s2 + $0x144] sm:$0xf]
    %v1694 = vld [vmem:[%s2 + $0x148] sm:$0xf]
    %v1695 = vld [vmem:[%s2 + $0x14c] sm:$0xf]
    %v1696 = vld [vmem:[%s2 + $0x150] sm:$0xf]
    %v1697 = vld [vmem:[%s2 + $0x154] sm:$0xf]
    %v1698 = vld [vmem:[%s2 + $0x158] sm:$0xf]
    %v1699 = vld [vmem:[%s2 + $0x15c] sm:$0xf]
    %v1700 = vld [vmem:[%s2 + $0x160] sm:$0xf]
    %v1701 = vld [vmem:[%s2 + $0x164] sm:$0xf]
    %v1702 = vld [vmem:[%s2 + $0x168] sm:$0xf]
    %v1703 = vld [vmem:[%s2 + $0x16c] sm:$0xf]
    %v1704 = vld [vmem:[%s2 + $0x170] sm:$0xf]
    %v1705 = vld [vmem:[%s2 + $0x174] sm:$0xf]
    %v1706 = vld [vmem:[%s2 + $0x178] sm:$0xf]
    %v1707 = vld [vmem:[%s2 + $0x17c] sm:$0xf]
    %v1708 = vld [vmem:[%s2 + $0x180] sm:$0xf]
    %v1709 = vld [vmem:[%s2 + $0x184] sm:$0xf]
    %v1710 = vld [vmem:[%s2 + $0x188] sm:$0xf]
    %v1711 = vld [vmem:[%s2 + $0x18c] sm:$0xf]
    %v1712 = vld [vmem:[%s2 + $0x190] sm:$0xf]
    %v1713 = vld [vmem:[%s2 + $0x194] sm:$0xf]
    %v1714 = vld [vmem:[%s2 + $0x198] sm:$0xf]
    %v1715 = vld [vmem:[%s2 + $0x19c] sm:$0xf]
    %v1716 = vld [vmem:[%s2 + $0x1a0] sm:$0xf]
    %v1717 = vld [vmem:[%s2 + $0x1a4] sm:$0xf]
    %v1718 = vld [vmem:[%s2 + $0x1a8] sm:$0xf]
    %v1719 = vld [vmem:[%s2 + $0x1ac] sm:$0xf]
    %v1720 = vld [vmem:[%s2 + $0x1b0] sm:$0xf]
    %v1721 = vld [vmem:[%s2 + $0x1b4] sm:$0xf]
    %v1722 = vld [vmem:[%s2 + $0x1b8] sm:$0xf]
    %v1723 = vld [vmem:[%s2 + $0x1bc] sm:$0xf]
    %v1724 = vld [vmem:[%s2 + $0x1c0] sm:$0xf]
    %v1725 = vld [vmem:[%s2 + $0x1c4] sm:$0xf]
    %v1726 = vld [vmem:[%s2 + $0x1c8] sm:$0xf]
    %v1727 = vld [vmem:[%s2 + $0x1cc] sm:$0xf]
    %v1728 = vld [vmem:[%s2 + $0x1d0] sm:$0xf]
    %v1729 = vld [vmem:[%s2 + $0x1d4] sm:$0xf]
    %v1730 = vld [vmem:[%s2 + $0x1d8] sm:$0xf]
    %v1731 = vld [vmem:[%s2 + $0x1dc] sm:$0xf]
    %v1732 = vld [vmem:[%s2 + $0x1e0] sm:$0xf]
    %v1733 = vld [vmem:[%s2 + $0x1e4] sm:$0xf]
    %v1734 = vld [vmem:[%s2 + $0x1e8] sm:$0xf]
    %v1735 = vld [vmem:[%s2 + $0x1ec] sm:$0xf]
    %v1736 = vld [vmem:[%s2 + $0x1f0] sm:$0xf]
    %v1737 = vld [vmem:[%s2 + $0x1f4] sm:$0xf]
    %v1738 = vld [vmem:[%s2 + $0x1f8] sm:$0xf]
    %v1739 = vld [vmem:[%s2 + $0x1fc] sm:$0xf]
    %v1740 = vld [vmem:[%s2 + $0x200] sm:$0xf]
    %v1741 = vld [vmem:[%s2 + $0x204] sm:$0xf]
    %v1742 = vld [vmem:[%s2 + $0x208] sm:$0xf]
    %v1743 = vld [vmem:[%s2 + $0x20c] sm:$0xf]
    %v1744 = vld [vmem:[%s2 + $0x210] sm:$0xf]
    %v1745 = vld [vmem:[%s2 + $0x214] sm:$0xf]
    %v1746 = vld [vmem:[%s2 + $0x218] sm:$0xf]
    %v1747 = vld [vmem:[%s2 + $0x21c] sm:$0xf]
    %v1748 = vld [vmem:[%s2 + $0x220] sm:$0xf]
    %v1749 = vld [vmem:[%s2 + $0x224] sm:$0xf]
    %v1750 = vld [vmem:[%s2 + $0x228] sm:$0xf]
    %v1751 = vld [vmem:[%s2 + $0x22c] sm:$0xf]
    %v1752 = vld [vmem:[%s2 + $0x230] sm:$0xf]
    %v1753 = vld [vmem:[%s2 + $0x234] sm:$0xf]
    %v1754 = vld [vmem:[%s2 + $0x238] sm:$0xf]
    %v1755 = vld [vmem:[%s2 + $0x23c] sm:$0xf]
    %v1756 = vld [vmem:[%s2 + $0x240] sm:$0xf]
    %v1757 = vld [vmem:[%s2 + $0x244] sm:$0xf]
    %v1758 = vld [vmem:[%s2 + $0x248] sm:$0xf]
    %v1759 = vld [vmem:[%s2 + $0x24c] sm:$0xf]
    %v1760 = vld [vmem:[%s2 + $0x250] sm:$0xf]
    %v1761 = vld [vmem:[%s2 + $0x254] sm:$0xf]
    %v1762 = vld [vmem:[%s2 + $0x258] sm:$0xf]
    %v1763 = vld [vmem:[%s2 + $0x25c] sm:$0xf]
    %v1764 = vld [vmem:[%s2 + $0x260] sm:$0xf]
    %v1765 = vld [vmem:[%s2 + $0x264] sm:$0xf]
    %v1766 = vld [vmem:[%s2 + $0x268] sm:$0xf]
    %v1767 = vld [vmem:[%s2 + $0x26c] sm:$0xf]
    %v1768 = vld [vmem:[%s2 + $0x270] sm:$0xf]
    %v1769 = vld [vmem:[%s2 + $0x274] sm:$0xf]
    %v1770 = vld [vmem:[%s2 + $0x278] sm:$0xf]
    %v1771 = vld [vmem:[%s2 + $0x27c] sm:$0xf]
    %v1772 = vld [vmem:[%s2 + $0x280] sm:$0xf]
    %v1773 = vld [vmem:[%s2 + $0x284] sm:$0xf]
    %v1774 = vld [vmem:[%s2 + $0x288] sm:$0xf]
    %v1775 = vld [vmem:[%s2 + $0x28c] sm:$0xf]
    %v1776 = vld [vmem:[%s2 + $0x290] sm:$0xf]
    %v1777 = vld [vmem:[%s2 + $0x294] sm:$0xf]
    %v1778 = vld [vmem:[%s2 + $0x298] sm:$0xf]
    %v1779 = vld [vmem:[%s2 + $0x29c] sm:$0xf]
    %v1780 = vld [vmem:[%s2 + $0x2a0] sm:$0xf]
    %v1781 = vld [vmem:[%s2 + $0x2a4] sm:$0xf]
    %v1782 = vld [vmem:[%s2 + $0x2a8] sm:$0xf]
    %v1783 = vld [vmem:[%s2 + $0x2ac] sm:$0xf]
    %v1784 = vld [vmem:[%s2 + $0x2b0] sm:$0xf]
    %v1785 = vld [vmem:[%s2 + $0x2b4] sm:$0xf]
    %v1786 = vld [vmem:[%s2 + $0x2b8] sm:$0xf]
    %v1787 = vld [vmem:[%s2 + $0x2bc] sm:$0xf]
    %v1788 = vld [vmem:[%s2 + $0x2c0] sm:$0xf]
    %v1789 = vld [vmem:[%s2 + $0x2c4] sm:$0xf]
    %v1790 = vld [vmem:[%s2 + $0x2c8] sm:$0xf]
    %v1791 = vld [vmem:[%s2 + $0x2cc] sm:$0xf]
    %v1792 = vld [vmem:[%s2 + $0x2d0] sm:$0xf]
    %v1793 = vld [vmem:[%s2 + $0x2d4] sm:$0xf]
    %v1794 = vld [vmem:[%s2 + $0x2d8] sm:$0xf]
    %v1795 = vld [vmem:[%s2 + $0x2dc] sm:$0xf]
    %v1796 = vld [vmem:[%s2 + $0x2e0] sm:$0xf]
    %v1797 = vld [vmem:[%s2 + $0x2e4] sm:$0xf]
    %v1798 = vld [vmem:[%s2 + $0x2e8] sm:$0xf]
    %v1799 = vld [vmem:[%s2 + $0x2ec] sm:$0xf]
    %v1800 = vld [vmem:[%s2 + $0x2f0] sm:$0xf]
    %v1801 = vld [vmem:[%s2 + $0x2f4] sm:$0xf]
    %v1802 = vld [vmem:[%s2 + $0x2f8] sm:$0xf]
    %v1803 = vld [vmem:[%s2 + $0x2fc] sm:$0xf]
    %v1804 = vld [vmem:[%s2 + $0x300] sm:$0xf]
    %v1805 = vld [vmem:[%s2 + $0x304] sm:$0xf]
    %v1806 = vld [vmem:[%s2 + $0x308] sm:$0xf]
    %v1807 = vld [vmem:[%s2 + $0x30c] sm:$0xf]
    %v1808 = vld [vmem:[%s2 + $0x310] sm:$0xf]
    %v1809 = vld [vmem:[%s2 + $0x314] sm:$0xf]
    %v1810 = vld [vmem:[%s2 + $0x318] sm:$0xf]
    %v1811 = vld [vmem:[%s2 + $0x31c] sm:$0xf]
    %v1812 = vld [vmem:[%s2 + $0x320] sm:$0xf]
    %v1813 = vld [vmem:[%s2 + $0x324] sm:$0xf]
    %v1814 = vld [vmem:[%s2 + $0x328] sm:$0xf]
    %v1815 = vld [vmem:[%s2 + $0x32c] sm:$0xf]
    %v1816 = vld [vmem:[%s2 + $0x330] sm:$0xf]
    %v1817 = vld [vmem:[%s2 + $0x334] sm:$0xf]
    %v1818 = vld [vmem:[%s2 + $0x338] sm:$0xf]
    %v1819 = vld [vmem:[%s2 + $0x33c] sm:$0xf]
    %v1820 = vld [vmem:[%s2 + $0x340] sm:$0xf]
    %v1821 = vld [vmem:[%s2 + $0x344] sm:$0xf]
    %v1822 = vld [vmem:[%s2 + $0x348] sm:$0xf]
    %v1823 = vld [vmem:[%s2 + $0x34c] sm:$0xf]
    %v1824 = vld [vmem:[%s2 + $0x350] sm:$0xf]
    %v1825 = vld [vmem:[%s2 + $0x354] sm:$0xf]
    %v1826 = vld [vmem:[%s2 + $0x358] sm:$0xf]
    %v1827 = vld [vmem:[%s2 + $0x35c] sm:$0xf]
    %v1828 = vld [vmem:[%s2 + $0x360] sm:$0xf]
    %v1829 = vld [vmem:[%s2 + $0x364] sm:$0xf]
    %v1830 = vld [vmem:[%s2 + $0x368] sm:$0xf]
    %v1831 = vld [vmem:[%s2 + $0x36c] sm:$0xf]
    %v1832 = vld [vmem:[%s2 + $0x370] sm:$0xf]
    %v1833 = vld [vmem:[%s2 + $0x374] sm:$0xf]
    %v1834 = vld [vmem:[%s2 + $0x378] sm:$0xf]
    %v1835 = vld [vmem:[%s2 + $0x37c] sm:$0xf]
    %v1836 = vld [vmem:[%s2 + $0x380] sm:$0xf]
    %v1837 = vld [vmem:[%s2 + $0x384] sm:$0xf]
    %v1838 = vld [vmem:[%s2 + $0x388] sm:$0xf]
    %v1839 = vld [vmem:[%s2 + $0x38c] sm:$0xf]
    %v1840 = vld [vmem:[%s2 + $0x390] sm:$0xf]
    %v1841 = vld [vmem:[%s2 + $0x394] sm:$0xf]
    %v1842 = vld [vmem:[%s2 + $0x398] sm:$0xf]
    %v1843 = vld [vmem:[%s2 + $0x39c] sm:$0xf]
    %v1844 = vld [vmem:[%s2 + $0x3a0] sm:$0xf]
    %v1845 = vld [vmem:[%s2 + $0x3a4] sm:$0xf]
    %v1846 = vld [vmem:[%s2 + $0x3a8] sm:$0xf]
    %v1847 = vld [vmem:[%s2 + $0x3ac] sm:$0xf]
    %v1848 = vld [vmem:[%s2 + $0x3b0] sm:$0xf]
    %v1849 = vld [vmem:[%s2 + $0x3b4] sm:$0xf]
    %v1850 = vld [vmem:[%s2 + $0x3b8] sm:$0xf]
    %v1851 = vld [vmem:[%s2 + $0x3bc] sm:$0xf]
    %v1852 = vld [vmem:[%s2 + $0x3c0] sm:$0xf]
    %v1853 = vld [vmem:[%s2 + $0x3c4] sm:$0xf]
    %v1854 = vld [vmem:[%s2 + $0x3c8] sm:$0xf]
    %v1855 = vld [vmem:[%s2 + $0x3cc] sm:$0xf]
    %v1856 = vld [vmem:[%s2 + $0x3d0] sm:$0xf]
    %v1857 = vld [vmem:[%s2 + $0x3d4] sm:$0xf]
    %v1858 = vld [vmem:[%s2 + $0x3d8] sm:$0xf]
    %v1859 = vld [vmem:[%s2 + $0x3dc] sm:$0xf]
    %v1860 = vld [vmem:[%s2 + $0x3e0] sm:$0xf]
    %v1861 = vld [vmem:[%s2 + $0x3e4] sm:$0xf]
    %v1862 = vld [vmem:[%s2 + $0x3e8] sm:$0xf]
    %v1863 = vld [vmem:[%s2 + $0x3ec] sm:$0xf]
    %v1864 = vld [vmem:[%s2 + $0x3f0] sm:$0xf]
    %v1865 = vld [vmem:[%s2 + $0x3f4] sm:$0xf]
    %v1866 = vld [vmem:[%s2 + $0x3f8] sm:$0xf]
    %v1867 = vld [vmem:[%s2 + $0x3fc] sm:$0xf]
    %v1868 = vld [vmem:[%s2 + $0x400] sm:$0xf]
    %v1869 = vld [vmem:[%s2 + $0x404] sm:$0xf]
    %v1870 = vld [vmem:[%s2 + $0x408] sm:$0xf]
    %v1871 = vld [vmem:[%s2 + $0x40c] sm:$0xf]
    %v1872 = vld [vmem:[%s2 + $0x410] sm:$0xf]
    %v1873 = vld [vmem:[%s2 + $0x414] sm:$0xf]
    %v1874 = vld [vmem:[%s2 + $0x418] sm:$0xf]
    %v1875 = vld [vmem:[%s2 + $0x41c] sm:$0xf]
    %v1876 = vld [vmem:[%s2 + $0x420] sm:$0xf]
    %v1877 = vld [vmem:[%s2 + $0x424] sm:$0xf]
    %v1878 = vld [vmem:[%s2 + $0x428] sm:$0xf]
    %v1879 = vld [vmem:[%s2 + $0x42c] sm:$0xf]
    %v1880 = vld [vmem:[%s2 + $0x430] sm:$0xf]
    %v1881 = vld [vmem:[%s2 + $0x434] sm:$0xf]
    %v1882 = vld [vmem:[%s2 + $0x438] sm:$0xf]
    %v1883 = vld [vmem:[%s2 + $0x43c] sm:$0xf]
    %v1884 = vld [vmem:[%s2 + $0x440] sm:$0xf]
    %v1885 = vld [vmem:[%s2 + $0x444] sm:$0xf]
    %v1886 = vld [vmem:[%s2 + $0x448] sm:$0xf]
    %v1887 = vld [vmem:[%s2 + $0x44c] sm:$0xf]
    %v1888 = vld [vmem:[%s2 + $0x450] sm:$0xf]
    %v1889 = vld [vmem:[%s2 + $0x454] sm:$0xf]
    %v1890 = vld [vmem:[%s2 + $0x458] sm:$0xf]
    %v1891 = vld [vmem:[%s2 + $0x45c] sm:$0xf]
    %v1892 = vld [vmem:[%s2 + $0x460] sm:$0xf]
    %v1893 = vld [vmem:[%s2 + $0x464] sm:$0xf]
    %v1894 = vld [vmem:[%s2 + $0x468] sm:$0xf]
    %v1895 = vld [vmem:[%s2 + $0x46c] sm:$0xf]
    %v1896 = vld [vmem:[%s2 + $0x470] sm:$0xf]
    %v1897 = vld [vmem:[%s2 + $0x474] sm:$0xf]
    %v1898 = vld [vmem:[%s2 + $0x478] sm:$0xf]
    %v1899 = vld [vmem:[%s2 + $0x47c] sm:$0xf]
    %v1900 = vld [vmem:[%s2 + $0x480] sm:$0xf]
    %v1901 = vld [vmem:[%s2 + $0x484] sm:$0xf]
    %v1902 = vld [vmem:[%s2 + $0x488] sm:$0xf]
    %v1903 = vld [vmem:[%s2 + $0x48c] sm:$0xf]
    %v1904 = vld [vmem:[%s2 + $0x490] sm:$0xf]
    %v1905 = vld [vmem:[%s2 + $0x494] sm:$0xf]
    %v1906 = vld [vmem:[%s2 + $0x498] sm:$0xf]
    %v1907 = vld [vmem:[%s2 + $0x49c] sm:$0xf]
    %v1908 = vld [vmem:[%s2 + $0x4a0] sm:$0xf]
    %v1909 = vld [vmem:[%s2 + $0x4a4] sm:$0xf]
    %v1910 = vld [vmem:[%s2 + $0x4a8] sm:$0xf]
    %v1911 = vld [vmem:[%s2 + $0x4ac] sm:$0xf]
    %v1912 = vld [vmem:[%s2 + $0x4b0] sm:$0xf]
    %v1913 = vld [vmem:[%s2 + $0x4b4] sm:$0xf]
    %v1914 = vld [vmem:[%s2 + $0x4b8] sm:$0xf]
    %v1915 = vld [vmem:[%s2 + $0x4bc] sm:$0xf]
    %v1916 = vld [vmem:[%s2 + $0x4c0] sm:$0xf]
    %v1917 = vld [vmem:[%s2 + $0x4c4] sm:$0xf]
    %v1918 = vld [vmem:[%s2 + $0x4c8] sm:$0xf]
    %v1919 = vld [vmem:[%s2 + $0x4cc] sm:$0xf]
    %v1920 = vld [vmem:[%s2 + $0x4d0] sm:$0xf]
    %v1921 = vld [vmem:[%s2 + $0x4d4] sm:$0xf]
    %v1922 = vld [vmem:[%s2 + $0x4d8] sm:$0xf]
    %v1923 = vld [vmem:[%s2 + $0x4dc] sm:$0xf]
    %v1924 = vld [vmem:[%s2 + $0x4e0] sm:$0xf]
    %v1925 = vld [vmem:[%s2 + $0x4e4] sm:$0xf]
    %v1926 = vld [vmem:[%s2 + $0x4e8] sm:$0xf]
    %v1927 = vld [vmem:[%s2 + $0x4ec] sm:$0xf]
    %v1928 = vld [vmem:[%s2 + $0x4f0] sm:$0xf]
    %v1929 = vld [vmem:[%s2 + $0x4f4] sm:$0xf]
    %v1930 = vld [vmem:[%s2 + $0x4f8] sm:$0xf]
    %v1931 = vld [vmem:[%s2 + $0x4fc] sm:$0xf]
    %v1932 = vld [vmem:[%s2 + $0x500] sm:$0xf]
    %v1933 = vld [vmem:[%s2 + $0x504] sm:$0xf]
    %v1934 = vld [vmem:[%s2 + $0x508] sm:$0xf]
    %v1935 = vld [vmem:[%s2 + $0x50c] sm:$0xf]
    %v1936 = vld [vmem:[%s2 + $0x510] sm:$0xf]
    %v1937 = vld [vmem:[%s2 + $0x514] sm:$0xf]
    %v1938 = vld [vmem:[%s2 + $0x518] sm:$0xf]
    %v1939 = vld [vmem:[%s2 + $0x51c] sm:$0xf]
    %v1940 = vld [vmem:[%s2 + $0x520] sm:$0xf]
    %v1941 = vld [vmem:[%s2 + $0x524] sm:$0xf]
    %v1942 = vld [vmem:[%s2 + $0x528] sm:$0xf]
    %v1943 = vld [vmem:[%s2 + $0x52c] sm:$0xf]
    %v1944 = vld [vmem:[%s2 + $0x530] sm:$0xf]
    %v1945 = vld [vmem:[%s2 + $0x534] sm:$0xf]
    %v1946 = vld [vmem:[%s2 + $0x538] sm:$0xf]
    %v1947 = vld [vmem:[%s2 + $0x53c] sm:$0xf]
    %v1948 = vld [vmem:[%s2 + $0x540] sm:$0xf]
    %v1949 = vld [vmem:[%s2 + $0x544] sm:$0xf]
    %v1950 = vld [vmem:[%s2 + $0x548] sm:$0xf]
    %v1951 = vld [vmem:[%s2 + $0x54c] sm:$0xf]
    %v1952 = vld [vmem:[%s2 + $0x550] sm:$0xf]
    %v1953 = vld [vmem:[%s2 + $0x554] sm:$0xf]
    %v1954 = vld [vmem:[%s2 + $0x558] sm:$0xf]
    %v1955 = vld [vmem:[%s2 + $0x55c] sm:$0xf]
    %v1956 = vld [vmem:[%s2 + $0x560] sm:$0xf]
    %v1957 = vld [vmem:[%s2 + $0x564] sm:$0xf]
    %v1958 = vld [vmem:[%s2 + $0x568] sm:$0xf]
    %v1959 = vld [vmem:[%s2 + $0x56c] sm:$0xf]
    %v1960 = vld [vmem:[%s2 + $0x570] sm:$0xf]
    %v1961 = vld [vmem:[%s2 + $0x574] sm:$0xf]
    %v1962 = vld [vmem:[%s2 + $0x578] sm:$0xf]
    %v1963 = vld [vmem:[%s2 + $0x57c] sm:$0xf]
    %v1964 = vld [vmem:[%s2 + $0x580] sm:$0xf]
    %v1965 = vld [vmem:[%s2 + $0x584] sm:$0xf]
    %v1966 = vld [vmem:[%s2 + $0x588] sm:$0xf]
    %v1967 = vld [vmem:[%s2 + $0x58c] sm:$0xf]
    %v1968 = vld [vmem:[%s2 + $0x590] sm:$0xf]
    %v1969 = vld [vmem:[%s2 + $0x594] sm:$0xf]
    %v1970 = vld [vmem:[%s2 + $0x598] sm:$0xf]
    %v1971 = vld [vmem:[%s2 + $0x59c] sm:$0xf]
    %v1972 = vld [vmem:[%s2 + $0x5a0] sm:$0xf]
    %v1973 = vld [vmem:[%s2 + $0x5a4] sm:$0xf]
    %v1974 = vld [vmem:[%s2 + $0x5a8] sm:$0xf]
    %v1975 = vld [vmem:[%s2 + $0x5ac] sm:$0xf]
    %v1976 = vld [vmem:[%s2 + $0x5b0] sm:$0xf]
    %v1977 = vld [vmem:[%s2 + $0x5b4] sm:$0xf]
    %v1978 = vld [vmem:[%s2 + $0x5b8] sm:$0xf]
    %v1979 = vld [vmem:[%s2 + $0x5bc] sm:$0xf]
    %v1980 = vld [vmem:[%s2 + $0x5c0] sm:$0xf]
    %v1981 = vld [vmem:[%s2 + $0x5c4] sm:$0xf]
    %v1982 = vld [vmem:[%s2 + $0x5c8] sm:$0xf]
    %v1983 = vld [vmem:[%s2 + $0x5cc] sm:$0xf]
    %v1984 = vld [vmem:[%s2 + $0x5d0] sm:$0xf]
    %v1985 = vld [vmem:[%s2 + $0x5d4] sm:$0xf]
    %v1986 = vld [vmem:[%s2 + $0x5d8] sm:$0xf]
    %v1987 = vld [vmem:[%s2 + $0x5dc] sm:$0xf]
    %v1988 = vld [vmem:[%s2 + $0x5e0] sm:$0xf]
    %v1989 = vld [vmem:[%s2 + $0x5e4] sm:$0xf]
    %v1990 = vld [vmem:[%s2 + $0x5e8] sm:$0xf]
    %v1991 = vld [vmem:[%s2 + $0x5ec] sm:$0xf]
    %v1992 = vld [vmem:[%s2 + $0x5f0] sm:$0xf]
    %v1993 = vld [vmem:[%s2 + $0x5f4] sm:$0xf]
    %v1994 = vld [vmem:[%s2 + $0x5f8] sm:$0xf]
    %v1995 = vld [vmem:[%s2 + $0x5fc] sm:$0xf]
    %v1996 = vld [vmem:[%s2 + $0x600] sm:$0xf]
    %v1997 = vld [vmem:[%s2 + $0x604] sm:$0xf]
    %v1998 = vld [vmem:[%s2 + $0x608] sm:$0xf]
    %v1999 = vld [vmem:[%s2 + $0x60c] sm:$0xf]
    %v2000 = vld [vmem:[%s2 + $0x610] sm:$0xf]
    %v2001 = vld [vmem:[%s2 + $0x614] sm:$0xf]
    %v2002 = vld [vmem:[%s2 + $0x618] sm:$0xf]
    %v2003 = vld [vmem:[%s2 + $0x61c] sm:$0xf]
    %v2004 = vld [vmem:[%s2 + $0x620] sm:$0xf]
    %v2005 = vld [vmem:[%s2 + $0x624] sm:$0xf]
    %v2006 = vld [vmem:[%s2 + $0x628] sm:$0xf]
    %v2007 = vld [vmem:[%s2 + $0x62c] sm:$0xf]
    %v2008 = vld [vmem:[%s2 + $0x630] sm:$0xf]
    %v2009 = vld [vmem:[%s2 + $0x634] sm:$0xf]
    %v2010 = vld [vmem:[%s2 + $0x638] sm:$0xf]
    %v2011 = vld [vmem:[%s2 + $0x63c] sm:$0xf]
    %v2012 = vld [vmem:[%s2 + $0x640] sm:$0xf]
    %v2013 = vld [vmem:[%s2 + $0x644] sm:$0xf]
    %v2014 = vld [vmem:[%s2 + $0x648] sm:$0xf]
    %v2015 = vld [vmem:[%s2 + $0x64c] sm:$0xf]
    %v2016 = vld [vmem:[%s2 + $0x650] sm:$0xf]
    %v2017 = vld [vmem:[%s2 + $0x654] sm:$0xf]
    %v2018 = vld [vmem:[%s2 + $0x658] sm:$0xf]
    %v2019 = vld [vmem:[%s2 + $0x65c] sm:$0xf]
    %v2020 = vld [vmem:[%s2 + $0x660] sm:$0xf]
    %v2021 = vld [vmem:[%s2 + $0x664] sm:$0xf]
    %v2022 = vld [vmem:[%s2 + $0x668] sm:$0xf]
    %v2023 = vld [vmem:[%s2 + $0x66c] sm:$0xf]
    %v2024 = vld [vmem:[%s2 + $0x670] sm:$0xf]
    %v2025 = vld [vmem:[%s2 + $0x674] sm:$0xf]
    %v2026 = vld [vmem:[%s2 + $0x678] sm:$0xf]
    %v2027 = vld [vmem:[%s2 + $0x67c] sm:$0xf]
    %v2028 = vld [vmem:[%s2 + $0x680] sm:$0xf]
    %v2029 = vld [vmem:[%s2 + $0x684] sm:$0xf]
    %v2030 = vld [vmem:[%s2 + $0x688] sm:$0xf]
    %v2031 = vld [vmem:[%s2 + $0x68c] sm:$0xf]
    %v2032 = vld [vmem:[%s2 + $0x690] sm:$0xf]
    %v2033 = vld [vmem:[%s2 + $0x694] sm:$0xf]
    %v2034 = vld [vmem:[%s2 + $0x698] sm:$0xf]
    %v2035 = vld [vmem:[%s2 + $0x69c] sm:$0xf]
    %v2036 = vld [vmem:[%s2 + $0x6a0] sm:$0xf]
    %v2037 = vld [vmem:[%s2 + $0x6a4] sm:$0xf]
    %v2038 = vld [vmem:[%s2 + $0x6a8] sm:$0xf]
    %v2039 = vld [vmem:[%s2 + $0x6ac] sm:$0xf]
    %v2040 = vld [vmem:[%s2 + $0x6b0] sm:$0xf]
    %v2041 = vld [vmem:[%s2 + $0x6b4] sm:$0xf]
    %v2042 = vld [vmem:[%s2 + $0x6b8] sm:$0xf]
    %v2043 = vld [vmem:[%s2 + $0x6bc] sm:$0xf]
    %v2044 = vld [vmem:[%s2 + $0x6c0] sm:$0xf]
    %v2045 = vld [vmem:[%s2 + $0x6c4] sm:$0xf]
    %v2046 = vld [vmem:[%s2 + $0x6c8] sm:$0xf]
    %v2047 = vld [vmem:[%s2 + $0x6cc] sm:$0xf]
    %v2048 = vld [vmem:[%s2 + $0x6d0] sm:$0xf]
    %v2049 = vld [vmem:[%s2 + $0x6d4] sm:$0xf]
    %v2050 = vld [vmem:[%s2 + $0x6d8] sm:$0xf]
    %v2051 = vld [vmem:[%s2 + $0x6dc] sm:$0xf]
    %v2052 = vld [vmem:[%s2 + $0x6e0] sm:$0xf]
    %v2053 = vld [vmem:[%s2 + $0x6e4] sm:$0xf]
    %v2054 = vld [vmem:[%s2 + $0x6e8] sm:$0xf]
    %v2055 = vld [vmem:[%s2 + $0x6ec] sm:$0xf]
    %v2056 = vld [vmem:[%s2 + $0x6f0] sm:$0xf]
    %v2057 = vld [vmem:[%s2 + $0x6f4] sm:$0xf]
    %v2058 = vld [vmem:[%s2 + $0x6f8] sm:$0xf]
    %v2059 = vld [vmem:[%s2 + $0x6fc] sm:$0xf]
    %v2060 = vld [vmem:[%s2 + $0x700] sm:$0xf]
    %v2061 = vld [vmem:[%s2 + $0x704] sm:$0xf]
    %v2062 = vld [vmem:[%s2 + $0x708] sm:$0xf]
    %v2063 = vld [vmem:[%s2 + $0x70c] sm:$0xf]
    %v2064 = vld [vmem:[%s2 + $0x710] sm:$0xf]
    %v2065 = vld [vmem:[%s2 + $0x714] sm:$0xf]
    %v2066 = vld [vmem:[%s2 + $0x718] sm:$0xf]
    %v2067 = vld [vmem:[%s2 + $0x71c] sm:$0xf]
    %v2068 = vld [vmem:[%s2 + $0x720] sm:$0xf]
    %v2069 = vld [vmem:[%s2 + $0x724] sm:$0xf]
    %v2070 = vld [vmem:[%s2 + $0x728] sm:$0xf]
    %v2071 = vld [vmem:[%s2 + $0x72c] sm:$0xf]
    %v2072 = vld [vmem:[%s2 + $0x730] sm:$0xf]
    %v2073 = vld [vmem:[%s2 + $0x734] sm:$0xf]
    %v2074 = vld [vmem:[%s2 + $0x738] sm:$0xf]
    %v2075 = vld [vmem:[%s2 + $0x73c] sm:$0xf]
    %v2076 = vld [vmem:[%s2 + $0x740] sm:$0xf]
    %v2077 = vld [vmem:[%s2 + $0x744] sm:$0xf]
    %v2078 = vld [vmem:[%s2 + $0x748] sm:$0xf]
    %v2079 = vld [vmem:[%s2 + $0x74c] sm:$0xf]
    %v2080 = vld [vmem:[%s2 + $0x750] sm:$0xf]
    %v2081 = vld [vmem:[%s2 + $0x754] sm:$0xf]
    %v2082 = vld [vmem:[%s2 + $0x758] sm:$0xf]
    %v2083 = vld [vmem:[%s2 + $0x75c] sm:$0xf]
    %v2084 = vld [vmem:[%s2 + $0x760] sm:$0xf]
    %v2085 = vld [vmem:[%s2 + $0x764] sm:$0xf]
    %v2086 = vld [vmem:[%s2 + $0x768] sm:$0xf]
    %v2087 = vld [vmem:[%s2 + $0x76c] sm:$0xf]
    %v2088 = vld [vmem:[%s2 + $0x770] sm:$0xf]
    %v2089 = vld [vmem:[%s2 + $0x774] sm:$0xf]
    %v2090 = vld [vmem:[%s2 + $0x778] sm:$0xf]
    %v2091 = vld [vmem:[%s2 + $0x77c] sm:$0xf]
    %v2092 = vld [vmem:[%s2 + $0x780] sm:$0xf]
    %v2093 = vld [vmem:[%s2 + $0x784] sm:$0xf]
    %v2094 = vld [vmem:[%s2 + $0x788] sm:$0xf]
    %v2095 = vld [vmem:[%s2 + $0x78c] sm:$0xf]
    %v2096 = vld [vmem:[%s2 + $0x790] sm:$0xf]
    %v2097 = vld [vmem:[%s2 + $0x794] sm:$0xf]
    %v2098 = vld [vmem:[%s2 + $0x798] sm:$0xf]
    %v2099 = vld [vmem:[%s2 + $0x79c] sm:$0xf]
    %v2100 = vld [vmem:[%s2 + $0x7a0] sm:$0xf]
    %v2101 = vld [vmem:[%s2 + $0x7a4] sm:$0xf]
    %v2102 = vld [vmem:[%s2 + $0x7a8] sm:$0xf]
    %v2103 = vld [vmem:[%s2 + $0x7ac] sm:$0xf]
    %v2104 = vld [vmem:[%s2 + $0x7b0] sm:$0xf]
    %v2105 = vld [vmem:[%s2 + $0x7b4] sm:$0xf]
    %v2106 = vld [vmem:[%s2 + $0x7b8] sm:$0xf]
    %v2107 = vld [vmem:[%s2 + $0x7bc] sm:$0xf]
    %v2108 = vld [vmem:[%s2 + $0x7c0] sm:$0xf]
    %v2109 = vld [vmem:[%s2 + $0x7c4] sm:$0xf]
    %v2110 = vld [vmem:[%s2 + $0x7c8] sm:$0xf]
    %v2111 = vld [vmem:[%s2 + $0x7cc] sm:$0xf]
    %v2112 = vld [vmem:[%s2 + $0x7d0] sm:$0xf]
    %v2113 = vld [vmem:[%s2 + $0x7d4] sm:$0xf]
    %v2114 = vld [vmem:[%s2 + $0x7d8] sm:$0xf]
    %v2115 = vld [vmem:[%s2 + $0x7dc] sm:$0xf]
    %v2116 = vld [vmem:[%s2 + $0x7e0] sm:$0xf]
    %v2117 = vld [vmem:[%s2 + $0x7e4] sm:$0xf]
    %v2118 = vld [vmem:[%s2 + $0x7e8] sm:$0xf]
    %v2119 = vld [vmem:[%s2 + $0x7ec] sm:$0xf]
    %v2120 = vld [vmem:[%s2 + $0x7f0] sm:$0xf]
    %v2121 = vld [vmem:[%s2 + $0x7f4] sm:$0xf]
    %v2122 = vld [vmem:[%s2 + $0x7f8] sm:$0xf]
    %v2123 = vld [vmem:[%s2 + $0x7fc] sm:$0xf]
    %v2124 = vld [vmem:[%s2 + $0x800] sm:$0xf]
    %v2125 = vld [vmem:[%s2 + $0x804] sm:$0xf]
    %v2126 = vld [vmem:[%s2 + $0x808] sm:$0xf]
    %v2127 = vld [vmem:[%s2 + $0x80c] sm:$0xf]
    %v2128 = vld [vmem:[%s2 + $0x810] sm:$0xf]
    %v2129 = vld [vmem:[%s2 + $0x814] sm:$0xf]
    %v2130 = vld [vmem:[%s2 + $0x818] sm:$0xf]
    %v2131 = vld [vmem:[%s2 + $0x81c] sm:$0xf]
    %v2132 = vld [vmem:[%s2 + $0x820] sm:$0xf]
    %v2133 = vld [vmem:[%s2 + $0x824] sm:$0xf]
    %v2134 = vld [vmem:[%s2 + $0x828] sm:$0xf]
    %v2135 = vld [vmem:[%s2 + $0x82c] sm:$0xf]
    %v2136 = vld [vmem:[%s2 + $0x830] sm:$0xf]
    %v2137 = vld [vmem:[%s2 + $0x834] sm:$0xf]
    %v2138 = vld [vmem:[%s2 + $0x838] sm:$0xf]
    %v2139 = vld [vmem:[%s2 + $0x83c] sm:$0xf]
    %v2140 = vld [vmem:[%s2 + $0x840] sm:$0xf]
    %v2141 = vld [vmem:[%s2 + $0x844] sm:$0xf]
    %v2142 = vld [vmem:[%s2 + $0x848] sm:$0xf]
    %v2143 = vld [vmem:[%s2 + $0x84c] sm:$0xf]
    %v2144 = vld [vmem:[%s2 + $0x850] sm:$0xf]
    %v2145 = vld [vmem:[%s2 + $0x854] sm:$0xf]
    %v2146 = vld [vmem:[%s2 + $0x858] sm:$0xf]
    %v2147 = vld [vmem:[%s2 + $0x85c] sm:$0xf]
    %v2148 = vld [vmem:[%s2 + $0x860] sm:$0xf]
    %v2149 = vld [vmem:[%s2 + $0x864] sm:$0xf]
    %v2150 = vld [vmem:[%s2 + $0x868] sm:$0xf]
    %v2151 = vld [vmem:[%s2 + $0x86c] sm:$0xf]
    %v2152 = vld [vmem:[%s2 + $0x870] sm:$0xf]
    %v2153 = vld [vmem:[%s2 + $0x874] sm:$0xf]
    %v2154 = vld [vmem:[%s2 + $0x878] sm:$0xf]
    %v2155 = vld [vmem:[%s2 + $0x87c] sm:$0xf]
    %v2156 = vld [vmem:[%s2 + $0x880] sm:$0xf]
    %v2157 = vld [vmem:[%s2 + $0x884] sm:$0xf]
    %v2158 = vld [vmem:[%s2 + $0x888] sm:$0xf]
    %v2159 = vld [vmem:[%s2 + $0x88c] sm:$0xf]
    %v2160 = vld [vmem:[%s2 + $0x890] sm:$0xf]
    %v2161 = vld [vmem:[%s2 + $0x894] sm:$0xf]
    %v2162 = vld [vmem:[%s2 + $0x898] sm:$0xf]
    %v2163 = vld [vmem:[%s2 + $0x89c] sm:$0xf]
    %v2164 = vld [vmem:[%s2 + $0x8a0] sm:$0xf]
    %v2165 = vld [vmem:[%s2 + $0x8a4] sm:$0xf]
    %v2166 = vld [vmem:[%s2 + $0x8a8] sm:$0xf]
    %v2167 = vld [vmem:[%s2 + $0x8ac] sm:$0xf]
    %v2168 = vld [vmem:[%s2 + $0x8b0] sm:$0xf]
    %v2169 = vld [vmem:[%s2 + $0x8b4] sm:$0xf]
    %v2170 = vld [vmem:[%s2 + $0x8b8] sm:$0xf]
    %v2171 = vld [vmem:[%s2 + $0x8bc] sm:$0xf]
    %v2172 = vld [vmem:[%s2 + $0x8c0] sm:$0xf]
    %v2173 = vld [vmem:[%s2 + $0x8c4] sm:$0xf]
    %v2174 = vld [vmem:[%s2 + $0x8c8] sm:$0xf]
    %v2175 = vld [vmem:[%s2 + $0x8cc] sm:$0xf]
    %v2176 = vld [vmem:[%s2 + $0x8d0] sm:$0xf]
    %v2177 = vld [vmem:[%s2 + $0x8d4] sm:$0xf]
    %v2178 = vld [vmem:[%s2 + $0x8d8] sm:$0xf]
    %v2179 = vld [vmem:[%s2 + $0x8dc] sm:$0xf]
    %v2180 = vld [vmem:[%s2 + $0x8e0] sm:$0xf]
    %v2181 = vld [vmem:[%s2 + $0x8e4] sm:$0xf]
    %v2182 = vld [vmem:[%s2 + $0x8e8] sm:$0xf]
    %v2183 = vld [vmem:[%s2 + $0x8ec] sm:$0xf]
    %v2184 = vld [vmem:[%s2 + $0x8f0] sm:$0xf]
    %v2185 = vld [vmem:[%s2 + $0x8f4] sm:$0xf]
    %v2186 = vld [vmem:[%s2 + $0x8f8] sm:$0xf]
    %v2187 = vld [vmem:[%s2 + $0x8fc] sm:$0xf]
    %v2188 = vld [vmem:[%s2 + $0x900] sm:$0xf]
    %v2189 = vld [vmem:[%s2 + $0x904] sm:$0xf]
    %v2190 = vld [vmem:[%s2 + $0x908] sm:$0xf]
    %v2191 = vld [vmem:[%s2 + $0x90c] sm:$0xf]
    %v2192 = vld [vmem:[%s2 + $0x910] sm:$0xf]
    %v2193 = vld [vmem:[%s2 + $0x914] sm:$0xf]
    %v2194 = vld [vmem:[%s2 + $0x918] sm:$0xf]
    %v2195 = vld [vmem:[%s2 + $0x91c] sm:$0xf]
    %v2196 = vld [vmem:[%s2 + $0x920] sm:$0xf]
    %v2197 = vld [vmem:[%s2 + $0x924] sm:$0xf]
    %v2198 = vld [vmem:[%s2 + $0x928] sm:$0xf]
    %v2199 = vld [vmem:[%s2 + $0x92c] sm:$0xf]
    %v2200 = vld [vmem:[%s2 + $0x930] sm:$0xf]
    %v2201 = vld [vmem:[%s2 + $0x934] sm:$0xf]
    %v2202 = vld [vmem:[%s2 + $0x938] sm:$0xf]
    %v2203 = vld [vmem:[%s2 + $0x93c] sm:$0xf]
    %v2204 = vld [vmem:[%s2 + $0x940] sm:$0xf]
    %v2205 = vld [vmem:[%s2 + $0x944] sm:$0xf]
    %v2206 = vld [vmem:[%s2 + $0x948] sm:$0xf]
    %v2207 = vld [vmem:[%s2 + $0x94c] sm:$0xf]
    %v2208 = vld [vmem:[%s2 + $0x950] sm:$0xf]
    %v2209 = vld [vmem:[%s2 + $0x954] sm:$0xf]
    %v2210 = vld [vmem:[%s2 + $0x958] sm:$0xf]
    %v2211 = vld [vmem:[%s2 + $0x95c] sm:$0xf]
    %v2212 = vld [vmem:[%s2 + $0x960] sm:$0xf]
    %v2213 = vld [vmem:[%s2 + $0x964] sm:$0xf]
    %v2214 = vld [vmem:[%s2 + $0x968] sm:$0xf]
    %v2215 = vld [vmem:[%s2 + $0x96c] sm:$0xf]
    %v2216 = vld [vmem:[%s2 + $0x970] sm:$0xf]
    %v2217 = vld [vmem:[%s2 + $0x974] sm:$0xf]
    %v2218 = vld [vmem:[%s2 + $0x978] sm:$0xf]
    %v2219 = vld [vmem:[%s2 + $0x97c] sm:$0xf]
    %v2220 = vld [vmem:[%s2 + $0x980] sm:$0xf]
    %v2221 = vld [vmem:[%s2 + $0x984] sm:$0xf]
    %v2222 = vld [vmem:[%s2 + $0x988] sm:$0xf]
    %v2223 = vld [vmem:[%s2 + $0x98c] sm:$0xf]
    %v2224 = vld [vmem:[%s2 + $0x990] sm:$0xf]
    %v2225 = vld [vmem:[%s2 + $0x994] sm:$0xf]
    %v2226 = vld [vmem:[%s2 + $0x998] sm:$0xf]
    %v2227 = vld [vmem:[%s2 + $0x99c] sm:$0xf]
    %v2228 = vld [vmem:[%s2 + $0x9a0] sm:$0xf]
    %v2229 = vld [vmem:[%s2 + $0x9a4] sm:$0xf]
    %v2230 = vld [vmem:[%s2 + $0x9a8] sm:$0xf]
    %v2231 = vld [vmem:[%s2 + $0x9ac] sm:$0xf]
    %v2232 = vld [vmem:[%s2 + $0x9b0] sm:$0xf]
    %v2233 = vld [vmem:[%s2 + $0x9b4] sm:$0xf]
    %v2234 = vld [vmem:[%s2 + $0x9b8] sm:$0xf]
    %v2235 = vld [vmem:[%s2 + $0x9bc] sm:$0xf]
    %v2236 = vld [vmem:[%s2 + $0x9c0] sm:$0xf]
    %v2237 = vld [vmem:[%s2 + $0x9c4] sm:$0xf]
    %v2238 = vld [vmem:[%s2 + $0x9c8] sm:$0xf]
    %v2239 = vld [vmem:[%s2 + $0x9cc] sm:$0xf]
    %v2240 = vld [vmem:[%s2 + $0x9d0] sm:$0xf]
    %v2241 = vld [vmem:[%s2 + $0x9d4] sm:$0xf]
    %v2242 = vld [vmem:[%s2 + $0x9d8] sm:$0xf]
    %v2243 = vld [vmem:[%s2 + $0x9dc] sm:$0xf]
    %v2244 = vld [vmem:[%s2 + $0x9e0] sm:$0xf]
    %v2245 = vld [vmem:[%s2 + $0x9e4] sm:$0xf]
    %v2246 = vld [vmem:[%s2 + $0x9e8] sm:$0xf]
    %v2247 = vld [vmem:[%s2 + $0x9ec] sm:$0xf]
    %v2248 = vld [vmem:[%s2 + $0x9f0] sm:$0xf]
    %v2249 = vld [vmem:[%s2 + $0x9f4] sm:$0xf]
    %v2250 = vld [vmem:[%s2 + $0x9f8] sm:$0xf]
    %v2251 = vld [vmem:[%s2 + $0x9fc] sm:$0xf]
    %v2252 = vld [vmem:[%s2 + $0xa00] sm:$0xf]
    %v2253 = vld [vmem:[%s2 + $0xa04] sm:$0xf]
    %v2254 = vld [vmem:[%s2 + $0xa08] sm:$0xf]
    %v2255 = vld [vmem:[%s2 + $0xa0c] sm:$0xf]
    %v2256 = vld [vmem:[%s2 + $0xa10] sm:$0xf]
    %v2257 = vld [vmem:[%s2 + $0xa14] sm:$0xf]
    %v2258 = vld [vmem:[%s2 + $0xa18] sm:$0xf]
    %v2259 = vld [vmem:[%s2 + $0xa1c] sm:$0xf]
    %v2260 = vld [vmem:[%s2 + $0xa20] sm:$0xf]
    %v2261 = vld [vmem:[%s2 + $0xa24] sm:$0xf]
    %v2262 = vld [vmem:[%s2 + $0xa28] sm:$0xf]
    %v2263 = vld [vmem:[%s2 + $0xa2c] sm:$0xf]
    %v2264 = vld [vmem:[%s2 + $0xa30] sm:$0xf]
    %v2265 = vld [vmem:[%s2 + $0xa34] sm:$0xf]
    %v2266 = vld [vmem:[%s2 + $0xa38] sm:$0xf]
    %v2267 = vld [vmem:[%s2 + $0xa3c] sm:$0xf]
    %v2268 = vld [vmem:[%s2 + $0xa40] sm:$0xf]
    %v2269 = vld [vmem:[%s2 + $0xa44] sm:$0xf]
    %v2270 = vld [vmem:[%s2 + $0xa48] sm:$0xf]
    %v2271 = vld [vmem:[%s2 + $0xa4c] sm:$0xf]
    %v2272 = vld [vmem:[%s2 + $0xa50] sm:$0xf]
    %v2273 = vld [vmem:[%s2 + $0xa54] sm:$0xf]
    %v2274 = vld [vmem:[%s2 + $0xa58] sm:$0xf]
    %v2275 = vld [vmem:[%s2 + $0xa5c] sm:$0xf]
    %v2276 = vld [vmem:[%s2 + $0xa60] sm:$0xf]
    %v2277 = vld [vmem:[%s2 + $0xa64] sm:$0xf]
    %v2278 = vld [vmem:[%s2 + $0xa68] sm:$0xf]
    %v2279 = vld [vmem:[%s2 + $0xa6c] sm:$0xf]
    %v2280 = vld [vmem:[%s2 + $0xa70] sm:$0xf]
    %v2281 = vld [vmem:[%s2 + $0xa74] sm:$0xf]
    %v2282 = vld [vmem:[%s2 + $0xa78] sm:$0xf]
    %v2283 = vld [vmem:[%s2 + $0xa7c] sm:$0xf]
    %v2284 = vld [vmem:[%s2 + $0xa80] sm:$0xf]
    %v2285 = vld [vmem:[%s2 + $0xa84] sm:$0xf]
    %v2286 = vld [vmem:[%s2 + $0xa88] sm:$0xf]
    %v2287 = vld [vmem:[%s2 + $0xa8c] sm:$0xf]
    %v2288 = vld [vmem:[%s2 + $0xa90] sm:$0xf]
    %v2289 = vld [vmem:[%s2 + $0xa94] sm:$0xf]
    %v2290 = vld [vmem:[%s2 + $0xa98] sm:$0xf]
    %v2291 = vld [vmem:[%s2 + $0xa9c] sm:$0xf]
    %v2292 = vld [vmem:[%s2 + $0xaa0] sm:$0xf]
    %v2293 = vld [vmem:[%s2 + $0xaa4] sm:$0xf]
    %v2294 = vld [vmem:[%s2 + $0xaa8] sm:$0xf]
    %v2295 = vld [vmem:[%s2 + $0xaac] sm:$0xf]
    %v2296 = vld [vmem:[%s2 + $0xab0] sm:$0xf]
    %v2297 = vld [vmem:[%s2 + $0xab4] sm:$0xf]
    %v2298 = vld [vmem:[%s2 + $0xab8] sm:$0xf]
    %v2299 = vld [vmem:[%s2 + $0xabc] sm:$0xf]
    %v2300 = vld [vmem:[%s2 + $0xac0] sm:$0xf]
    %v2301 = vld [vmem:[%s2 + $0xac4] sm:$0xf]
    %v2302 = vld [vmem:[%s2 + $0xac8] sm:$0xf]
    %v2303 = vld [vmem:[%s2 + $0xacc] sm:$0xf]
    %v2304 = vld [vmem:[%s2 + $0xad0] sm:$0xf]
    %v2305 = vld [vmem:[%s2 + $0xad4] sm:$0xf]
    %v2306 = vld [vmem:[%s2 + $0xad8] sm:$0xf]
    %v2307 = vld [vmem:[%s2 + $0xadc] sm:$0xf]
    %v2308 = vld [vmem:[%s2 + $0xae0] sm:$0xf]
    %v2309 = vld [vmem:[%s2 + $0xae4] sm:$0xf]
    %v2310 = vld [vmem:[%s2 + $0xae8] sm:$0xf]
    %v2311 = vld [vmem:[%s2 + $0xaec] sm:$0xf]
    %v2312 = vld [vmem:[%s2 + $0xaf0] sm:$0xf]
    %v2313 = vld [vmem:[%s2 + $0xaf4] sm:$0xf]
    %v2314 = vld [vmem:[%s2 + $0xaf8] sm:$0xf]
    %v2315 = vld [vmem:[%s2 + $0xafc] sm:$0xf]
    %v2316 = vld [vmem:[%s2 + $0xb00] sm:$0xf]
    %v2317 = vld [vmem:[%s2 + $0xb04] sm:$0xf]
    %v2318 = vld [vmem:[%s2 + $0xb08] sm:$0xf]
    %v2319 = vld [vmem:[%s2 + $0xb0c] sm:$0xf]
    %v2320 = vld [vmem:[%s2 + $0xb10] sm:$0xf]
    %v2321 = vld [vmem:[%s2 + $0xb14] sm:$0xf]
    %v2322 = vld [vmem:[%s2 + $0xb18] sm:$0xf]
    %v2323 = vld [vmem:[%s2 + $0xb1c] sm:$0xf]
    %v2324 = vld [vmem:[%s2 + $0xb20] sm:$0xf]
    %v2325 = vld [vmem:[%s2 + $0xb24] sm:$0xf]
    %v2326 = vld [vmem:[%s2 + $0xb28] sm:$0xf]
    %v2327 = vld [vmem:[%s2 + $0xb2c] sm:$0xf]
    %v2328 = vld [vmem:[%s2 + $0xb30] sm:$0xf]
    %v2329 = vld [vmem:[%s2 + $0xb34] sm:$0xf]
    %v2330 = vld [vmem:[%s2 + $0xb38] sm:$0xf]
    %v2331 = vld [vmem:[%s2 + $0xb3c] sm:$0xf]
    %v2332 = vld [vmem:[%s2 + $0xb40] sm:$0xf]
    %v2333 = vld [vmem:[%s2 + $0xb44] sm:$0xf]
    %v2334 = vld [vmem:[%s2 + $0xb48] sm:$0xf]
    %v2335 = vld [vmem:[%s2 + $0xb4c] sm:$0xf]
    %v2336 = vld [vmem:[%s2 + $0xb50] sm:$0xf]
    %v2337 = vld [vmem:[%s2 + $0xb54] sm:$0xf]
    %v2338 = vld [vmem:[%s2 + $0xb58] sm:$0xf]
    %v2339 = vld [vmem:[%s2 + $0xb5c] sm:$0xf]
    %v2340 = vld [vmem:[%s2 + $0xb60] sm:$0xf]
    %v2341 = vld [vmem:[%s2 + $0xb64] sm:$0xf]
    %v2342 = vld [vmem:[%s2 + $0xb68] sm:$0xf]
    %v2343 = vld [vmem:[%s2 + $0xb6c] sm:$0xf]
    %v2344 = vld [vmem:[%s2 + $0xb70] sm:$0xf]
    %v2345 = vld [vmem:[%s2 + $0xb74] sm:$0xf]
    %v2346 = vld [vmem:[%s2 + $0xb78] sm:$0xf]
    %v2347 = vld [vmem:[%s2 + $0xb7c] sm:$0xf]
    %v2348 = vld [vmem:[%s2 + $0xb80] sm:$0xf]
    %v2349 = vld [vmem:[%s2 + $0xb84] sm:$0xf]
    %v2350 = vld [vmem:[%s2 + $0xb88] sm:$0xf]
    %v2351 = vld [vmem:[%s2 + $0xb8c] sm:$0xf]
    %v2352 = vld [vmem:[%s2 + $0xb90] sm:$0xf]
    %v2353 = vld [vmem:[%s2 + $0xb94] sm:$0xf]
    %v2354 = vld [vmem:[%s2 + $0xb98] sm:$0xf]
    %v2355 = vld [vmem:[%s2 + $0xb9c] sm:$0xf]
    %v2356 = vld [vmem:[%s2 + $0xba0] sm:$0xf]
    %v2357 = vld [vmem:[%s2 + $0xba4] sm:$0xf]
    %v2358 = vld [vmem:[%s2 + $0xba8] sm:$0xf]
    %v2359 = vld [vmem:[%s2 + $0xbac] sm:$0xf]
    %v2360 = vld [vmem:[%s2 + $0xbb0] sm:$0xf]
    %v2361 = vld [vmem:[%s2 + $0xbb4] sm:$0xf]
    %v2362 = vld [vmem:[%s2 + $0xbb8] sm:$0xf]
    %v2363 = vld [vmem:[%s2 + $0xbbc] sm:$0xf]
    %v2364 = vld [vmem:[%s3] sm:$0x1]
    %v2366 = vlaneseq
    %v2367 = vshrl.u32 %v2366, 7
    %v2368 = vsub.s32 0, %v2367
    %v2369 = vrot.slane %v2364, %v2368
    %v3123 = vunpack.c.l.b16 %v1612
    %v3124 = vunpack.c.l.b16 %v1613
    %v3125 = vunpack.c.l.b16 %v1614
    %v3126 = vunpack.c.l.b16 %v1615
    %v3127 = vunpack.c.l.b16 %v1616
    %v3128 = vunpack.c.l.b16 %v1617
    %v3129 = vunpack.c.l.b16 %v1618
    %v3130 = vunpack.c.l.b16 %v1619
    %v3131 = vunpack.c.l.b16 %v1620
    %v3132 = vunpack.c.l.b16 %v1621
    %v3133 = vunpack.c.l.b16 %v1622
    %v3134 = vunpack.c.l.b16 %v1623
    %v3135 = vunpack.c.l.b16 %v1624
    %v3136 = vunpack.c.l.b16 %v1625
    %v3137 = vunpack.c.l.b16 %v1626
    %v3138 = vunpack.c.l.b16 %v1627
    %v3139 = vunpack.c.l.b16 %v1628
    %v3140 = vunpack.c.l.b16 %v1629
    %v3141 = vunpack.c.l.b16 %v1630
    %v3142 = vunpack.c.l.b16 %v1631
    %v3143 = vunpack.c.l.b16 %v1632
    %v3144 = vunpack.c.l.b16 %v1633
    %v3145 = vunpack.c.l.b16 %v1634
    %v3146 = vunpack.c.l.b16 %v1635
    %v3147 = vunpack.c.l.b16 %v1636
    %v3148 = vunpack.c.l.b16 %v1637
    %v3149 = vunpack.c.l.b16 %v1638
    %v3150 = vunpack.c.l.b16 %v1639
    %v3151 = vunpack.c.l.b16 %v1640
    %v3152 = vunpack.c.l.b16 %v1641
    %v3153 = vunpack.c.l.b16 %v1642
    %v3154 = vunpack.c.l.b16 %v1643
    %v3155 = vunpack.c.l.b16 %v1644
    %v3156 = vunpack.c.l.b16 %v1645
    %v3157 = vunpack.c.l.b16 %v1646
    %v3158 = vunpack.c.l.b16 %v1647
    %v3159 = vunpack.c.l.b16 %v1648
    %v3160 = vunpack.c.l.b16 %v1649
    %v3161 = vunpack.c.l.b16 %v1650
    %v3162 = vunpack.c.l.b16 %v1651
    %v3163 = vunpack.c.l.b16 %v1652
    %v3164 = vunpack.c.l.b16 %v1653
    %v3165 = vunpack.c.l.b16 %v1654
    %v3166 = vunpack.c.l.b16 %v1655
    %v3167 = vunpack.c.l.b16 %v1656
    %v3168 = vunpack.c.l.b16 %v1657
    %v3169 = vunpack.c.l.b16 %v1658
    %v3170 = vunpack.c.l.b16 %v1659
    %v3171 = vunpack.c.l.b16 %v1660
    %v3172 = vunpack.c.l.b16 %v1661
    %v3173 = vunpack.c.l.b16 %v1662
    %v3174 = vunpack.c.l.b16 %v1663
    %v3175 = vunpack.c.l.b16 %v1664
    %v3176 = vunpack.c.l.b16 %v1665
    %v3177 = vunpack.c.l.b16 %v1666
    %v3178 = vunpack.c.l.b16 %v1667
    %v3179 = vunpack.c.l.b16 %v1668
    %v3180 = vunpack.c.l.b16 %v1669
    %v3181 = vunpack.c.l.b16 %v1670
    %v3182 = vunpack.c.l.b16 %v1671
    %v3183 = vunpack.c.l.b16 %v1672
    %v3184 = vunpack.c.l.b16 %v1673
    %v3185 = vunpack.c.l.b16 %v1674
    %v3186 = vunpack.c.l.b16 %v1675
    %v3187 = vunpack.c.l.b16 %v1676
    %v3188 = vunpack.c.l.b16 %v1677
    %v3189 = vunpack.c.l.b16 %v1678
    %v3190 = vunpack.c.l.b16 %v1679
    %v3191 = vunpack.c.l.b16 %v1680
    %v3192 = vunpack.c.l.b16 %v1681
    %v3193 = vunpack.c.l.b16 %v1682
    %v3194 = vunpack.c.l.b16 %v1683
    %v3195 = vunpack.c.l.b16 %v1684
    %v3196 = vunpack.c.l.b16 %v1685
    %v3197 = vunpack.c.l.b16 %v1686
    %v3198 = vunpack.c.l.b16 %v1687
    %v3199 = vunpack.c.l.b16 %v1688
    %v3200 = vunpack.c.l.b16 %v1689
    %v3201 = vunpack.c.l.b16 %v1690
    %v3202 = vunpack.c.l.b16 %v1691
    %v3203 = vunpack.c.l.b16 %v1692
    %v3204 = vunpack.c.l.b16 %v1693
    %v3205 = vunpack.c.l.b16 %v1694
    %v3206 = vunpack.c.l.b16 %v1695
    %v3207 = vunpack.c.l.b16 %v1696
    %v3208 = vunpack.c.l.b16 %v1697
    %v3209 = vunpack.c.l.b16 %v1698
    %v3210 = vunpack.c.l.b16 %v1699
    %v3211 = vunpack.c.l.b16 %v1700
    %v3212 = vunpack.c.l.b16 %v1701
    %v3213 = vunpack.c.l.b16 %v1702
    %v3214 = vunpack.c.l.b16 %v1703
    %v3215 = vunpack.c.l.b16 %v1704
    %v3216 = vunpack.c.l.b16 %v1705
    %v3217 = vunpack.c.l.b16 %v1706
    %v3218 = vunpack.c.l.b16 %v1707
    %v3219 = vunpack.c.l.b16 %v1708
    %v3220 = vunpack.c.l.b16 %v1709
    %v3221 = vunpack.c.l.b16 %v1710
    %v3222 = vunpack.c.l.b16 %v1711
    %v3223 = vunpack.c.l.b16 %v1712
    %v3224 = vunpack.c.l.b16 %v1713
    %v3225 = vunpack.c.l.b16 %v1714
    %v3226 = vunpack.c.l.b16 %v1715
    %v3227 = vunpack.c.l.b16 %v1716
    %v3228 = vunpack.c.l.b16 %v1717
    %v3229 = vunpack.c.l.b16 %v1718
    %v3230 = vunpack.c.l.b16 %v1719
    %v3231 = vunpack.c.l.b16 %v1720
    %v3232 = vunpack.c.l.b16 %v1721
    %v3233 = vunpack.c.l.b16 %v1722
    %v3234 = vunpack.c.l.b16 %v1723
    %v3235 = vunpack.c.l.b16 %v1724
    %v3236 = vunpack.c.l.b16 %v1725
    %v3237 = vunpack.c.l.b16 %v1726
    %v3238 = vunpack.c.l.b16 %v1727
    %v3239 = vunpack.c.l.b16 %v1728
    %v3240 = vunpack.c.l.b16 %v1729
    %v3241 = vunpack.c.l.b16 %v1730
    %v3242 = vunpack.c.l.b16 %v1731
    %v3243 = vunpack.c.l.b16 %v1732
    %v3244 = vunpack.c.l.b16 %v1733
    %v3245 = vunpack.c.l.b16 %v1734
    %v3246 = vunpack.c.l.b16 %v1735
    %v3247 = vunpack.c.l.b16 %v1736
    %v3248 = vunpack.c.l.b16 %v1737
    %v3249 = vunpack.c.l.b16 %v1738
    %v3250 = vunpack.c.l.b16 %v1739
    %v3251 = vunpack.c.l.b16 %v1740
    %v3252 = vunpack.c.l.b16 %v1741
    %v3253 = vunpack.c.l.b16 %v1742
    %v3254 = vunpack.c.l.b16 %v1743
    %v3255 = vunpack.c.l.b16 %v1744
    %v3256 = vunpack.c.l.b16 %v1745
    %v3257 = vunpack.c.l.b16 %v1746
    %v3258 = vunpack.c.l.b16 %v1747
    %v3259 = vunpack.c.l.b16 %v1748
    %v3260 = vunpack.c.l.b16 %v1749
    %v3261 = vunpack.c.l.b16 %v1750
    %v3262 = vunpack.c.l.b16 %v1751
    %v3263 = vunpack.c.l.b16 %v1752
    %v3264 = vunpack.c.l.b16 %v1753
    %v3265 = vunpack.c.l.b16 %v1754
    %v3266 = vunpack.c.l.b16 %v1755
    %v3267 = vunpack.c.l.b16 %v1756
    %v3268 = vunpack.c.l.b16 %v1757
    %v3269 = vunpack.c.l.b16 %v1758
    %v3270 = vunpack.c.l.b16 %v1759
    %v3271 = vunpack.c.l.b16 %v1760
    %v3272 = vunpack.c.l.b16 %v1761
    %v3273 = vunpack.c.l.b16 %v1762
    %v3274 = vunpack.c.l.b16 %v1763
    %v3275 = vunpack.c.l.b16 %v1764
    %v3276 = vunpack.c.l.b16 %v1765
    %v3277 = vunpack.c.l.b16 %v1766
    %v3278 = vunpack.c.l.b16 %v1767
    %v3279 = vunpack.c.l.b16 %v1768
    %v3280 = vunpack.c.l.b16 %v1769
    %v3281 = vunpack.c.l.b16 %v1770
    %v3282 = vunpack.c.l.b16 %v1771
    %v3283 = vunpack.c.l.b16 %v1772
    %v3284 = vunpack.c.l.b16 %v1773
    %v3285 = vunpack.c.l.b16 %v1774
    %v3286 = vunpack.c.l.b16 %v1775
    %v3287 = vunpack.c.l.b16 %v1776
    %v3288 = vunpack.c.l.b16 %v1777
    %v3289 = vunpack.c.l.b16 %v1778
    %v3290 = vunpack.c.l.b16 %v1779
    %v3291 = vunpack.c.l.b16 %v1780
    %v3292 = vunpack.c.l.b16 %v1781
    %v3293 = vunpack.c.l.b16 %v1782
    %v3294 = vunpack.c.l.b16 %v1783
    %v3295 = vunpack.c.l.b16 %v1784
    %v3296 = vunpack.c.l.b16 %v1785
    %v3297 = vunpack.c.l.b16 %v1786
    %v3298 = vunpack.c.l.b16 %v1787
    %v3299 = vunpack.c.l.b16 %v1788
    %v3300 = vunpack.c.l.b16 %v1789
    %v3301 = vunpack.c.l.b16 %v1790
    %v3302 = vunpack.c.l.b16 %v1791
    %v3303 = vunpack.c.l.b16 %v1792
    %v3304 = vunpack.c.l.b16 %v1793
    %v3305 = vunpack.c.l.b16 %v1794
    %v3306 = vunpack.c.l.b16 %v1795
    %v3307 = vunpack.c.l.b16 %v1796
    %v3308 = vunpack.c.l.b16 %v1797
    %v3309 = vunpack.c.l.b16 %v1798
    %v3310 = vunpack.c.l.b16 %v1799
    %v3311 = vunpack.c.l.b16 %v1800
    %v3312 = vunpack.c.l.b16 %v1801
    %v3313 = vunpack.c.l.b16 %v1802
    %v3314 = vunpack.c.l.b16 %v1803
    %v3315 = vunpack.c.l.b16 %v1804
    %v3316 = vunpack.c.l.b16 %v1805
    %v3317 = vunpack.c.l.b16 %v1806
    %v3318 = vunpack.c.l.b16 %v1807
    %v3319 = vunpack.c.l.b16 %v1808
    %v3320 = vunpack.c.l.b16 %v1809
    %v3321 = vunpack.c.l.b16 %v1810
    %v3322 = vunpack.c.l.b16 %v1811
    %v3323 = vunpack.c.l.b16 %v1812
    %v3324 = vunpack.c.l.b16 %v1813
    %v3325 = vunpack.c.l.b16 %v1814
    %v3326 = vunpack.c.l.b16 %v1815
    %v3327 = vunpack.c.l.b16 %v1816
    %v3328 = vunpack.c.l.b16 %v1817
    %v3329 = vunpack.c.l.b16 %v1818
    %v3330 = vunpack.c.l.b16 %v1819
    %v3331 = vunpack.c.l.b16 %v1820
    %v3332 = vunpack.c.l.b16 %v1821
    %v3333 = vunpack.c.l.b16 %v1822
    %v3334 = vunpack.c.l.b16 %v1823
    %v3335 = vunpack.c.l.b16 %v1824
    %v3336 = vunpack.c.l.b16 %v1825
    %v3337 = vunpack.c.l.b16 %v1826
    %v3338 = vunpack.c.l.b16 %v1827
    %v3339 = vunpack.c.l.b16 %v1828
    %v3340 = vunpack.c.l.b16 %v1829
    %v3341 = vunpack.c.l.b16 %v1830
    %v3342 = vunpack.c.l.b16 %v1831
    %v3343 = vunpack.c.l.b16 %v1832
    %v3344 = vunpack.c.l.b16 %v1833
    %v3345 = vunpack.c.l.b16 %v1834
    %v3346 = vunpack.c.l.b16 %v1835
    %v3347 = vunpack.c.l.b16 %v1836
    %v3348 = vunpack.c.l.b16 %v1837
    %v3349 = vunpack.c.l.b16 %v1838
    %v3350 = vunpack.c.l.b16 %v1839
    %v3351 = vunpack.c.l.b16 %v1840
    %v3352 = vunpack.c.l.b16 %v1841
    %v3353 = vunpack.c.l.b16 %v1842
    %v3354 = vunpack.c.l.b16 %v1843
    %v3355 = vunpack.c.l.b16 %v1844
    %v3356 = vunpack.c.l.b16 %v1845
    %v3357 = vunpack.c.l.b16 %v1846
    %v3358 = vunpack.c.l.b16 %v1847
    %v3359 = vunpack.c.l.b16 %v1848
    %v3360 = vunpack.c.l.b16 %v1849
    %v3361 = vunpack.c.l.b16 %v1850
    %v3362 = vunpack.c.l.b16 %v1851
    %v3363 = vunpack.c.l.b16 %v1852
    %v3364 = vunpack.c.l.b16 %v1853
    %v3365 = vunpack.c.l.b16 %v1854
    %v3366 = vunpack.c.l.b16 %v1855
    %v3367 = vunpack.c.l.b16 %v1856
    %v3368 = vunpack.c.l.b16 %v1857
    %v3369 = vunpack.c.l.b16 %v1858
    %v3370 = vunpack.c.l.b16 %v1859
    %v3371 = vunpack.c.l.b16 %v1860
    %v3372 = vunpack.c.l.b16 %v1861
    %v3373 = vunpack.c.l.b16 %v1862
    %v3374 = vunpack.c.l.b16 %v1863
    %v3375 = vunpack.c.l.b16 %v1864
    %v3376 = vunpack.c.l.b16 %v1865
    %v3377 = vunpack.c.l.b16 %v1866
    %v3378 = vunpack.c.l.b16 %v1867
    %v3379 = vunpack.c.l.b16 %v1868
    %v3380 = vunpack.c.l.b16 %v1869
    %v3381 = vunpack.c.l.b16 %v1870
    %v3382 = vunpack.c.l.b16 %v1871
    %v3383 = vunpack.c.l.b16 %v1872
    %v3384 = vunpack.c.l.b16 %v1873
    %v3385 = vunpack.c.l.b16 %v1874
    %v3386 = vunpack.c.l.b16 %v1875
    %v3387 = vunpack.c.l.b16 %v1876
    %v3388 = vunpack.c.l.b16 %v1877
    %v3389 = vunpack.c.l.b16 %v1878
    %v3390 = vunpack.c.l.b16 %v1879
    %v3391 = vunpack.c.l.b16 %v1880
    %v3392 = vunpack.c.l.b16 %v1881
    %v3393 = vunpack.c.l.b16 %v1882
    %v3394 = vunpack.c.l.b16 %v1883
    %v3395 = vunpack.c.l.b16 %v1884
    %v3396 = vunpack.c.l.b16 %v1885
    %v3397 = vunpack.c.l.b16 %v1886
    %v3398 = vunpack.c.l.b16 %v1887
    %v3399 = vunpack.c.l.b16 %v1888
    %v3400 = vunpack.c.l.b16 %v1889
    %v3401 = vunpack.c.l.b16 %v1890
    %v3402 = vunpack.c.l.b16 %v1891
    %v3403 = vunpack.c.l.b16 %v1892
    %v3404 = vunpack.c.l.b16 %v1893
    %v3405 = vunpack.c.l.b16 %v1894
    %v3406 = vunpack.c.l.b16 %v1895
    %v3407 = vunpack.c.l.b16 %v1896
    %v3408 = vunpack.c.l.b16 %v1897
    %v3409 = vunpack.c.l.b16 %v1898
    %v3410 = vunpack.c.l.b16 %v1899
    %v3411 = vunpack.c.l.b16 %v1900
    %v3412 = vunpack.c.l.b16 %v1901
    %v3413 = vunpack.c.l.b16 %v1902
    %v3414 = vunpack.c.l.b16 %v1903
    %v3415 = vunpack.c.l.b16 %v1904
    %v3416 = vunpack.c.l.b16 %v1905
    %v3417 = vunpack.c.l.b16 %v1906
    %v3418 = vunpack.c.l.b16 %v1907
    %v3419 = vunpack.c.l.b16 %v1908
    %v3420 = vunpack.c.l.b16 %v1909
    %v3421 = vunpack.c.l.b16 %v1910
    %v3422 = vunpack.c.l.b16 %v1911
    %v3423 = vunpack.c.l.b16 %v1912
    %v3424 = vunpack.c.l.b16 %v1913
    %v3425 = vunpack.c.l.b16 %v1914
    %v3426 = vunpack.c.l.b16 %v1915
    %v3427 = vunpack.c.l.b16 %v1916
    %v3428 = vunpack.c.l.b16 %v1917
    %v3429 = vunpack.c.l.b16 %v1918
    %v3430 = vunpack.c.l.b16 %v1919
    %v3431 = vunpack.c.l.b16 %v1920
    %v3432 = vunpack.c.l.b16 %v1921
    %v3433 = vunpack.c.l.b16 %v1922
    %v3434 = vunpack.c.l.b16 %v1923
    %v3435 = vunpack.c.l.b16 %v1924
    %v3436 = vunpack.c.l.b16 %v1925
    %v3437 = vunpack.c.l.b16 %v1926
    %v3438 = vunpack.c.l.b16 %v1927
    %v3439 = vunpack.c.l.b16 %v1928
    %v3440 = vunpack.c.l.b16 %v1929
    %v3441 = vunpack.c.l.b16 %v1930
    %v3442 = vunpack.c.l.b16 %v1931
    %v3443 = vunpack.c.l.b16 %v1932
    %v3444 = vunpack.c.l.b16 %v1933
    %v3445 = vunpack.c.l.b16 %v1934
    %v3446 = vunpack.c.l.b16 %v1935
    %v3447 = vunpack.c.l.b16 %v1936
    %v3448 = vunpack.c.l.b16 %v1937
    %v3449 = vunpack.c.l.b16 %v1938
    %v3450 = vunpack.c.l.b16 %v1939
    %v3451 = vunpack.c.l.b16 %v1940
    %v3452 = vunpack.c.l.b16 %v1941
    %v3453 = vunpack.c.l.b16 %v1942
    %v3454 = vunpack.c.l.b16 %v1943
    %v3455 = vunpack.c.l.b16 %v1944
    %v3456 = vunpack.c.l.b16 %v1945
    %v3457 = vunpack.c.l.b16 %v1946
    %v3458 = vunpack.c.l.b16 %v1947
    %v3459 = vunpack.c.l.b16 %v1948
    %v3460 = vunpack.c.l.b16 %v1949
    %v3461 = vunpack.c.l.b16 %v1950
    %v3462 = vunpack.c.l.b16 %v1951
    %v3463 = vunpack.c.l.b16 %v1952
    %v3464 = vunpack.c.l.b16 %v1953
    %v3465 = vunpack.c.l.b16 %v1954
    %v3466 = vunpack.c.l.b16 %v1955
    %v3467 = vunpack.c.l.b16 %v1956
    %v3468 = vunpack.c.l.b16 %v1957
    %v3469 = vunpack.c.l.b16 %v1958
    %v3470 = vunpack.c.l.b16 %v1959
    %v3471 = vunpack.c.l.b16 %v1960
    %v3472 = vunpack.c.l.b16 %v1961
    %v3473 = vunpack.c.l.b16 %v1962
    %v3474 = vunpack.c.l.b16 %v1963
    %v3475 = vunpack.c.l.b16 %v1964
    %v3476 = vunpack.c.l.b16 %v1965
    %v3477 = vunpack.c.l.b16 %v1966
    %v3478 = vunpack.c.l.b16 %v1967
    %v3479 = vunpack.c.l.b16 %v1968
    %v3480 = vunpack.c.l.b16 %v1969
    %v3481 = vunpack.c.l.b16 %v1970
    %v3482 = vunpack.c.l.b16 %v1971
    %v3483 = vunpack.c.l.b16 %v1972
    %v3484 = vunpack.c.l.b16 %v1973
    %v3485 = vunpack.c.l.b16 %v1974
    %v3486 = vunpack.c.l.b16 %v1975
    %v3487 = vunpack.c.l.b16 %v1976
    %v3488 = vunpack.c.l.b16 %v1977
    %v3489 = vunpack.c.l.b16 %v1978
    %v3490 = vunpack.c.l.b16 %v1979
    %v3491 = vunpack.c.l.b16 %v1980
    %v3492 = vunpack.c.l.b16 %v1981
    %v3493 = vunpack.c.l.b16 %v1982
    %v3494 = vunpack.c.l.b16 %v1983
    %v3495 = vunpack.c.l.b16 %v1984
    %v3496 = vunpack.c.l.b16 %v1985
    %v3497 = vunpack.c.l.b16 %v1986
    %v3498 = vunpack.c.l.b16 %v1987
    %v3499 = vunpack.c.l.b16 %v1988
    %v3500 = vunpack.c.l.b16 %v1989
    %v3501 = vunpack.c.l.b16 %v1990
    %v3502 = vunpack.c.l.b16 %v1991
    %v3503 = vunpack.c.l.b16 %v1992
    %v3504 = vunpack.c.l.b16 %v1993
    %v3505 = vunpack.c.l.b16 %v1994
    %v3506 = vunpack.c.l.b16 %v1995
    %v3507 = vunpack.c.l.b16 %v1996
    %v3508 = vunpack.c.l.b16 %v1997
    %v3509 = vunpack.c.l.b16 %v1998
    %v3510 = vunpack.c.l.b16 %v1999
    %v3511 = vunpack.c.l.b16 %v2000
    %v3512 = vunpack.c.l.b16 %v2001
    %v3513 = vunpack.c.l.b16 %v2002
    %v3514 = vunpack.c.l.b16 %v2003
    %v3515 = vunpack.c.l.b16 %v2004
    %v3516 = vunpack.c.l.b16 %v2005
    %v3517 = vunpack.c.l.b16 %v2006
    %v3518 = vunpack.c.l.b16 %v2007
    %v3519 = vunpack.c.l.b16 %v2008
    %v3520 = vunpack.c.l.b16 %v2009
    %v3521 = vunpack.c.l.b16 %v2010
    %v3522 = vunpack.c.l.b16 %v2011
    %v3523 = vunpack.c.l.b16 %v2012
    %v3524 = vunpack.c.l.b16 %v2013
    %v3525 = vunpack.c.l.b16 %v2014
    %v3526 = vunpack.c.l.b16 %v2015
    %v3527 = vunpack.c.l.b16 %v2016
    %v3528 = vunpack.c.l.b16 %v2017
    %v3529 = vunpack.c.l.b16 %v2018
    %v3530 = vunpack.c.l.b16 %v2019
    %v3531 = vunpack.c.l.b16 %v2020
    %v3532 = vunpack.c.l.b16 %v2021
    %v3533 = vunpack.c.l.b16 %v2022
    %v3534 = vunpack.c.l.b16 %v2023
    %v3535 = vunpack.c.l.b16 %v2024
    %v3536 = vunpack.c.l.b16 %v2025
    %v3537 = vunpack.c.l.b16 %v2026
    %v3538 = vunpack.c.l.b16 %v2027
    %v3539 = vunpack.c.l.b16 %v2028
    %v3540 = vunpack.c.l.b16 %v2029
    %v3541 = vunpack.c.l.b16 %v2030
    %v3542 = vunpack.c.l.b16 %v2031
    %v3543 = vunpack.c.l.b16 %v2032
    %v3544 = vunpack.c.l.b16 %v2033
    %v3545 = vunpack.c.l.b16 %v2034
    %v3546 = vunpack.c.l.b16 %v2035
    %v3547 = vunpack.c.l.b16 %v2036
    %v3548 = vunpack.c.l.b16 %v2037
    %v3549 = vunpack.c.l.b16 %v2038
    %v3550 = vunpack.c.l.b16 %v2039
    %v3551 = vunpack.c.l.b16 %v2040
    %v3552 = vunpack.c.l.b16 %v2041
    %v3553 = vunpack.c.l.b16 %v2042
    %v3554 = vunpack.c.l.b16 %v2043
    %v3555 = vunpack.c.l.b16 %v2044
    %v3556 = vunpack.c.l.b16 %v2045
    %v3557 = vunpack.c.l.b16 %v2046
    %v3558 = vunpack.c.l.b16 %v2047
    %v3559 = vunpack.c.l.b16 %v2048
    %v3560 = vunpack.c.l.b16 %v2049
    %v3561 = vunpack.c.l.b16 %v2050
    %v3562 = vunpack.c.l.b16 %v2051
    %v3563 = vunpack.c.l.b16 %v2052
    %v3564 = vunpack.c.l.b16 %v2053
    %v3565 = vunpack.c.l.b16 %v2054
    %v3566 = vunpack.c.l.b16 %v2055
    %v3567 = vunpack.c.l.b16 %v2056
    %v3568 = vunpack.c.l.b16 %v2057
    %v3569 = vunpack.c.l.b16 %v2058
    %v3570 = vunpack.c.l.b16 %v2059
    %v3571 = vunpack.c.l.b16 %v2060
    %v3572 = vunpack.c.l.b16 %v2061
    %v3573 = vunpack.c.l.b16 %v2062
    %v3574 = vunpack.c.l.b16 %v2063
    %v3575 = vunpack.c.l.b16 %v2064
    %v3576 = vunpack.c.l.b16 %v2065
    %v3577 = vunpack.c.l.b16 %v2066
    %v3578 = vunpack.c.l.b16 %v2067
    %v3579 = vunpack.c.l.b16 %v2068
    %v3580 = vunpack.c.l.b16 %v2069
    %v3581 = vunpack.c.l.b16 %v2070
    %v3582 = vunpack.c.l.b16 %v2071
    %v3583 = vunpack.c.l.b16 %v2072
    %v3584 = vunpack.c.l.b16 %v2073
    %v3585 = vunpack.c.l.b16 %v2074
    %v3586 = vunpack.c.l.b16 %v2075
    %v3587 = vunpack.c.l.b16 %v2076
    %v3588 = vunpack.c.l.b16 %v2077
    %v3589 = vunpack.c.l.b16 %v2078
    %v3590 = vunpack.c.l.b16 %v2079
    %v3591 = vunpack.c.l.b16 %v2080
    %v3592 = vunpack.c.l.b16 %v2081
    %v3593 = vunpack.c.l.b16 %v2082
    %v3594 = vunpack.c.l.b16 %v2083
    %v3595 = vunpack.c.l.b16 %v2084
    %v3596 = vunpack.c.l.b16 %v2085
    %v3597 = vunpack.c.l.b16 %v2086
    %v3598 = vunpack.c.l.b16 %v2087
    %v3599 = vunpack.c.l.b16 %v2088
    %v3600 = vunpack.c.l.b16 %v2089
    %v3601 = vunpack.c.l.b16 %v2090
    %v3602 = vunpack.c.l.b16 %v2091
    %v3603 = vunpack.c.l.b16 %v2092
    %v3604 = vunpack.c.l.b16 %v2093
    %v3605 = vunpack.c.l.b16 %v2094
    %v3606 = vunpack.c.l.b16 %v2095
    %v3607 = vunpack.c.l.b16 %v2096
    %v3608 = vunpack.c.l.b16 %v2097
    %v3609 = vunpack.c.l.b16 %v2098
    %v3610 = vunpack.c.l.b16 %v2099
    %v3611 = vunpack.c.l.b16 %v2100
    %v3612 = vunpack.c.l.b16 %v2101
    %v3613 = vunpack.c.l.b16 %v2102
    %v3614 = vunpack.c.l.b16 %v2103
    %v3615 = vunpack.c.l.b16 %v2104
    %v3616 = vunpack.c.l.b16 %v2105
    %v3617 = vunpack.c.l.b16 %v2106
    %v3618 = vunpack.c.l.b16 %v2107
    %v3619 = vunpack.c.l.b16 %v2108
    %v3620 = vunpack.c.l.b16 %v2109
    %v3621 = vunpack.c.l.b16 %v2110
    %v3622 = vunpack.c.l.b16 %v2111
    %v3623 = vunpack.c.l.b16 %v2112
    %v3624 = vunpack.c.l.b16 %v2113
    %v3625 = vunpack.c.l.b16 %v2114
    %v3626 = vunpack.c.l.b16 %v2115
    %v3627 = vunpack.c.l.b16 %v2116
    %v3628 = vunpack.c.l.b16 %v2117
    %v3629 = vunpack.c.l.b16 %v2118
    %v3630 = vunpack.c.l.b16 %v2119
    %v3631 = vunpack.c.l.b16 %v2120
    %v3632 = vunpack.c.l.b16 %v2121
    %v3633 = vunpack.c.l.b16 %v2122
    %v3634 = vunpack.c.l.b16 %v2123
    %v3635 = vunpack.c.l.b16 %v2124
    %v3636 = vunpack.c.l.b16 %v2125
    %v3637 = vunpack.c.l.b16 %v2126
    %v3638 = vunpack.c.l.b16 %v2127
    %v3639 = vunpack.c.l.b16 %v2128
    %v3640 = vunpack.c.l.b16 %v2129
    %v3641 = vunpack.c.l.b16 %v2130
    %v3642 = vunpack.c.l.b16 %v2131
    %v3643 = vunpack.c.l.b16 %v2132
    %v3644 = vunpack.c.l.b16 %v2133
    %v3645 = vunpack.c.l.b16 %v2134
    %v3646 = vunpack.c.l.b16 %v2135
    %v3647 = vunpack.c.l.b16 %v2136
    %v3648 = vunpack.c.l.b16 %v2137
    %v3649 = vunpack.c.l.b16 %v2138
    %v3650 = vunpack.c.l.b16 %v2139
    %v3651 = vunpack.c.l.b16 %v2140
    %v3652 = vunpack.c.l.b16 %v2141
    %v3653 = vunpack.c.l.b16 %v2142
    %v3654 = vunpack.c.l.b16 %v2143
    %v3655 = vunpack.c.l.b16 %v2144
    %v3656 = vunpack.c.l.b16 %v2145
    %v3657 = vunpack.c.l.b16 %v2146
    %v3658 = vunpack.c.l.b16 %v2147
    %v3659 = vunpack.c.l.b16 %v2148
    %v3660 = vunpack.c.l.b16 %v2149
    %v3661 = vunpack.c.l.b16 %v2150
    %v3662 = vunpack.c.l.b16 %v2151
    %v3663 = vunpack.c.l.b16 %v2152
    %v3664 = vunpack.c.l.b16 %v2153
    %v3665 = vunpack.c.l.b16 %v2154
    %v3666 = vunpack.c.l.b16 %v2155
    %v3667 = vunpack.c.l.b16 %v2156
    %v3668 = vunpack.c.l.b16 %v2157
    %v3669 = vunpack.c.l.b16 %v2158
    %v3670 = vunpack.c.l.b16 %v2159
    %v3671 = vunpack.c.l.b16 %v2160
    %v3672 = vunpack.c.l.b16 %v2161
    %v3673 = vunpack.c.l.b16 %v2162
    %v3674 = vunpack.c.l.b16 %v2163
    %v3675 = vunpack.c.l.b16 %v2164
    %v3676 = vunpack.c.l.b16 %v2165
    %v3677 = vunpack.c.l.b16 %v2166
    %v3678 = vunpack.c.l.b16 %v2167
    %v3679 = vunpack.c.l.b16 %v2168
    %v3680 = vunpack.c.l.b16 %v2169
    %v3681 = vunpack.c.l.b16 %v2170
    %v3682 = vunpack.c.l.b16 %v2171
    %v3683 = vunpack.c.l.b16 %v2172
    %v3684 = vunpack.c.l.b16 %v2173
    %v3685 = vunpack.c.l.b16 %v2174
    %v3686 = vunpack.c.l.b16 %v2175
    %v3687 = vunpack.c.l.b16 %v2176
    %v3688 = vunpack.c.l.b16 %v2177
    %v3689 = vunpack.c.l.b16 %v2178
    %v3690 = vunpack.c.l.b16 %v2179
    %v3691 = vunpack.c.l.b16 %v2180
    %v3692 = vunpack.c.l.b16 %v2181
    %v3693 = vunpack.c.l.b16 %v2182
    %v3694 = vunpack.c.l.b16 %v2183
    %v3695 = vunpack.c.l.b16 %v2184
    %v3696 = vunpack.c.l.b16 %v2185
    %v3697 = vunpack.c.l.b16 %v2186
    %v3698 = vunpack.c.l.b16 %v2187
    %v3699 = vunpack.c.l.b16 %v2188
    %v3700 = vunpack.c.l.b16 %v2189
    %v3701 = vunpack.c.l.b16 %v2190
    %v3702 = vunpack.c.l.b16 %v2191
    %v3703 = vunpack.c.l.b16 %v2192
    %v3704 = vunpack.c.l.b16 %v2193
    %v3705 = vunpack.c.l.b16 %v2194
    %v3706 = vunpack.c.l.b16 %v2195
    %v3707 = vunpack.c.l.b16 %v2196
    %v3708 = vunpack.c.l.b16 %v2197
    %v3709 = vunpack.c.l.b16 %v2198
    %v3710 = vunpack.c.l.b16 %v2199
    %v3711 = vunpack.c.l.b16 %v2200
    %v3712 = vunpack.c.l.b16 %v2201
    %v3713 = vunpack.c.l.b16 %v2202
    %v3714 = vunpack.c.l.b16 %v2203
    %v3715 = vunpack.c.l.b16 %v2204
    %v3716 = vunpack.c.l.b16 %v2205
    %v3717 = vunpack.c.l.b16 %v2206
    %v3718 = vunpack.c.l.b16 %v2207
    %v3719 = vunpack.c.l.b16 %v2208
    %v3720 = vunpack.c.l.b16 %v2209
    %v3721 = vunpack.c.l.b16 %v2210
    %v3722 = vunpack.c.l.b16 %v2211
    %v3723 = vunpack.c.l.b16 %v2212
    %v3724 = vunpack.c.l.b16 %v2213
    %v3725 = vunpack.c.l.b16 %v2214
    %v3726 = vunpack.c.l.b16 %v2215
    %v3727 = vunpack.c.l.b16 %v2216
    %v3728 = vunpack.c.l.b16 %v2217
    %v3729 = vunpack.c.l.b16 %v2218
    %v3730 = vunpack.c.l.b16 %v2219
    %v3731 = vunpack.c.l.b16 %v2220
    %v3732 = vunpack.c.l.b16 %v2221
    %v3733 = vunpack.c.l.b16 %v2222
    %v3734 = vunpack.c.l.b16 %v2223
    %v3735 = vunpack.c.l.b16 %v2224
    %v3736 = vunpack.c.l.b16 %v2225
    %v3737 = vunpack.c.l.b16 %v2226
    %v3738 = vunpack.c.l.b16 %v2227
    %v3739 = vunpack.c.l.b16 %v2228
    %v3740 = vunpack.c.l.b16 %v2229
    %v3741 = vunpack.c.l.b16 %v2230
    %v3742 = vunpack.c.l.b16 %v2231
    %v3743 = vunpack.c.l.b16 %v2232
    %v3744 = vunpack.c.l.b16 %v2233
    %v3745 = vunpack.c.l.b16 %v2234
    %v3746 = vunpack.c.l.b16 %v2235
    %v3747 = vunpack.c.l.b16 %v2236
    %v3748 = vunpack.c.l.b16 %v2237
    %v3749 = vunpack.c.l.b16 %v2238
    %v3750 = vunpack.c.l.b16 %v2239
    %v3751 = vunpack.c.l.b16 %v2240
    %v3752 = vunpack.c.l.b16 %v2241
    %v3753 = vunpack.c.l.b16 %v2242
    %v3754 = vunpack.c.l.b16 %v2243
    %v3755 = vunpack.c.l.b16 %v2244
    %v3756 = vunpack.c.l.b16 %v2245
    %v3757 = vunpack.c.l.b16 %v2246
    %v3758 = vunpack.c.l.b16 %v2247
    %v3759 = vunpack.c.l.b16 %v2248
    %v3760 = vunpack.c.l.b16 %v2249
    %v3761 = vunpack.c.l.b16 %v2250
    %v3762 = vunpack.c.l.b16 %v2251
    %v3763 = vunpack.c.l.b16 %v2252
    %v3764 = vunpack.c.l.b16 %v2253
    %v3765 = vunpack.c.l.b16 %v2254
    %v3766 = vunpack.c.l.b16 %v2255
    %v3767 = vunpack.c.l.b16 %v2256
    %v3768 = vunpack.c.l.b16 %v2257
    %v3769 = vunpack.c.l.b16 %v2258
    %v3770 = vunpack.c.l.b16 %v2259
    %v3771 = vunpack.c.l.b16 %v2260
    %v3772 = vunpack.c.l.b16 %v2261
    %v3773 = vunpack.c.l.b16 %v2262
    %v3774 = vunpack.c.l.b16 %v2263
    %v3775 = vunpack.c.l.b16 %v2264
    %v3776 = vunpack.c.l.b16 %v2265
    %v3777 = vunpack.c.l.b16 %v2266
    %v3778 = vunpack.c.l.b16 %v2267
    %v3779 = vunpack.c.l.b16 %v2268
    %v3780 = vunpack.c.l.b16 %v2269
    %v3781 = vunpack.c.l.b16 %v2270
    %v3782 = vunpack.c.l.b16 %v2271
    %v3783 = vunpack.c.l.b16 %v2272
    %v3784 = vunpack.c.l.b16 %v2273
    %v3785 = vunpack.c.l.b16 %v2274
    %v3786 = vunpack.c.l.b16 %v2275
    %v3787 = vunpack.c.l.b16 %v2276
    %v3788 = vunpack.c.l.b16 %v2277
    %v3789 = vunpack.c.l.b16 %v2278
    %v3790 = vunpack.c.l.b16 %v2279
    %v3791 = vunpack.c.l.b16 %v2280
    %v3792 = vunpack.c.l.b16 %v2281
    %v3793 = vunpack.c.l.b16 %v2282
    %v3794 = vunpack.c.l.b16 %v2283
    %v3795 = vunpack.c.l.b16 %v2284
    %v3796 = vunpack.c.l.b16 %v2285
    %v3797 = vunpack.c.l.b16 %v2286
    %v3798 = vunpack.c.l.b16 %v2287
    %v3799 = vunpack.c.l.b16 %v2288
    %v3800 = vunpack.c.l.b16 %v2289
    %v3801 = vunpack.c.l.b16 %v2290
    %v3802 = vunpack.c.l.b16 %v2291
    %v3803 = vunpack.c.l.b16 %v2292
    %v3804 = vunpack.c.l.b16 %v2293
    %v3805 = vunpack.c.l.b16 %v2294
    %v3806 = vunpack.c.l.b16 %v2295
    %v3807 = vunpack.c.l.b16 %v2296
    %v3808 = vunpack.c.l.b16 %v2297
    %v3809 = vunpack.c.l.b16 %v2298
    %v3810 = vunpack.c.l.b16 %v2299
    %v3811 = vunpack.c.l.b16 %v2300
    %v3812 = vunpack.c.l.b16 %v2301
    %v3813 = vunpack.c.l.b16 %v2302
    %v3814 = vunpack.c.l.b16 %v2303
    %v3815 = vunpack.c.l.b16 %v2304
    %v3816 = vunpack.c.l.b16 %v2305
    %v3817 = vunpack.c.l.b16 %v2306
    %v3818 = vunpack.c.l.b16 %v2307
    %v3819 = vunpack.c.l.b16 %v2308
    %v3820 = vunpack.c.l.b16 %v2309
    %v3821 = vunpack.c.l.b16 %v2310
    %v3822 = vunpack.c.l.b16 %v2311
    %v3823 = vunpack.c.l.b16 %v2312
    %v3824 = vunpack.c.l.b16 %v2313
    %v3825 = vunpack.c.l.b16 %v2314
    %v3826 = vunpack.c.l.b16 %v2315
    %v3827 = vunpack.c.l.b16 %v2316
    %v3828 = vunpack.c.l.b16 %v2317
    %v3829 = vunpack.c.l.b16 %v2318
    %v3830 = vunpack.c.l.b16 %v2319
    %v3831 = vunpack.c.l.b16 %v2320
    %v3832 = vunpack.c.l.b16 %v2321
    %v3833 = vunpack.c.l.b16 %v2322
    %v3834 = vunpack.c.l.b16 %v2323
    %v3835 = vunpack.c.l.b16 %v2324
    %v3836 = vunpack.c.l.b16 %v2325
    %v3837 = vunpack.c.l.b16 %v2326
    %v3838 = vunpack.c.l.b16 %v2327
    %v3839 = vunpack.c.l.b16 %v2328
    %v3840 = vunpack.c.l.b16 %v2329
    %v3841 = vunpack.c.l.b16 %v2330
    %v3842 = vunpack.c.l.b16 %v2331
    %v3843 = vunpack.c.l.b16 %v2332
    %v3844 = vunpack.c.l.b16 %v2333
    %v3845 = vunpack.c.l.b16 %v2334
    %v3846 = vunpack.c.l.b16 %v2335
    %v3847 = vunpack.c.l.b16 %v2336
    %v3848 = vunpack.c.l.b16 %v2337
    %v3849 = vunpack.c.l.b16 %v2338
    %v3850 = vunpack.c.l.b16 %v2339
    %v3851 = vunpack.c.l.b16 %v2340
    %v3852 = vunpack.c.l.b16 %v2341
    %v3853 = vunpack.c.l.b16 %v2342
    %v3854 = vunpack.c.l.b16 %v2343
    %v3855 = vunpack.c.l.b16 %v2344
    %v3856 = vunpack.c.l.b16 %v2345
    %v3857 = vunpack.c.l.b16 %v2346
    %v3858 = vunpack.c.l.b16 %v2347
    %v3859 = vunpack.c.l.b16 %v2348
    %v3860 = vunpack.c.l.b16 %v2349
    %v3861 = vunpack.c.l.b16 %v2350
    %v3862 = vunpack.c.l.b16 %v2351
    %v3863 = vunpack.c.l.b16 %v2352
    %v3864 = vunpack.c.l.b16 %v2353
    %v3865 = vunpack.c.l.b16 %v2354
    %v3866 = vunpack.c.l.b16 %v2355
    %v3867 = vunpack.c.l.b16 %v2356
    %v3868 = vunpack.c.l.b16 %v2357
    %v3869 = vunpack.c.l.b16 %v2358
    %v3870 = vunpack.c.l.b16 %v2359
    %v3871 = vunpack.c.l.b16 %v2360
    %v3872 = vunpack.c.l.b16 %v2361
    %v3873 = vunpack.c.l.b16 %v2362
    %v3874 = vunpack.c.l.b16 %v2363
    %v3875 = vpack.c.b16 %v3124, %v3123
    %v3876 = vpack.c.b16 %v3126, %v3125
    %v3877 = vpack.c.b16 %v3128, %v3127
    %v3878 = vpack.c.b16 %v3130, %v3129
    %v3879 = vpack.c.b16 %v3132, %v3131
    %v3880 = vpack.c.b16 %v3134, %v3133
    %v3881 = vpack.c.b16 %v3136, %v3135
    %v3882 = vpack.c.b16 %v3138, %v3137
    %v3883 = vpack.c.b16 %v3140, %v3139
    %v3884 = vpack.c.b16 %v3142, %v3141
    %v3885 = vpack.c.b16 %v3144, %v3143
    %v3886 = vpack.c.b16 %v3146, %v3145
    %v3887 = vpack.c.b16 %v3148, %v3147
    %v3888 = vpack.c.b16 %v3150, %v3149
    %v3889 = vpack.c.b16 %v3152, %v3151
    %v3890 = vpack.c.b16 %v3154, %v3153
    %v3891 = vpack.c.b16 %v3156, %v3155
    %v3892 = vpack.c.b16 %v3158, %v3157
    %v3893 = vpack.c.b16 %v3160, %v3159
    %v3894 = vpack.c.b16 %v3162, %v3161
    %v3895 = vpack.c.b16 %v3164, %v3163
    %v3896 = vpack.c.b16 %v3166, %v3165
    %v3897 = vpack.c.b16 %v3168, %v3167
    %v3898 = vpack.c.b16 %v3170, %v3169
    %v3899 = vpack.c.b16 %v3172, %v3171
    %v3900 = vpack.c.b16 %v3174, %v3173
    %v3901 = vpack.c.b16 %v3176, %v3175
    %v3902 = vpack.c.b16 %v3178, %v3177
    %v3903 = vpack.c.b16 %v3180, %v3179
    %v3904 = vpack.c.b16 %v3182, %v3181
    %v3905 = vpack.c.b16 %v3184, %v3183
    %v3906 = vpack.c.b16 %v3186, %v3185
    %v3907 = vpack.c.b16 %v3188, %v3187
    %v3908 = vpack.c.b16 %v3190, %v3189
    %v3909 = vpack.c.b16 %v3192, %v3191
    %v3910 = vpack.c.b16 %v3194, %v3193
    %v3911 = vpack.c.b16 %v3196, %v3195
    %v3912 = vpack.c.b16 %v3198, %v3197
    %v3913 = vpack.c.b16 %v3200, %v3199
    %v3914 = vpack.c.b16 %v3202, %v3201
    %v3915 = vpack.c.b16 %v3204, %v3203
    %v3916 = vpack.c.b16 %v3206, %v3205
    %v3917 = vpack.c.b16 %v3208, %v3207
    %v3918 = vpack.c.b16 %v3210, %v3209
    %v3919 = vpack.c.b16 %v3212, %v3211
    %v3920 = vpack.c.b16 %v3214, %v3213
    %v3921 = vpack.c.b16 %v3216, %v3215
    %v3922 = vpack.c.b16 %v3218, %v3217
    %v3923 = vpack.c.b16 %v3220, %v3219
    %v3924 = vpack.c.b16 %v3222, %v3221
    %v3925 = vpack.c.b16 %v3224, %v3223
    %v3926 = vpack.c.b16 %v3226, %v3225
    %v3927 = vpack.c.b16 %v3228, %v3227
    %v3928 = vpack.c.b16 %v3230, %v3229
    %v3929 = vpack.c.b16 %v3232, %v3231
    %v3930 = vpack.c.b16 %v3234, %v3233
    %v3931 = vpack.c.b16 %v3236, %v3235
    %v3932 = vpack.c.b16 %v3238, %v3237
    %v3933 = vpack.c.b16 %v3240, %v3239
    %v3934 = vpack.c.b16 %v3242, %v3241
    %v3935 = vpack.c.b16 %v3244, %v3243
    %v3936 = vpack.c.b16 %v3246, %v3245
    %v3937 = vpack.c.b16 %v3248, %v3247
    %v3938 = vpack.c.b16 %v3250, %v3249
    %v3939 = vpack.c.b16 %v3252, %v3251
    %v3940 = vpack.c.b16 %v3254, %v3253
    %v3941 = vpack.c.b16 %v3256, %v3255
    %v3942 = vpack.c.b16 %v3258, %v3257
    %v3943 = vpack.c.b16 %v3260, %v3259
    %v3944 = vpack.c.b16 %v3262, %v3261
    %v3945 = vpack.c.b16 %v3264, %v3263
    %v3946 = vpack.c.b16 %v3266, %v3265
    %v3947 = vpack.c.b16 %v3268, %v3267
    %v3948 = vpack.c.b16 %v3270, %v3269
    %v3949 = vpack.c.b16 %v3272, %v3271
    %v3950 = vpack.c.b16 %v3274, %v3273
    %v3951 = vpack.c.b16 %v3276, %v3275
    %v3952 = vpack.c.b16 %v3278, %v3277
    %v3953 = vpack.c.b16 %v3280, %v3279
    %v3954 = vpack.c.b16 %v3282, %v3281
    %v3955 = vpack.c.b16 %v3284, %v3283
    %v3956 = vpack.c.b16 %v3286, %v3285
    %v3957 = vpack.c.b16 %v3288, %v3287
    %v3958 = vpack.c.b16 %v3290, %v3289
    %v3959 = vpack.c.b16 %v3292, %v3291
    %v3960 = vpack.c.b16 %v3294, %v3293
    %v3961 = vpack.c.b16 %v3296, %v3295
    %v3962 = vpack.c.b16 %v3298, %v3297
    %v3963 = vpack.c.b16 %v3300, %v3299
    %v3964 = vpack.c.b16 %v3302, %v3301
    %v3965 = vpack.c.b16 %v3304, %v3303
    %v3966 = vpack.c.b16 %v3306, %v3305
    %v3967 = vpack.c.b16 %v3308, %v3307
    %v3968 = vpack.c.b16 %v3310, %v3309
    %v3969 = vpack.c.b16 %v3312, %v3311
    %v3970 = vpack.c.b16 %v3314, %v3313
    %v3971 = vpack.c.b16 %v3316, %v3315
    %v3972 = vpack.c.b16 %v3318, %v3317
    %v3973 = vpack.c.b16 %v3320, %v3319
    %v3974 = vpack.c.b16 %v3322, %v3321
    %v3975 = vpack.c.b16 %v3324, %v3323
    %v3976 = vpack.c.b16 %v3326, %v3325
    %v3977 = vpack.c.b16 %v3328, %v3327
    %v3978 = vpack.c.b16 %v3330, %v3329
    %v3979 = vpack.c.b16 %v3332, %v3331
    %v3980 = vpack.c.b16 %v3334, %v3333
    %v3981 = vpack.c.b16 %v3336, %v3335
    %v3982 = vpack.c.b16 %v3338, %v3337
    %v3983 = vpack.c.b16 %v3340, %v3339
    %v3984 = vpack.c.b16 %v3342, %v3341
    %v3985 = vpack.c.b16 %v3344, %v3343
    %v3986 = vpack.c.b16 %v3346, %v3345
    %v3987 = vpack.c.b16 %v3348, %v3347
    %v3988 = vpack.c.b16 %v3350, %v3349
    %v3989 = vpack.c.b16 %v3352, %v3351
    %v3990 = vpack.c.b16 %v3354, %v3353
    %v3991 = vpack.c.b16 %v3356, %v3355
    %v3992 = vpack.c.b16 %v3358, %v3357
    %v3993 = vpack.c.b16 %v3360, %v3359
    %v3994 = vpack.c.b16 %v3362, %v3361
    %v3995 = vpack.c.b16 %v3364, %v3363
    %v3996 = vpack.c.b16 %v3366, %v3365
    %v3997 = vpack.c.b16 %v3368, %v3367
    %v3998 = vpack.c.b16 %v3370, %v3369
    %v3999 = vpack.c.b16 %v3372, %v3371
    %v4000 = vpack.c.b16 %v3374, %v3373
    %v4001 = vpack.c.b16 %v3376, %v3375
    %v4002 = vpack.c.b16 %v3378, %v3377
    %v4003 = vpack.c.b16 %v3380, %v3379
    %v4004 = vpack.c.b16 %v3382, %v3381
    %v4005 = vpack.c.b16 %v3384, %v3383
    %v4006 = vpack.c.b16 %v3386, %v3385
    %v4007 = vpack.c.b16 %v3388, %v3387
    %v4008 = vpack.c.b16 %v3390, %v3389
    %v4009 = vpack.c.b16 %v3392, %v3391
    %v4010 = vpack.c.b16 %v3394, %v3393
    %v4011 = vpack.c.b16 %v3396, %v3395
    %v4012 = vpack.c.b16 %v3398, %v3397
    %v4013 = vpack.c.b16 %v3400, %v3399
    %v4014 = vpack.c.b16 %v3402, %v3401
    %v4015 = vpack.c.b16 %v3404, %v3403
    %v4016 = vpack.c.b16 %v3406, %v3405
    %v4017 = vpack.c.b16 %v3408, %v3407
    %v4018 = vpack.c.b16 %v3410, %v3409
    %v4019 = vpack.c.b16 %v3412, %v3411
    %v4020 = vpack.c.b16 %v3414, %v3413
    %v4021 = vpack.c.b16 %v3416, %v3415
    %v4022 = vpack.c.b16 %v3418, %v3417
    %v4023 = vpack.c.b16 %v3420, %v3419
    %v4024 = vpack.c.b16 %v3422, %v3421
    %v4025 = vpack.c.b16 %v3424, %v3423
    %v4026 = vpack.c.b16 %v3426, %v3425
    %v4027 = vpack.c.b16 %v3428, %v3427
    %v4028 = vpack.c.b16 %v3430, %v3429
    %v4029 = vpack.c.b16 %v3432, %v3431
    %v4030 = vpack.c.b16 %v3434, %v3433
    %v4031 = vpack.c.b16 %v3436, %v3435
    %v4032 = vpack.c.b16 %v3438, %v3437
    %v4033 = vpack.c.b16 %v3440, %v3439
    %v4034 = vpack.c.b16 %v3442, %v3441
    %v4035 = vpack.c.b16 %v3444, %v3443
    %v4036 = vpack.c.b16 %v3446, %v3445
    %v4037 = vpack.c.b16 %v3448, %v3447
    %v4038 = vpack.c.b16 %v3450, %v3449
    %v4039 = vpack.c.b16 %v3452, %v3451
    %v4040 = vpack.c.b16 %v3454, %v3453
    %v4041 = vpack.c.b16 %v3456, %v3455
    %v4042 = vpack.c.b16 %v3458, %v3457
    %v4043 = vpack.c.b16 %v3460, %v3459
    %v4044 = vpack.c.b16 %v3462, %v3461
    %v4045 = vpack.c.b16 %v3464, %v3463
    %v4046 = vpack.c.b16 %v3466, %v3465
    %v4047 = vpack.c.b16 %v3468, %v3467
    %v4048 = vpack.c.b16 %v3470, %v3469
    %v4049 = vpack.c.b16 %v3472, %v3471
    %v4050 = vpack.c.b16 %v3474, %v3473
    %v4051 = vpack.c.b16 %v3476, %v3475
    %v4052 = vpack.c.b16 %v3478, %v3477
    %v4053 = vpack.c.b16 %v3480, %v3479
    %v4054 = vpack.c.b16 %v3482, %v3481
    %v4055 = vpack.c.b16 %v3484, %v3483
    %v4056 = vpack.c.b16 %v3486, %v3485
    %v4057 = vpack.c.b16 %v3488, %v3487
    %v4058 = vpack.c.b16 %v3490, %v3489
    %v4059 = vpack.c.b16 %v3492, %v3491
    %v4060 = vpack.c.b16 %v3494, %v3493
    %v4061 = vpack.c.b16 %v3496, %v3495
    %v4062 = vpack.c.b16 %v3498, %v3497
    %v4063 = vpack.c.b16 %v3500, %v3499
    %v4064 = vpack.c.b16 %v3502, %v3501
    %v4065 = vpack.c.b16 %v3504, %v3503
    %v4066 = vpack.c.b16 %v3506, %v3505
    %v4067 = vpack.c.b16 %v3508, %v3507
    %v4068 = vpack.c.b16 %v3510, %v3509
    %v4069 = vpack.c.b16 %v3512, %v3511
    %v4070 = vpack.c.b16 %v3514, %v3513
    %v4071 = vpack.c.b16 %v3516, %v3515
    %v4072 = vpack.c.b16 %v3518, %v3517
    %v4073 = vpack.c.b16 %v3520, %v3519
    %v4074 = vpack.c.b16 %v3522, %v3521
    %v4075 = vpack.c.b16 %v3524, %v3523
    %v4076 = vpack.c.b16 %v3526, %v3525
    %v4077 = vpack.c.b16 %v3528, %v3527
    %v4078 = vpack.c.b16 %v3530, %v3529
    %v4079 = vpack.c.b16 %v3532, %v3531
    %v4080 = vpack.c.b16 %v3534, %v3533
    %v4081 = vpack.c.b16 %v3536, %v3535
    %v4082 = vpack.c.b16 %v3538, %v3537
    %v4083 = vpack.c.b16 %v3540, %v3539
    %v4084 = vpack.c.b16 %v3542, %v3541
    %v4085 = vpack.c.b16 %v3544, %v3543
    %v4086 = vpack.c.b16 %v3546, %v3545
    %v4087 = vpack.c.b16 %v3548, %v3547
    %v4088 = vpack.c.b16 %v3550, %v3549
    %v4089 = vpack.c.b16 %v3552, %v3551
    %v4090 = vpack.c.b16 %v3554, %v3553
    %v4091 = vpack.c.b16 %v3556, %v3555
    %v4092 = vpack.c.b16 %v3558, %v3557
    %v4093 = vpack.c.b16 %v3560, %v3559
    %v4094 = vpack.c.b16 %v3562, %v3561
    %v4095 = vpack.c.b16 %v3564, %v3563
    %v4096 = vpack.c.b16 %v3566, %v3565
    %v4097 = vpack.c.b16 %v3568, %v3567
    %v4098 = vpack.c.b16 %v3570, %v3569
    %v4099 = vpack.c.b16 %v3572, %v3571
    %v4100 = vpack.c.b16 %v3574, %v3573
    %v4101 = vpack.c.b16 %v3576, %v3575
    %v4102 = vpack.c.b16 %v3578, %v3577
    %v4103 = vpack.c.b16 %v3580, %v3579
    %v4104 = vpack.c.b16 %v3582, %v3581
    %v4105 = vpack.c.b16 %v3584, %v3583
    %v4106 = vpack.c.b16 %v3586, %v3585
    %v4107 = vpack.c.b16 %v3588, %v3587
    %v4108 = vpack.c.b16 %v3590, %v3589
    %v4109 = vpack.c.b16 %v3592, %v3591
    %v4110 = vpack.c.b16 %v3594, %v3593
    %v4111 = vpack.c.b16 %v3596, %v3595
    %v4112 = vpack.c.b16 %v3598, %v3597
    %v4113 = vpack.c.b16 %v3600, %v3599
    %v4114 = vpack.c.b16 %v3602, %v3601
    %v4115 = vpack.c.b16 %v3604, %v3603
    %v4116 = vpack.c.b16 %v3606, %v3605
    %v4117 = vpack.c.b16 %v3608, %v3607
    %v4118 = vpack.c.b16 %v3610, %v3609
    %v4119 = vpack.c.b16 %v3612, %v3611
    %v4120 = vpack.c.b16 %v3614, %v3613
    %v4121 = vpack.c.b16 %v3616, %v3615
    %v4122 = vpack.c.b16 %v3618, %v3617
    %v4123 = vpack.c.b16 %v3620, %v3619
    %v4124 = vpack.c.b16 %v3622, %v3621
    %v4125 = vpack.c.b16 %v3624, %v3623
    %v4126 = vpack.c.b16 %v3626, %v3625
    %v4127 = vpack.c.b16 %v3628, %v3627
    %v4128 = vpack.c.b16 %v3630, %v3629
    %v4129 = vpack.c.b16 %v3632, %v3631
    %v4130 = vpack.c.b16 %v3634, %v3633
    %v4131 = vpack.c.b16 %v3636, %v3635
    %v4132 = vpack.c.b16 %v3638, %v3637
    %v4133 = vpack.c.b16 %v3640, %v3639
    %v4134 = vpack.c.b16 %v3642, %v3641
    %v4135 = vpack.c.b16 %v3644, %v3643
    %v4136 = vpack.c.b16 %v3646, %v3645
    %v4137 = vpack.c.b16 %v3648, %v3647
    %v4138 = vpack.c.b16 %v3650, %v3649
    %v4139 = vpack.c.b16 %v3652, %v3651
    %v4140 = vpack.c.b16 %v3654, %v3653
    %v4141 = vpack.c.b16 %v3656, %v3655
    %v4142 = vpack.c.b16 %v3658, %v3657
    %v4143 = vpack.c.b16 %v3660, %v3659
    %v4144 = vpack.c.b16 %v3662, %v3661
    %v4145 = vpack.c.b16 %v3664, %v3663
    %v4146 = vpack.c.b16 %v3666, %v3665
    %v4147 = vpack.c.b16 %v3668, %v3667
    %v4148 = vpack.c.b16 %v3670, %v3669
    %v4149 = vpack.c.b16 %v3672, %v3671
    %v4150 = vpack.c.b16 %v3674, %v3673
    %v4151 = vpack.c.b16 %v3676, %v3675
    %v4152 = vpack.c.b16 %v3678, %v3677
    %v4153 = vpack.c.b16 %v3680, %v3679
    %v4154 = vpack.c.b16 %v3682, %v3681
    %v4155 = vpack.c.b16 %v3684, %v3683
    %v4156 = vpack.c.b16 %v3686, %v3685
    %v4157 = vpack.c.b16 %v3688, %v3687
    %v4158 = vpack.c.b16 %v3690, %v3689
    %v4159 = vpack.c.b16 %v3692, %v3691
    %v4160 = vpack.c.b16 %v3694, %v3693
    %v4161 = vpack.c.b16 %v3696, %v3695
    %v4162 = vpack.c.b16 %v3698, %v3697
    %v4163 = vpack.c.b16 %v3700, %v3699
    %v4164 = vpack.c.b16 %v3702, %v3701
    %v4165 = vpack.c.b16 %v3704, %v3703
    %v4166 = vpack.c.b16 %v3706, %v3705
    %v4167 = vpack.c.b16 %v3708, %v3707
    %v4168 = vpack.c.b16 %v3710, %v3709
    %v4169 = vpack.c.b16 %v3712, %v3711
    %v4170 = vpack.c.b16 %v3714, %v3713
    %v4171 = vpack.c.b16 %v3716, %v3715
    %v4172 = vpack.c.b16 %v3718, %v3717
    %v4173 = vpack.c.b16 %v3720, %v3719
    %v4174 = vpack.c.b16 %v3722, %v3721
    %v4175 = vpack.c.b16 %v3724, %v3723
    %v4176 = vpack.c.b16 %v3726, %v3725
    %v4177 = vpack.c.b16 %v3728, %v3727
    %v4178 = vpack.c.b16 %v3730, %v3729
    %v4179 = vpack.c.b16 %v3732, %v3731
    %v4180 = vpack.c.b16 %v3734, %v3733
    %v4181 = vpack.c.b16 %v3736, %v3735
    %v4182 = vpack.c.b16 %v3738, %v3737
    %v4183 = vpack.c.b16 %v3740, %v3739
    %v4184 = vpack.c.b16 %v3742, %v3741
    %v4185 = vpack.c.b16 %v3744, %v3743
    %v4186 = vpack.c.b16 %v3746, %v3745
    %v4187 = vpack.c.b16 %v3748, %v3747
    %v4188 = vpack.c.b16 %v3750, %v3749
    %v4189 = vpack.c.b16 %v3752, %v3751
    %v4190 = vpack.c.b16 %v3754, %v3753
    %v4191 = vpack.c.b16 %v3756, %v3755
    %v4192 = vpack.c.b16 %v3758, %v3757
    %v4193 = vpack.c.b16 %v3760, %v3759
    %v4194 = vpack.c.b16 %v3762, %v3761
    %v4195 = vpack.c.b16 %v3764, %v3763
    %v4196 = vpack.c.b16 %v3766, %v3765
    %v4197 = vpack.c.b16 %v3768, %v3767
    %v4198 = vpack.c.b16 %v3770, %v3769
    %v4199 = vpack.c.b16 %v3772, %v3771
    %v4200 = vpack.c.b16 %v3774, %v3773
    %v4201 = vpack.c.b16 %v3776, %v3775
    %v4202 = vpack.c.b16 %v3778, %v3777
    %v4203 = vpack.c.b16 %v3780, %v3779
    %v4204 = vpack.c.b16 %v3782, %v3781
    %v4205 = vpack.c.b16 %v3784, %v3783
    %v4206 = vpack.c.b16 %v3786, %v3785
    %v4207 = vpack.c.b16 %v3788, %v3787
    %v4208 = vpack.c.b16 %v3790, %v3789
    %v4209 = vpack.c.b16 %v3792, %v3791
    %v4210 = vpack.c.b16 %v3794, %v3793
    %v4211 = vpack.c.b16 %v3796, %v3795
    %v4212 = vpack.c.b16 %v3798, %v3797
    %v4213 = vpack.c.b16 %v3800, %v3799
    %v4214 = vpack.c.b16 %v3802, %v3801
    %v4215 = vpack.c.b16 %v3804, %v3803
    %v4216 = vpack.c.b16 %v3806, %v3805
    %v4217 = vpack.c.b16 %v3808, %v3807
    %v4218 = vpack.c.b16 %v3810, %v3809
    %v4219 = vpack.c.b16 %v3812, %v3811
    %v4220 = vpack.c.b16 %v3814, %v3813
    %v4221 = vpack.c.b16 %v3816, %v3815
    %v4222 = vpack.c.b16 %v3818, %v3817
    %v4223 = vpack.c.b16 %v3820, %v3819
    %v4224 = vpack.c.b16 %v3822, %v3821
    %v4225 = vpack.c.b16 %v3824, %v3823
    %v4226 = vpack.c.b16 %v3826, %v3825
    %v4227 = vpack.c.b16 %v3828, %v3827
    %v4228 = vpack.c.b16 %v3830, %v3829
    %v4229 = vpack.c.b16 %v3832, %v3831
    %v4230 = vpack.c.b16 %v3834, %v3833
    %v4231 = vpack.c.b16 %v3836, %v3835
    %v4232 = vpack.c.b16 %v3838, %v3837
    %v4233 = vpack.c.b16 %v3840, %v3839
    %v4234 = vpack.c.b16 %v3842, %v3841
    %v4235 = vpack.c.b16 %v3844, %v3843
    %v4236 = vpack.c.b16 %v3846, %v3845
    %v4237 = vpack.c.b16 %v3848, %v3847
    %v4238 = vpack.c.b16 %v3850, %v3849
    %v4239 = vpack.c.b16 %v3852, %v3851
    %v4240 = vpack.c.b16 %v3854, %v3853
    %v4241 = vpack.c.b16 %v3856, %v3855
    %v4242 = vpack.c.b16 %v3858, %v3857
    %v4243 = vpack.c.b16 %v3860, %v3859
    %v4244 = vpack.c.b16 %v3862, %v3861
    %v4245 = vpack.c.b16 %v3864, %v3863
    %v4246 = vpack.c.b16 %v3866, %v3865
    %v4247 = vpack.c.b16 %v3868, %v3867
    %v4248 = vpack.c.b16 %v3870, %v3869
    %v4249 = vpack.c.b16 %v3872, %v3871
    %v4250 = vpack.c.b16 %v3874, %v3873
    %4627 = vmatprep.subr.bf16.mxu0 0
    %4628 = vmatpush1.bf16.msra.mxu0 %v3875
    %4629 = vmatprep.subr.bf16.mxu0 0
    %4630 = vmatpush1.bf16.msra.mxu0 %v3876
    %4631 = vmatprep.subr.bf16.mxu0 0
    %4632 = vmatpush1.bf16.msra.mxu0 %v3877
    %4633 = vmatprep.subr.bf16.mxu0 0
    %4634 = vmatpush1.bf16.msra.mxu0 %v3878
    %4635 = vmatprep.subr.bf16.mxu0 0
    %4636 = vmatpush1.bf16.msra.mxu0 %v3879
    %4637 = vmatprep.subr.bf16.mxu0 0
    %4638 = vmatpush1.bf16.msra.mxu0 %v3880
    %4639 = vmatprep.subr.bf16.mxu0 0
    %4640 = vmatpush1.bf16.msra.mxu0 %v3881
    %4641 = vmatprep.subr.bf16.mxu0 0
    %4642 = vmatpush1.bf16.msra.mxu0 %v3882
    %4643 = vmatprep.subr.bf16.mxu0 0
    %4644 = vmatpush1.bf16.msra.mxu0 %v3883
    %4645 = vmatprep.subr.bf16.mxu0 0
    %4646 = vmatpush1.bf16.msra.mxu0 %v3884
    %4647 = vmatprep.subr.bf16.mxu0 0
    %4648 = vmatpush1.bf16.msra.mxu0 %v3885
    %4649 = vmatprep.subr.bf16.mxu0 0
    %4650 = vmatpush1.bf16.msra.mxu0 %v3886
    %4651 = vmatprep.subr.bf16.mxu0 0
    %4652 = vmatpush1.bf16.msra.mxu0 %v3887
    %4653 = vmatprep.subr.bf16.mxu0 0
    %4654 = vmatpush1.bf16.msra.mxu0 %v3888
    %4655 = vmatprep.subr.bf16.mxu0 0
    %4656 = vmatpush1.bf16.msra.mxu0 %v3889
    %4657 = vmatprep.subr.bf16.mxu0 0
    %4658 = vmatpush1.bf16.msra.mxu0 %v3890
    %4659 = vmatprep.mubr.bf16.mxu0 %v1566
    %4660 = vmatmul.mubr.bf16.gmra.mrb[0].mxu0 %v1565
    %v4661 = vpop.f32.mrb[0].mxu0
    %v4662 = vadd.f32 %v2369, %v4661
    %v4663 = vpop.f32.mrb[0].mxu0
    %v4664 = vpop.f32.mrb[0].mxu0
    %v4665 = vpop.f32.mrb[0].mxu0
    %4666 = vdwg.mxu0
    %4667 = vmatprep.subr.bf16.mxu0 0
    %4668 = vmatpush1.bf16.msra.mxu0 %v3891
    %4669 = vmatprep.subr.bf16.mxu0 0
    %4670 = vmatpush1.bf16.msra.mxu0 %v3892
    %4671 = vmatprep.subr.bf16.mxu0 0
    %4672 = vmatpush1.bf16.msra.mxu0 %v3893
    %4673 = vmatprep.subr.bf16.mxu0 0
    %4674 = vmatpush1.bf16.msra.mxu0 %v3894
    %4675 = vmatprep.subr.bf16.mxu0 0
    %4676 = vmatpush1.bf16.msra.mxu0 %v3895
    %4677 = vmatprep.subr.bf16.mxu0 0
    %4678 = vmatpush1.bf16.msra.mxu0 %v3896
    %4679 = vmatprep.subr.bf16.mxu0 0
    %4680 = vmatpush1.bf16.msra.mxu0 %v3897
    %4681 = vmatprep.subr.bf16.mxu0 0
    %4682 = vmatpush1.bf16.msra.mxu0 %v3898
    %4683 = vmatprep.subr.bf16.mxu0 0
    %4684 = vmatpush1.bf16.msra.mxu0 %v3899
    %4685 = vmatprep.subr.bf16.mxu0 0
    %4686 = vmatpush1.bf16.msra.mxu0 %v3900
    %4687 = vmatprep.subr.bf16.mxu0 0
    %4688 = vmatpush1.bf16.msra.mxu0 %v3901
    %4689 = vmatprep.subr.bf16.mxu0 0
    %4690 = vmatpush1.bf16.msra.mxu0 %v3902
    %4691 = vmatprep.subr.bf16.mxu0 0
    %4692 = vmatpush1.bf16.msra.mxu0 %v3903
    %4693 = vmatprep.subr.bf16.mxu0 0
    %4694 = vmatpush1.bf16.msra.mxu0 %v3904
    %4695 = vmatprep.subr.bf16.mxu0 0
    %4696 = vmatpush1.bf16.msra.mxu0 %v3905
    %4697 = vmatprep.subr.bf16.mxu0 0
    %4698 = vmatpush1.bf16.msra.mxu0 %v3906
    %4699 = vmatprep.mubr.bf16.mxu0 %v1568
    %4700 = vmatmul.mubr.bf16.gmra.mrb[0].mxu0 %v1567
    %v4701 = vpop.f32.mrb[0].mxu0
    %v4702 = vadd.f32 %v4662, %v4701
    %v4703 = vpop.f32.mrb[0].mxu0
    %v4704 = vpop.f32.mrb[0].mxu0
    %v4705 = vpop.f32.mrb[0].mxu0
    %4706 = vdwg.mxu0
    %4707 = vmatprep.subr.bf16.mxu0 0
    %4708 = vmatpush1.bf16.msra.mxu0 %v3907
    %4709 = vmatprep.subr.bf16.mxu0 0
    %4710 = vmatpush1.bf16.msra.mxu0 %v3908
    %4711 = vmatprep.subr.bf16.mxu0 0
    %4712 = vmatpush1.bf16.msra.mxu0 %v3909
    %4713 = vmatprep.subr.bf16.mxu0 0
    %4714 = vmatpush1.bf16.msra.mxu0 %v3910
    %4715 = vmatprep.subr.bf16.mxu0 0
    %4716 = vmatpush1.bf16.msra.mxu0 %v3911
    %4717 = vmatprep.subr.bf16.mxu0 0
    %4718 = vmatpush1.bf16.msra.mxu0 %v3912
    %4719 = vmatprep.subr.bf16.mxu0 0
    %4720 = vmatpush1.bf16.msra.mxu0 %v3913
    %4721 = vmatprep.subr.bf16.mxu0 0
    %4722 = vmatpush1.bf16.msra.mxu0 %v3914
    %4723 = vmatprep.subr.bf16.mxu0 0
    %4724 = vmatpush1.bf16.msra.mxu0 %v3915
    %4725 = vmatprep.subr.bf16.mxu0 0
    %4726 = vmatpush1.bf16.msra.mxu0 %v3916
    %4727 = vmatprep.subr.bf16.mxu0 0
    %4728 = vmatpush1.bf16.msra.mxu0 %v3917
    %4729 = vmatprep.subr.bf16.mxu0 0
    %4730 = vmatpush1.bf16.msra.mxu0 %v3918
    %4731 = vmatprep.subr.bf16.mxu0 0
    %4732 = vmatpush1.bf16.msra.mxu0 %v3919
    %4733 = vmatprep.subr.bf16.mxu0 0
    %4734 = vmatpush1.bf16.msra.mxu0 %v3920
    %4735 = vmatprep.subr.bf16.mxu0 0
    %4736 = vmatpush1.bf16.msra.mxu0 %v3921
    %4737 = vmatprep.subr.bf16.mxu0 0
    %4738 = vmatpush1.bf16.msra.mxu0 %v3922
    %4739 = vmatprep.mubr.bf16.mxu0 %v1570
    %4740 = vmatmul.mubr.bf16.gmra.mrb[0].mxu0 %v1569
    %v4741 = vpop.f32.mrb[0].mxu0
    %v4742 = vadd.f32 %v4702, %v4741
    %v4743 = vpop.f32.mrb[0].mxu0
    %v4744 = vpop.f32.mrb[0].mxu0
    %v4745 = vpop.f32.mrb[0].mxu0
    %4746 = vdwg.mxu0
    %4747 = vmatprep.subr.bf16.mxu0 0
    %4748 = vmatpush1.bf16.msra.mxu0 %v3923
    %4749 = vmatprep.subr.bf16.mxu0 0
    %4750 = vmatpush1.bf16.msra.mxu0 %v3924
    %4751 = vmatprep.subr.bf16.mxu0 0
    %4752 = vmatpush1.bf16.msra.mxu0 %v3925
    %4753 = vmatprep.subr.bf16.mxu0 0
    %4754 = vmatpush1.bf16.msra.mxu0 %v3926
    %4755 = vmatprep.subr.bf16.mxu0 0
    %4756 = vmatpush1.bf16.msra.mxu0 %v3927
    %4757 = vmatprep.subr.bf16.mxu0 0
    %4758 = vmatpush1.bf16.msra.mxu0 %v3928
    %4759 = vmatprep.subr.bf16.mxu0 0
    %4760 = vmatpush1.bf16.msra.mxu0 %v3929
    %4761 = vmatprep.subr.bf16.mxu0 0
    %4762 = vmatpush1.bf16.msra.mxu0 %v3930
    %4763 = vmatprep.subr.bf16.mxu0 0
    %4764 = vmatpush1.bf16.msra.mxu0 %v3931
    %4765 = vmatprep.subr.bf16.mxu0 0
    %4766 = vmatpush1.bf16.msra.mxu0 %v3932
    %4767 = vmatprep.subr.bf16.mxu0 0
    %4768 = vmatpush1.bf16.msra.mxu0 %v3933
    %4769 = vmatprep.subr.bf16.mxu0 0
    %4770 = vmatpush1.bf16.msra.mxu0 %v3934
    %4771 = vmatprep.subr.bf16.mxu0 0
    %4772 = vmatpush1.bf16.msra.mxu0 %v3935
    %4773 = vmatprep.subr.bf16.mxu0 0
    %4774 = vmatpush1.bf16.msra.mxu0 %v3936
    %4775 = vmatprep.subr.bf16.mxu0 0
    %4776 = vmatpush1.bf16.msra.mxu0 %v3937
    %4777 = vmatprep.subr.bf16.mxu0 0
    %4778 = vmatpush1.bf16.msra.mxu0 %v3938
    %4779 = vmatprep.mubr.bf16.mxu0 %v1572
    %4780 = vmatmul.mubr.bf16.gmra.mrb[0].mxu0 %v1571
    %v4781 = vpop.f32.mrb[0].mxu0
    %v4782 = vadd.f32 %v4742, %v4781
    %v4783 = vpop.f32.mrb[0].mxu0
    %v4784 = vpop.f32.mrb[0].mxu0
    %v4785 = vpop.f32.mrb[0].mxu0
    %4786 = vdwg.mxu0
    %4787 = vmatprep.subr.bf16.mxu0 0
    %4788 = vmatpush1.bf16.msra.mxu0 %v3939
    %4789 = vmatprep.subr.bf16.mxu0 0
    %4790 = vmatpush1.bf16.msra.mxu0 %v3940
    %4791 = vmatprep.subr.bf16.mxu0 0
    %4792 = vmatpush1.bf16.msra.mxu0 %v3941
    %4793 = vmatprep.subr.bf16.mxu0 0
    %4794 = vmatpush1.bf16.msra.mxu0 %v3942
    %4795 = vmatprep.subr.bf16.mxu0 0
    %4796 = vmatpush1.bf16.msra.mxu0 %v3943
    %4797 = vmatprep.subr.bf16.mxu0 0
    %4798 = vmatpush1.bf16.msra.mxu0 %v3944
    %4799 = vmatprep.subr.bf16.mxu0 0
    %4800 = vmatpush1.bf16.msra.mxu0 %v3945
    %4801 = vmatprep.subr.bf16.mxu0 0
    %4802 = vmatpush1.bf16.msra.mxu0 %v3946
    %4803 = vmatprep.subr.bf16.mxu0 0
    %4804 = vmatpush1.bf16.msra.mxu0 %v3947
    %4805 = vmatprep.subr.bf16.mxu0 0
    %4806 = vmatpush1.bf16.msra.mxu0 %v3948
    %4807 = vmatprep.subr.bf16.mxu0 0
    %4808 = vmatpush1.bf16.msra.mxu0 %v3949
    %4809 = vmatprep.subr.bf16.mxu0 0
    %4810 = vmatpush1.bf16.msra.mxu0 %v3950
    %4811 = vmatprep.subr.bf16.mxu0 0
    %4812 = vmatpush1.bf16.msra.mxu0 %v3951
    %4813 = vmatprep.subr.bf16.mxu0 0
    %4814 = vmatpush1.bf16.msra.mxu0 %v3952
    %4815 = vmatprep.subr.bf16.mxu0 0
    %4816 = vmatpush1.bf16.msra.mxu0 %v3953
    %4817 = vmatprep.subr.bf16.mxu0 0
    %4818 = vmatpush1.bf16.msra.mxu0 %v3954
    %4819 = vmatprep.mubr.bf16.mxu0 %v1574
    %4820 = vmatmul.mubr.bf16.gmra.mrb[0].mxu0 %v1573
    %v4821 = vpop.f32.mrb[0].mxu0
    %v4822 = vadd.f32 %v4782, %v4821
    %v4823 = vpop.f32.mrb[0].mxu0
    %v4824 = vpop.f32.mrb[0].mxu0
    %v4825 = vpop.f32.mrb[0].mxu0
    %4826 = vdwg.mxu0
    %4827 = vmatprep.subr.bf16.mxu0 0
    %4828 = vmatpush1.bf16.msra.mxu0 %v3955
    %4829 = vmatprep.subr.bf16.mxu0 0
    %4830 = vmatpush1.bf16.msra.mxu0 %v3956
    %4831 = vmatprep.subr.bf16.mxu0 0
    %4832 = vmatpush1.bf16.msra.mxu0 %v3957
    %4833 = vmatprep.subr.bf16.mxu0 0
    %4834 = vmatpush1.bf16.msra.mxu0 %v3958
    %4835 = vmatprep.subr.bf16.mxu0 0
    %4836 = vmatpush1.bf16.msra.mxu0 %v3959
    %4837 = vmatprep.subr.bf16.mxu0 0
    %4838 = vmatpush1.bf16.msra.mxu0 %v3960
    %4839 = vmatprep.subr.bf16.mxu0 0
    %4840 = vmatpush1.bf16.msra.mxu0 %v3961
    %4841 = vmatprep.subr.bf16.mxu0 0
    %4842 = vmatpush1.bf16.msra.mxu0 %v3962
    %4843 = vmatprep.subr.bf16.mxu0 0
    %4844 = vmatpush1.bf16.msra.mxu0 %v3963
    %4845 = vmatprep.subr.bf16.mxu0 0
    %4846 = vmatpush1.bf16.msra.mxu0 %v3964
    %4847 = vmatprep.subr.bf16.mxu0 0
    %4848 = vmatpush1.bf16.msra.mxu0 %v3965
    %4849 = vmatprep.subr.bf16.mxu0 0
    %4850 = vmatpush1.bf16.msra.mxu0 %v3966
    %4851 = vmatprep.subr.bf16.mxu0 0
    %4852 = vmatpush1.bf16.msra.mxu0 %v3967
    %4853 = vmatprep.subr.bf16.mxu0 0
    %4854 = vmatpush1.bf16.msra.mxu0 %v3968
    %4855 = vmatprep.subr.bf16.mxu0 0
    %4856 = vmatpush1.bf16.msra.mxu0 %v3969
    %4857 = vmatprep.subr.bf16.mxu0 0
    %4858 = vmatpush1.bf16.msra.mxu0 %v3970
    %4859 = vmatprep.mubr.bf16.mxu0 %v1576
    %4860 = vmatmul.mubr.bf16.gmra.mrb[0].mxu0 %v1575
    %v4861 = vpop.f32.mrb[0].mxu0
    %v4862 = vadd.f32 %v4822, %v4861
    %v4863 = vpop.f32.mrb[0].mxu0
    %v4864 = vpop.f32.mrb[0].mxu0
    %v4865 = vpop.f32.mrb[0].mxu0
    %4866 = vdwg.mxu0
    %4867 = vmatprep.subr.bf16.mxu0 0
    %4868 = vmatpush1.bf16.msra.mxu0 %v3971
    %4869 = vmatprep.subr.bf16.mxu0 0
    %4870 = vmatpush1.bf16.msra.mxu0 %v3972
    %4871 = vmatprep.subr.bf16.mxu0 0
    %4872 = vmatpush1.bf16.msra.mxu0 %v3973
    %4873 = vmatprep.subr.bf16.mxu0 0
    %4874 = vmatpush1.bf16.msra.mxu0 %v3974
    %4875 = vmatprep.subr.bf16.mxu0 0
    %4876 = vmatpush1.bf16.msra.mxu0 %v3975
    %4877 = vmatprep.subr.bf16.mxu0 0
    %4878 = vmatpush1.bf16.msra.mxu0 %v3976
    %4879 = vmatprep.subr.bf16.mxu0 0
    %4880 = vmatpush1.bf16.msra.mxu0 %v3977
    %4881 = vmatprep.subr.bf16.mxu0 0
    %4882 = vmatpush1.bf16.msra.mxu0 %v3978
    %4883 = vmatprep.subr.bf16.mxu0 0
    %4884 = vmatpush1.bf16.msra.mxu0 %v3979
    %4885 = vmatprep.subr.bf16.mxu0 0
    %4886 = vmatpush1.bf16.msra.mxu0 %v3980
    %4887 = vmatprep.subr.bf16.mxu0 0
    %4888 = vmatpush1.bf16.msra.mxu0 %v3981
    %4889 = vmatprep.subr.bf16.mxu0 0
    %4890 = vmatpush1.bf16.msra.mxu0 %v3982
    %4891 = vmatprep.subr.bf16.mxu0 0
    %4892 = vmatpush1.bf16.msra.mxu0 %v3983
    %4893 = vmatprep.subr.bf16.mxu0 0
    %4894 = vmatpush1.bf16.msra.mxu0 %v3984
    %4895 = vmatprep.subr.bf16.mxu0 0
    %4896 = vmatpush1.bf16.msra.mxu0 %v3985
    %4897 = vmatprep.subr.bf16.mxu0 0
    %4898 = vmatpush1.bf16.msra.mxu0 %v3986
    %4899 = vmatprep.mubr.bf16.mxu0 %v1578
    %4900 = vmatmul.mubr.bf16.gmra.mrb[0].mxu0 %v1577
    %v4901 = vpop.f32.mrb[0].mxu0
    %v4902 = vadd.f32 %v4862, %v4901
    %v4903 = vpop.f32.mrb[0].mxu0
    %v4904 = vpop.f32.mrb[0].mxu0
    %v4905 = vpop.f32.mrb[0].mxu0
    %4906 = vdwg.mxu0
    %4907 = vmatprep.subr.bf16.mxu0 0
    %4908 = vmatpush1.bf16.msra.mxu0 %v3987
    %4909 = vmatprep.subr.bf16.mxu0 0
    %4910 = vmatpush1.bf16.msra.mxu0 %v3988
    %4911 = vmatprep.subr.bf16.mxu0 0
    %4912 = vmatpush1.bf16.msra.mxu0 %v3989
    %4913 = vmatprep.subr.bf16.mxu0 0
    %4914 = vmatpush1.bf16.msra.mxu0 %v3990
    %4915 = vmatprep.subr.bf16.mxu0 0
    %4916 = vmatpush1.bf16.msra.mxu0 %v3991
    %4917 = vmatprep.subr.bf16.mxu0 0
    %4918 = vmatpush1.bf16.msra.mxu0 %v3992
    %4919 = vmatprep.subr.bf16.mxu0 0
    %4920 = vmatpush1.bf16.msra.mxu0 %v3993
    %4921 = vmatprep.subr.bf16.mxu0 0
    %4922 = vmatpush1.bf16.msra.mxu0 %v3994
    %4923 = vmatprep.subr.bf16.mxu0 0
    %4924 = vmatpush1.bf16.msra.mxu0 %v3995
    %4925 = vmatprep.subr.bf16.mxu0 0
    %4926 = vmatpush1.bf16.msra.mxu0 %v3996
    %4927 = vmatprep.subr.bf16.mxu0 0
    %4928 = vmatpush1.bf16.msra.mxu0 %v3997
    %4929 = vmatprep.subr.bf16.mxu0 0
    %4930 = vmatpush1.bf16.msra.mxu0 %v3998
    %4931 = vmatprep.subr.bf16.mxu0 0
    %4932 = vmatpush1.bf16.msra.mxu0 %v3999
    %4933 = vmatprep.subr.bf16.mxu0 0
    %4934 = vmatpush1.bf16.msra.mxu0 %v4000
    %4935 = vmatprep.subr.bf16.mxu0 0
    %4936 = vmatpush1.bf16.msra.mxu0 %v4001
    %4937 = vmatprep.subr.bf16.mxu0 0
    %4938 = vmatpush1.bf16.msra.mxu0 %v4002
    %4939 = vmatprep.mubr.bf16.mxu0 %v1580
    %4940 = vmatmul.mubr.bf16.gmra.mrb[0].mxu0 %v1579
    %v4941 = vpop.f32.mrb[0].mxu0
    %v4942 = vadd.f32 %v4902, %v4941
    %v4943 = vpop.f32.mrb[0].mxu0
    %v4944 = vpop.f32.mrb[0].mxu0
    %v4945 = vpop.f32.mrb[0].mxu0
    %4946 = vdwg.mxu0
    %4947 = vmatprep.subr.bf16.mxu0 0
    %4948 = vmatpush1.bf16.msra.mxu0 %v4003
    %4949 = vmatprep.subr.bf16.mxu0 0
    %4950 = vmatpush1.bf16.msra.mxu0 %v4004
    %4951 = vmatprep.subr.bf16.mxu0 0
    %4952 = vmatpush1.bf16.msra.mxu0 %v4005
    %4953 = vmatprep.subr.bf16.mxu0 0
    %4954 = vmatpush1.bf16.msra.mxu0 %v4006
    %4955 = vmatprep.subr.bf16.mxu0 0
    %4956 = vmatpush1.bf16.msra.mxu0 %v4007
    %4957 = vmatprep.subr.bf16.mxu0 0
    %4958 = vmatpush1.bf16.msra.mxu0 %v4008
    %4959 = vmatprep.subr.bf16.mxu0 0
    %4960 = vmatpush1.bf16.msra.mxu0 %v4009
    %4961 = vmatprep.subr.bf16.mxu0 0
    %4962 = vmatpush1.bf16.msra.mxu0 %v4010
    %4963 = vmatprep.subr.bf16.mxu0 0
    %4964 = vmatpush1.bf16.msra.mxu0 %v4011
    %4965 = vmatprep.subr.bf16.mxu0 0
    %4966 = vmatpush1.bf16.msra.mxu0 %v4012
    %4967 = vmatprep.subr.bf16.mxu0 0
    %4968 = vmatpush1.bf16.msra.mxu0 %v4013
    %4969 = vmatprep.subr.bf16.mxu0 0
    %4970 = vmatpush1.bf16.msra.mxu0 %v4014
    %4971 = vmatprep.subr.bf16.mxu0 0
    %4972 = vmatpush1.bf16.msra.mxu0 %v4015
    %4973 = vmatprep.subr.bf16.mxu0 0
    %4974 = vmatpush1.bf16.msra.mxu0 %v4016
    %4975 = vmatprep.subr.bf16.mxu0 0
    %4976 = vmatpush1.bf16.msra.mxu0 %v4017
    %4977 = vmatprep.subr.bf16.mxu0 0
    %4978 = vmatpush1.bf16.msra.mxu0 %v4018
    %4979 = vmatprep.mubr.bf16.mxu0 %v1582
    %4980 = vmatmul.mubr.bf16.gmra.mrb[0].mxu0 %v1581
    %v4981 = vpop.f32.mrb[0].mxu0
    %v4982 = vadd.f32 %v4942, %v4981
    %v4983 = vpop.f32.mrb[0].mxu0
    %v4984 = vpop.f32.mrb[0].mxu0
    %v4985 = vpop.f32.mrb[0].mxu0
    %4986 = vdwg.mxu0
    %4987 = vmatprep.subr.bf16.mxu0 0
    %4988 = vmatpush1.bf16.msra.mxu0 %v4019
    %4989 = vmatprep.subr.bf16.mxu0 0
    %4990 = vmatpush1.bf16.msra.mxu0 %v4020
    %4991 = vmatprep.subr.bf16.mxu0 0
    %4992 = vmatpush1.bf16.msra.mxu0 %v4021
    %4993 = vmatprep.subr.bf16.mxu0 0
    %4994 = vmatpush1.bf16.msra.mxu0 %v4022
    %4995 = vmatprep.subr.bf16.mxu0 0
    %4996 = vmatpush1.bf16.msra.mxu0 %v4023
    %4997 = vmatprep.subr.bf16.mxu0 0
    %4998 = vmatpush1.bf16.msra.mxu0 %v4024
    %4999 = vmatprep.subr.bf16.mxu0 0
    %5000 = vmatpush1.bf16.msra.mxu0 %v4025
    %5001 = vmatprep.subr.bf16.mxu0 0
    %5002 = vmatpush1.bf16.msra.mxu0 %v4026
    %5003 = vmatprep.subr.bf16.mxu0 0
    %5004 = vmatpush1.bf16.msra.mxu0 %v4027
    %5005 = vmatprep.subr.bf16.mxu0 0
    %5006 = vmatpush1.bf16.msra.mxu0 %v4028
    %5007 = vmatprep.subr.bf16.mxu0 0
    %5008 = vmatpush1.bf16.msra.mxu0 %v4029
    %5009 = vmatprep.subr.bf16.mxu0 0
    %5010 = vmatpush1.bf16.msra.mxu0 %v4030
    %5011 = vmatprep.subr.bf16.mxu0 0
    %5012 = vmatpush1.bf16.msra.mxu0 %v4031
    %5013 = vmatprep.subr.bf16.mxu0 0
    %5014 = vmatpush1.bf16.msra.mxu0 %v4032
    %5015 = vmatprep.subr.bf16.mxu0 0
    %5016 = vmatpush1.bf16.msra.mxu0 %v4033
    %5017 = vmatprep.subr.bf16.mxu0 0
    %5018 = vmatpush1.bf16.msra.mxu0 %v4034
    %5019 = vmatprep.mubr.bf16.mxu0 %v1584
    %5020 = vmatmul.mubr.bf16.gmra.mrb[0].mxu0 %v1583
    %v5021 = vpop.f32.mrb[0].mxu0
    %v5022 = vadd.f32 %v4982, %v5021
    %v5023 = vpop.f32.mrb[0].mxu0
    %v5024 = vpop.f32.mrb[0].mxu0
    %v5025 = vpop.f32.mrb[0].mxu0
    %5026 = vdwg.mxu0
    %5027 = vmatprep.subr.bf16.mxu0 0
    %5028 = vmatpush1.bf16.msra.mxu0 %v4035
    %5029 = vmatprep.subr.bf16.mxu0 0
    %5030 = vmatpush1.bf16.msra.mxu0 %v4036
    %5031 = vmatprep.subr.bf16.mxu0 0
    %5032 = vmatpush1.bf16.msra.mxu0 %v4037
    %5033 = vmatprep.subr.bf16.mxu0 0
    %5034 = vmatpush1.bf16.msra.mxu0 %v4038
    %5035 = vmatprep.subr.bf16.mxu0 0
    %5036 = vmatpush1.bf16.msra.mxu0 %v4039
    %5037 = vmatprep.subr.bf16.mxu0 0
    %5038 = vmatpush1.bf16.msra.mxu0 %v4040
    %5039 = vmatprep.subr.bf16.mxu0 0
    %5040 = vmatpush1.bf16.msra.mxu0 %v4041
    %5041 = vmatprep.subr.bf16.mxu0 0
    %5042 = vmatpush1.bf16.msra.mxu0 %v4042
    %5043 = vmatprep.subr.bf16.mxu0 0
    %5044 = vmatpush1.bf16.msra.mxu0 %v4043
    %5045 = vmatprep.subr.bf16.mxu0 0
    %5046 = vmatpush1.bf16.msra.mxu0 %v4044
    %5047 = vmatprep.subr.bf16.mxu0 0
    %5048 = vmatpush1.bf16.msra.mxu0 %v4045
    %5049 = vmatprep.subr.bf16.mxu0 0
    %5050 = vmatpush1.bf16.msra.mxu0 %v4046
    %5051 = vmatprep.subr.bf16.mxu0 0
    %5052 = vmatpush1.bf16.msra.mxu0 %v4047
    %5053 = vmatprep.subr.bf16.mxu0 0
    %5054 = vmatpush1.bf16.msra.mxu0 %v4048
    %5055 = vmatprep.subr.bf16.mxu0 0
    %5056 = vmatpush1.bf16.msra.mxu0 %v4049
    %5057 = vmatprep.subr.bf16.mxu0 0
    %5058 = vmatpush1.bf16.msra.mxu0 %v4050
    %5059 = vmatprep.mubr.bf16.mxu0 %v1586
    %5060 = vmatmul.mubr.bf16.gmra.mrb[0].mxu0 %v1585
    %v5061 = vpop.f32.mrb[0].mxu0
    %v5062 = vadd.f32 %v5022, %v5061
    %v5063 = vpop.f32.mrb[0].mxu0
    %v5064 = vpop.f32.mrb[0].mxu0
    %v5065 = vpop.f32.mrb[0].mxu0
    %5066 = vdwg.mxu0
    %5067 = vmatprep.subr.bf16.mxu0 0
    %5068 = vmatpush1.bf16.msra.mxu0 %v4051
    %5069 = vmatprep.subr.bf16.mxu0 0
    %5070 = vmatpush1.bf16.msra.mxu0 %v4052
    %5071 = vmatprep.subr.bf16.mxu0 0
    %5072 = vmatpush1.bf16.msra.mxu0 %v4053
    %5073 = vmatprep.subr.bf16.mxu0 0
    %5074 = vmatpush1.bf16.msra.mxu0 %v4054
    %5075 = vmatprep.subr.bf16.mxu0 0
    %5076 = vmatpush1.bf16.msra.mxu0 %v4055
    %5077 = vmatprep.subr.bf16.mxu0 0
    %5078 = vmatpush1.bf16.msra.mxu0 %v4056
    %5079 = vmatprep.subr.bf16.mxu0 0
    %5080 = vmatpush1.bf16.msra.mxu0 %v4057
    %5081 = vmatprep.subr.bf16.mxu0 0
    %5082 = vmatpush1.bf16.msra.mxu0 %v4058
    %5083 = vmatprep.subr.bf16.mxu0 0
    %5084 = vmatpush1.bf16.msra.mxu0 %v4059
    %5085 = vmatprep.subr.bf16.mxu0 0
    %5086 = vmatpush1.bf16.msra.mxu0 %v4060
    %5087 = vmatprep.subr.bf16.mxu0 0
    %5088 = vmatpush1.bf16.msra.mxu0 %v4061
    %5089 = vmatprep.subr.bf16.mxu0 0
    %5090 = vmatpush1.bf16.msra.mxu0 %v4062
    %5091 = vmatprep.subr.bf16.mxu0 0
    %5092 = vmatpush1.bf16.msra.mxu0 %v4063
    %5093 = vmatprep.subr.bf16.mxu0 0
    %5094 = vmatpush1.bf16.msra.mxu0 %v4064
    %5095 = vmatprep.subr.bf16.mxu0 0
    %5096 = vmatpush1.bf16.msra.mxu0 %v4065
    %5097 = vmatprep.subr.bf16.mxu0 0
    %5098 = vmatpush1.bf16.msra.mxu0 %v4066
    %5099 = vmatprep.mubr.bf16.mxu0 %v1588
    %5100 = vmatmul.mubr.bf16.gmra.mrb[0].mxu0 %v1587
    %v5101 = vpop.f32.mrb[0].mxu0
    %v5102 = vadd.f32 %v5062, %v5101
    %v5103 = vpop.f32.mrb[0].mxu0
    %v5104 = vpop.f32.mrb[0].mxu0
    %v5105 = vpop.f32.mrb[0].mxu0
    %5106 = vdwg.mxu0
    %5107 = vmatprep.subr.bf16.mxu0 0
    %5108 = vmatpush1.bf16.msra.mxu0 %v4067
    %5109 = vmatprep.subr.bf16.mxu0 0
    %5110 = vmatpush1.bf16.msra.mxu0 %v4068
    %5111 = vmatprep.subr.bf16.mxu0 0
    %5112 = vmatpush1.bf16.msra.mxu0 %v4069
    %5113 = vmatprep.subr.bf16.mxu0 0
    %5114 = vmatpush1.bf16.msra.mxu0 %v4070
    %5115 = vmatprep.subr.bf16.mxu0 0
    %5116 = vmatpush1.bf16.msra.mxu0 %v4071
    %5117 = vmatprep.subr.bf16.mxu0 0
    %5118 = vmatpush1.bf16.msra.mxu0 %v4072
    %5119 = vmatprep.subr.bf16.mxu0 0
    %5120 = vmatpush1.bf16.msra.mxu0 %v4073
    %5121 = vmatprep.subr.bf16.mxu0 0
    %5122 = vmatpush1.bf16.msra.mxu0 %v4074
    %5123 = vmatprep.subr.bf16.mxu0 0
    %5124 = vmatpush1.bf16.msra.mxu0 %v4075
    %5125 = vmatprep.subr.bf16.mxu0 0
    %5126 = vmatpush1.bf16.msra.mxu0 %v4076
    %5127 = vmatprep.subr.bf16.mxu0 0
    %5128 = vmatpush1.bf16.msra.mxu0 %v4077
    %5129 = vmatprep.subr.bf16.mxu0 0
    %5130 = vmatpush1.bf16.msra.mxu0 %v4078
    %5131 = vmatprep.subr.bf16.mxu0 0
    %5132 = vmatpush1.bf16.msra.mxu0 %v4079
    %5133 = vmatprep.subr.bf16.mxu0 0
    %5134 = vmatpush1.bf16.msra.mxu0 %v4080
    %5135 = vmatprep.subr.bf16.mxu0 0
    %5136 = vmatpush1.bf16.msra.mxu0 %v4081
    %5137 = vmatprep.subr.bf16.mxu0 0
    %5138 = vmatpush1.bf16.msra.mxu0 %v4082
    %5139 = vmatprep.mubr.bf16.mxu0 %v1590
    %5140 = vmatmul.mubr.bf16.gmra.mrb[0].mxu0 %v1589
    %v5141 = vpop.f32.mrb[0].mxu0
    %v5142 = vadd.f32 %v5102, %v5141
    %v5143 = vpop.f32.mrb[0].mxu0
    %v5144 = vpop.f32.mrb[0].mxu0
    %v5145 = vpop.f32.mrb[0].mxu0
    %5146 = vdwg.mxu0
    %5147 = vmatprep.subr.bf16.mxu0 0
    %5148 = vmatpush1.bf16.msra.mxu0 %v4083
    %5149 = vmatprep.subr.bf16.mxu0 0
    %5150 = vmatpush1.bf16.msra.mxu0 %v4084
    %5151 = vmatprep.subr.bf16.mxu0 0
    %5152 = vmatpush1.bf16.msra.mxu0 %v4085
    %5153 = vmatprep.subr.bf16.mxu0 0
    %5154 = vmatpush1.bf16.msra.mxu0 %v4086
    %5155 = vmatprep.subr.bf16.mxu0 0
    %5156 = vmatpush1.bf16.msra.mxu0 %v4087
    %5157 = vmatprep.subr.bf16.mxu0 0
    %5158 = vmatpush1.bf16.msra.mxu0 %v4088
    %5159 = vmatprep.subr.bf16.mxu0 0
    %5160 = vmatpush1.bf16.msra.mxu0 %v4089
    %5161 = vmatprep.subr.bf16.mxu0 0
    %5162 = vmatpush1.bf16.msra.mxu0 %v4090
    %5163 = vmatprep.subr.bf16.mxu0 0
    %5164 = vmatpush1.bf16.msra.mxu0 %v4091
    %5165 = vmatprep.subr.bf16.mxu0 0
    %5166 = vmatpush1.bf16.msra.mxu0 %v4092
    %5167 = vmatprep.subr.bf16.mxu0 0
    %5168 = vmatpush1.bf16.msra.mxu0 %v4093
    %5169 = vmatprep.subr.bf16.mxu0 0
    %5170 = vmatpush1.bf16.msra.mxu0 %v4094
    %5171 = vmatprep.subr.bf16.mxu0 0
    %5172 = vmatpush1.bf16.msra.mxu0 %v4095
    %5173 = vmatprep.subr.bf16.mxu0 0
    %5174 = vmatpush1.bf16.msra.mxu0 %v4096
    %5175 = vmatprep.subr.bf16.mxu0 0
    %5176 = vmatpush1.bf16.msra.mxu0 %v4097
    %5177 = vmatprep.subr.bf16.mxu0 0
    %5178 = vmatpush1.bf16.msra.mxu0 %v4098
    %5179 = vmatprep.mubr.bf16.mxu0 %v1592
    %5180 = vmatmul.mubr.bf16.gmra.mrb[0].mxu0 %v1591
    %v5181 = vpop.f32.mrb[0].mxu0
    %v5182 = vadd.f32 %v5142, %v5181
    %v5183 = vpop.f32.mrb[0].mxu0
    %v5184 = vpop.f32.mrb[0].mxu0
    %v5185 = vpop.f32.mrb[0].mxu0
    %5186 = vdwg.mxu0
    %5187 = vmatprep.subr.bf16.mxu0 0
    %5188 = vmatpush1.bf16.msra.mxu0 %v4099
    %5189 = vmatprep.subr.bf16.mxu0 0
    %5190 = vmatpush1.bf16.msra.mxu0 %v4100
    %5191 = vmatprep.subr.bf16.mxu0 0
    %5192 = vmatpush1.bf16.msra.mxu0 %v4101
    %5193 = vmatprep.subr.bf16.mxu0 0
    %5194 = vmatpush1.bf16.msra.mxu0 %v4102
    %5195 = vmatprep.subr.bf16.mxu0 0
    %5196 = vmatpush1.bf16.msra.mxu0 %v4103
    %5197 = vmatprep.subr.bf16.mxu0 0
    %5198 = vmatpush1.bf16.msra.mxu0 %v4104
    %5199 = vmatprep.subr.bf16.mxu0 0
    %5200 = vmatpush1.bf16.msra.mxu0 %v4105
    %5201 = vmatprep.subr.bf16.mxu0 0
    %5202 = vmatpush1.bf16.msra.mxu0 %v4106
    %5203 = vmatprep.subr.bf16.mxu0 0
    %5204 = vmatpush1.bf16.msra.mxu0 %v4107
    %5205 = vmatprep.subr.bf16.mxu0 0
    %5206 = vmatpush1.bf16.msra.mxu0 %v4108
    %5207 = vmatprep.subr.bf16.mxu0 0
    %5208 = vmatpush1.bf16.msra.mxu0 %v4109
    %5209 = vmatprep.subr.bf16.mxu0 0
    %5210 = vmatpush1.bf16.msra.mxu0 %v4110
    %5211 = vmatprep.subr.bf16.mxu0 0
    %5212 = vmatpush1.bf16.msra.mxu0 %v4111
    %5213 = vmatprep.subr.bf16.mxu0 0
    %5214 = vmatpush1.bf16.msra.mxu0 %v4112
    %5215 = vmatprep.subr.bf16.mxu0 0
    %5216 = vmatpush1.bf16.msra.mxu0 %v4113
    %5217 = vmatprep.subr.bf16.mxu0 0
    %5218 = vmatpush1.bf16.msra.mxu0 %v4114
    %5219 = vmatprep.mubr.bf16.mxu0 %v1594
    %5220 = vmatmul.mubr.bf16.gmra.mrb[0].mxu0 %v1593
    %v5221 = vpop.f32.mrb[0].mxu0
    %v5222 = vadd.f32 %v5182, %v5221
    %v5223 = vpop.f32.mrb[0].mxu0
    %v5224 = vpop.f32.mrb[0].mxu0
    %v5225 = vpop.f32.mrb[0].mxu0
    %5226 = vdwg.mxu0
    %5227 = vmatprep.subr.bf16.mxu0 0
    %5228 = vmatpush1.bf16.msra.mxu0 %v4115
    %5229 = vmatprep.subr.bf16.mxu0 0
    %5230 = vmatpush1.bf16.msra.mxu0 %v4116
    %5231 = vmatprep.subr.bf16.mxu0 0
    %5232 = vmatpush1.bf16.msra.mxu0 %v4117
    %5233 = vmatprep.subr.bf16.mxu0 0
    %5234 = vmatpush1.bf16.msra.mxu0 %v4118
    %5235 = vmatprep.subr.bf16.mxu0 0
    %5236 = vmatpush1.bf16.msra.mxu0 %v4119
    %5237 = vmatprep.subr.bf16.mxu0 0
    %5238 = vmatpush1.bf16.msra.mxu0 %v4120
    %5239 = vmatprep.subr.bf16.mxu0 0
    %5240 = vmatpush1.bf16.msra.mxu0 %v4121
    %5241 = vmatprep.subr.bf16.mxu0 0
    %5242 = vmatpush1.bf16.msra.mxu0 %v4122
    %5243 = vmatprep.subr.bf16.mxu0 0
    %5244 = vmatpush1.bf16.msra.mxu0 %v4123
    %5245 = vmatprep.subr.bf16.mxu0 0
    %5246 = vmatpush1.bf16.msra.mxu0 %v4124
    %5247 = vmatprep.subr.bf16.mxu0 0
    %5248 = vmatpush1.bf16.msra.mxu0 %v4125
    %5249 = vmatprep.subr.bf16.mxu0 0
    %5250 = vmatpush1.bf16.msra.mxu0 %v4126
    %5251 = vmatprep.subr.bf16.mxu0 0
    %5252 = vmatpush1.bf16.msra.mxu0 %v4127
    %5253 = vmatprep.subr.bf16.mxu0 0
    %5254 = vmatpush1.bf16.msra.mxu0 %v4128
    %5255 = vmatprep.subr.bf16.mxu0 0
    %5256 = vmatpush1.bf16.msra.mxu0 %v4129
    %5257 = vmatprep.subr.bf16.mxu0 0
    %5258 = vmatpush1.bf16.msra.mxu0 %v4130
    %5259 = vmatprep.mubr.bf16.mxu0 %v1596
    %5260 = vmatmul.mubr.bf16.gmra.mrb[0].mxu0 %v1595
    %v5261 = vpop.f32.mrb[0].mxu0
    %v5262 = vadd.f32 %v5222, %v5261
    %v5263 = vpop.f32.mrb[0].mxu0
    %v5264 = vpop.f32.mrb[0].mxu0
    %v5265 = vpop.f32.mrb[0].mxu0
    %5266 = vdwg.mxu0
    %5267 = vmatprep.subr.bf16.mxu0 0
    %5268 = vmatpush1.bf16.msra.mxu0 %v4131
    %5269 = vmatprep.subr.bf16.mxu0 0
    %5270 = vmatpush1.bf16.msra.mxu0 %v4132
    %5271 = vmatprep.subr.bf16.mxu0 0
    %5272 = vmatpush1.bf16.msra.mxu0 %v4133
    %5273 = vmatprep.subr.bf16.mxu0 0
    %5274 = vmatpush1.bf16.msra.mxu0 %v4134
    %5275 = vmatprep.subr.bf16.mxu0 0
    %5276 = vmatpush1.bf16.msra.mxu0 %v4135
    %5277 = vmatprep.subr.bf16.mxu0 0
    %5278 = vmatpush1.bf16.msra.mxu0 %v4136
    %5279 = vmatprep.subr.bf16.mxu0 0
    %5280 = vmatpush1.bf16.msra.mxu0 %v4137
    %5281 = vmatprep.subr.bf16.mxu0 0
    %5282 = vmatpush1.bf16.msra.mxu0 %v4138
    %5283 = vmatprep.subr.bf16.mxu0 0
    %5284 = vmatpush1.bf16.msra.mxu0 %v4139
    %5285 = vmatprep.subr.bf16.mxu0 0
    %5286 = vmatpush1.bf16.msra.mxu0 %v4140
    %5287 = vmatprep.subr.bf16.mxu0 0
    %5288 = vmatpush1.bf16.msra.mxu0 %v4141
    %5289 = vmatprep.subr.bf16.mxu0 0
    %5290 = vmatpush1.bf16.msra.mxu0 %v4142
    %5291 = vmatprep.subr.bf16.mxu0 0
    %5292 = vmatpush1.bf16.msra.mxu0 %v4143
    %5293 = vmatprep.subr.bf16.mxu0 0
    %5294 = vmatpush1.bf16.msra.mxu0 %v4144
    %5295 = vmatprep.subr.bf16.mxu0 0
    %5296 = vmatpush1.bf16.msra.mxu0 %v4145
    %5297 = vmatprep.subr.bf16.mxu0 0
    %5298 = vmatpush1.bf16.msra.mxu0 %v4146
    %5299 = vmatprep.mubr.bf16.mxu0 %v1598
    %5300 = vmatmul.mubr.bf16.gmra.mrb[0].mxu0 %v1597
    %v5301 = vpop.f32.mrb[0].mxu0
    %v5302 = vadd.f32 %v5262, %v5301
    %v5303 = vpop.f32.mrb[0].mxu0
    %v5304 = vpop.f32.mrb[0].mxu0
    %v5305 = vpop.f32.mrb[0].mxu0
    %5306 = vdwg.mxu0
    %5307 = vmatprep.subr.bf16.mxu0 0
    %5308 = vmatpush1.bf16.msra.mxu0 %v4147
    %5309 = vmatprep.subr.bf16.mxu0 0
    %5310 = vmatpush1.bf16.msra.mxu0 %v4148
    %5311 = vmatprep.subr.bf16.mxu0 0
    %5312 = vmatpush1.bf16.msra.mxu0 %v4149
    %5313 = vmatprep.subr.bf16.mxu0 0
    %5314 = vmatpush1.bf16.msra.mxu0 %v4150
    %5315 = vmatprep.subr.bf16.mxu0 0
    %5316 = vmatpush1.bf16.msra.mxu0 %v4151
    %5317 = vmatprep.subr.bf16.mxu0 0
    %5318 = vmatpush1.bf16.msra.mxu0 %v4152
    %5319 = vmatprep.subr.bf16.mxu0 0
    %5320 = vmatpush1.bf16.msra.mxu0 %v4153
    %5321 = vmatprep.subr.bf16.mxu0 0
    %5322 = vmatpush1.bf16.msra.mxu0 %v4154
    %5323 = vmatprep.subr.bf16.mxu0 0
    %5324 = vmatpush1.bf16.msra.mxu0 %v4155
    %5325 = vmatprep.subr.bf16.mxu0 0
    %5326 = vmatpush1.bf16.msra.mxu0 %v4156
    %5327 = vmatprep.subr.bf16.mxu0 0
    %5328 = vmatpush1.bf16.msra.mxu0 %v4157
    %5329 = vmatprep.subr.bf16.mxu0 0
    %5330 = vmatpush1.bf16.msra.mxu0 %v4158
    %5331 = vmatprep.subr.bf16.mxu0 0
    %5332 = vmatpush1.bf16.msra.mxu0 %v4159
    %5333 = vmatprep.subr.bf16.mxu0 0
    %5334 = vmatpush1.bf16.msra.mxu0 %v4160
    %5335 = vmatprep.subr.bf16.mxu0 0
    %5336 = vmatpush1.bf16.msra.mxu0 %v4161
    %5337 = vmatprep.subr.bf16.mxu0 0
    %5338 = vmatpush1.bf16.msra.mxu0 %v4162
    %5339 = vmatprep.mubr.bf16.mxu0 %v1600
    %5340 = vmatmul.mubr.bf16.gmra.mrb[0].mxu0 %v1599
    %v5341 = vpop.f32.mrb[0].mxu0
    %v5342 = vadd.f32 %v5302, %v5341
    %v5343 = vpop.f32.mrb[0].mxu0
    %v5344 = vpop.f32.mrb[0].mxu0
    %v5345 = vpop.f32.mrb[0].mxu0
    %5346 = vdwg.mxu0
    %5347 = vmatprep.subr.bf16.mxu0 0
    %5348 = vmatpush1.bf16.msra.mxu0 %v4163
    %5349 = vmatprep.subr.bf16.mxu0 0
    %5350 = vmatpush1.bf16.msra.mxu0 %v4164
    %5351 = vmatprep.subr.bf16.mxu0 0
    %5352 = vmatpush1.bf16.msra.mxu0 %v4165
    %5353 = vmatprep.subr.bf16.mxu0 0
    %5354 = vmatpush1.bf16.msra.mxu0 %v4166
    %5355 = vmatprep.subr.bf16.mxu0 0
    %5356 = vmatpush1.bf16.msra.mxu0 %v4167
    %5357 = vmatprep.subr.bf16.mxu0 0
    %5358 = vmatpush1.bf16.msra.mxu0 %v4168
    %5359 = vmatprep.subr.bf16.mxu0 0
    %5360 = vmatpush1.bf16.msra.mxu0 %v4169
    %5361 = vmatprep.subr.bf16.mxu0 0
    %5362 = vmatpush1.bf16.msra.mxu0 %v4170
    %5363 = vmatprep.subr.bf16.mxu0 0
    %5364 = vmatpush1.bf16.msra.mxu0 %v4171
    %5365 = vmatprep.subr.bf16.mxu0 0
    %5366 = vmatpush1.bf16.msra.mxu0 %v4172
    %5367 = vmatprep.subr.bf16.mxu0 0
    %5368 = vmatpush1.bf16.msra.mxu0 %v4173
    %5369 = vmatprep.subr.bf16.mxu0 0
    %5370 = vmatpush1.bf16.msra.mxu0 %v4174
    %5371 = vmatprep.subr.bf16.mxu0 0
    %5372 = vmatpush1.bf16.msra.mxu0 %v4175
    %5373 = vmatprep.subr.bf16.mxu0 0
    %5374 = vmatpush1.bf16.msra.mxu0 %v4176
    %5375 = vmatprep.subr.bf16.mxu0 0
    %5376 = vmatpush1.bf16.msra.mxu0 %v4177
    %5377 = vmatprep.subr.bf16.mxu0 0
    %5378 = vmatpush1.bf16.msra.mxu0 %v4178
    %5379 = vmatprep.mubr.bf16.mxu0 %v1602
    %5380 = vmatmul.mubr.bf16.gmra.mrb[0].mxu0 %v1601
    %v5381 = vpop.f32.mrb[0].mxu0
    %v5382 = vadd.f32 %v5342, %v5381
    %v5383 = vpop.f32.mrb[0].mxu0
    %v5384 = vpop.f32.mrb[0].mxu0
    %v5385 = vpop.f32.mrb[0].mxu0
    %5386 = vdwg.mxu0
    %5387 = vmatprep.subr.bf16.mxu0 0
    %5388 = vmatpush1.bf16.msra.mxu0 %v4179
    %5389 = vmatprep.subr.bf16.mxu0 0
    %5390 = vmatpush1.bf16.msra.mxu0 %v4180
    %5391 = vmatprep.subr.bf16.mxu0 0
    %5392 = vmatpush1.bf16.msra.mxu0 %v4181
    %5393 = vmatprep.subr.bf16.mxu0 0
    %5394 = vmatpush1.bf16.msra.mxu0 %v4182
    %5395 = vmatprep.subr.bf16.mxu0 0
    %5396 = vmatpush1.bf16.msra.mxu0 %v4183
    %5397 = vmatprep.subr.bf16.mxu0 0
    %5398 = vmatpush1.bf16.msra.mxu0 %v4184
    %5399 = vmatprep.subr.bf16.mxu0 0
    %5400 = vmatpush1.bf16.msra.mxu0 %v4185
    %5401 = vmatprep.subr.bf16.mxu0 0
    %5402 = vmatpush1.bf16.msra.mxu0 %v4186
    %5403 = vmatprep.subr.bf16.mxu0 0
    %5404 = vmatpush1.bf16.msra.mxu0 %v4187
    %5405 = vmatprep.subr.bf16.mxu0 0
    %5406 = vmatpush1.bf16.msra.mxu0 %v4188
    %5407 = vmatprep.subr.bf16.mxu0 0
    %5408 = vmatpush1.bf16.msra.mxu0 %v4189
    %5409 = vmatprep.subr.bf16.mxu0 0
    %5410 = vmatpush1.bf16.msra.mxu0 %v4190
    %5411 = vmatprep.subr.bf16.mxu0 0
    %5412 = vmatpush1.bf16.msra.mxu0 %v4191
    %5413 = vmatprep.subr.bf16.mxu0 0
    %5414 = vmatpush1.bf16.msra.mxu0 %v4192
    %5415 = vmatprep.subr.bf16.mxu0 0
    %5416 = vmatpush1.bf16.msra.mxu0 %v4193
    %5417 = vmatprep.subr.bf16.mxu0 0
    %5418 = vmatpush1.bf16.msra.mxu0 %v4194
    %5419 = vmatprep.mubr.bf16.mxu0 %v1604
    %5420 = vmatmul.mubr.bf16.gmra.mrb[0].mxu0 %v1603
    %v5421 = vpop.f32.mrb[0].mxu0
    %v5422 = vadd.f32 %v5382, %v5421
    %v5423 = vpop.f32.mrb[0].mxu0
    %v5424 = vpop.f32.mrb[0].mxu0
    %v5425 = vpop.f32.mrb[0].mxu0
    %5426 = vdwg.mxu0
    %5427 = vmatprep.subr.bf16.mxu0 0
    %5428 = vmatpush1.bf16.msra.mxu0 %v4195
    %5429 = vmatprep.subr.bf16.mxu0 0
    %5430 = vmatpush1.bf16.msra.mxu0 %v4196
    %5431 = vmatprep.subr.bf16.mxu0 0
    %5432 = vmatpush1.bf16.msra.mxu0 %v4197
    %5433 = vmatprep.subr.bf16.mxu0 0
    %5434 = vmatpush1.bf16.msra.mxu0 %v4198
    %5435 = vmatprep.subr.bf16.mxu0 0
    %5436 = vmatpush1.bf16.msra.mxu0 %v4199
    %5437 = vmatprep.subr.bf16.mxu0 0
    %5438 = vmatpush1.bf16.msra.mxu0 %v4200
    %5439 = vmatprep.subr.bf16.mxu0 0
    %5440 = vmatpush1.bf16.msra.mxu0 %v4201
    %5441 = vmatprep.subr.bf16.mxu0 0
    %5442 = vmatpush1.bf16.msra.mxu0 %v4202
    %5443 = vmatprep.subr.bf16.mxu0 0
    %5444 = vmatpush1.bf16.msra.mxu0 %v4203
    %5445 = vmatprep.subr.bf16.mxu0 0
    %5446 = vmatpush1.bf16.msra.mxu0 %v4204
    %5447 = vmatprep.subr.bf16.mxu0 0
    %5448 = vmatpush1.bf16.msra.mxu0 %v4205
    %5449 = vmatprep.subr.bf16.mxu0 0
    %5450 = vmatpush1.bf16.msra.mxu0 %v4206
    %5451 = vmatprep.subr.bf16.mxu0 0
    %5452 = vmatpush1.bf16.msra.mxu0 %v4207
    %5453 = vmatprep.subr.bf16.mxu0 0
    %5454 = vmatpush1.bf16.msra.mxu0 %v4208
    %5455 = vmatprep.subr.bf16.mxu0 0
    %5456 = vmatpush1.bf16.msra.mxu0 %v4209
    %5457 = vmatprep.subr.bf16.mxu0 0
    %5458 = vmatpush1.bf16.msra.mxu0 %v4210
    %5459 = vmatprep.mubr.bf16.mxu0 %v1606
    %5460 = vmatmul.mubr.bf16.gmra.mrb[0].mxu0 %v1605
    %v5461 = vpop.f32.mrb[0].mxu0
    %v5462 = vadd.f32 %v5422, %v5461
    %v5463 = vpop.f32.mrb[0].mxu0
    %v5464 = vpop.f32.mrb[0].mxu0
    %v5465 = vpop.f32.mrb[0].mxu0
    %5466 = vdwg.mxu0
    %5467 = vmatprep.subr.bf16.mxu0 0
    %5468 = vmatpush1.bf16.msra.mxu0 %v4211
    %5469 = vmatprep.subr.bf16.mxu0 0
    %5470 = vmatpush1.bf16.msra.mxu0 %v4212
    %5471 = vmatprep.subr.bf16.mxu0 0
    %5472 = vmatpush1.bf16.msra.mxu0 %v4213
    %5473 = vmatprep.subr.bf16.mxu0 0
    %5474 = vmatpush1.bf16.msra.mxu0 %v4214
    %5475 = vmatprep.subr.bf16.mxu0 0
    %5476 = vmatpush1.bf16.msra.mxu0 %v4215
    %5477 = vmatprep.subr.bf16.mxu0 0
    %5478 = vmatpush1.bf16.msra.mxu0 %v4216
    %5479 = vmatprep.subr.bf16.mxu0 0
    %5480 = vmatpush1.bf16.msra.mxu0 %v4217
    %5481 = vmatprep.subr.bf16.mxu0 0
    %5482 = vmatpush1.bf16.msra.mxu0 %v4218
    %5483 = vmatprep.subr.bf16.mxu0 0
    %5484 = vmatpush1.bf16.msra.mxu0 %v4219
    %5485 = vmatprep.subr.bf16.mxu0 0
    %5486 = vmatpush1.bf16.msra.mxu0 %v4220
    %5487 = vmatprep.subr.bf16.mxu0 0
    %5488 = vmatpush1.bf16.msra.mxu0 %v4221
    %5489 = vmatprep.subr.bf16.mxu0 0
    %5490 = vmatpush1.bf16.msra.mxu0 %v4222
    %5491 = vmatprep.subr.bf16.mxu0 0
    %5492 = vmatpush1.bf16.msra.mxu0 %v4223
    %5493 = vmatprep.subr.bf16.mxu0 0
    %5494 = vmatpush1.bf16.msra.mxu0 %v4224
    %5495 = vmatprep.subr.bf16.mxu0 0
    %5496 = vmatpush1.bf16.msra.mxu0 %v4225
    %5497 = vmatprep.subr.bf16.mxu0 0
    %5498 = vmatpush1.bf16.msra.mxu0 %v4226
    %5499 = vmatprep.mubr.bf16.mxu0 %v1608
    %5500 = vmatmul.mubr.bf16.gmra.mrb[0].mxu0 %v1607
    %v5501 = vpop.f32.mrb[0].mxu0
    %v5502 = vadd.f32 %v5462, %v5501
    %v5503 = vpop.f32.mrb[0].mxu0
    %v5504 = vpop.f32.mrb[0].mxu0
    %v5505 = vpop.f32.mrb[0].mxu0
    %5506 = vdwg.mxu0
    %5507 = vmatprep.subr.bf16.mxu0 0
    %5508 = vmatpush1.bf16.msra.mxu0 %v4227
    %5509 = vmatprep.subr.bf16.mxu0 0
    %5510 = vmatpush1.bf16.msra.mxu0 %v4228
    %5511 = vmatprep.subr.bf16.mxu0 0
    %5512 = vmatpush1.bf16.msra.mxu0 %v4229
    %5513 = vmatprep.subr.bf16.mxu0 0
    %5514 = vmatpush1.bf16.msra.mxu0 %v4230
    %5515 = vmatprep.subr.bf16.mxu0 0
    %5516 = vmatpush1.bf16.msra.mxu0 %v4231
    %5517 = vmatprep.subr.bf16.mxu0 0
    %5518 = vmatpush1.bf16.msra.mxu0 %v4232
    %5519 = vmatprep.subr.bf16.mxu0 0
    %5520 = vmatpush1.bf16.msra.mxu0 %v4233
    %5521 = vmatprep.subr.bf16.mxu0 0
    %5522 = vmatpush1.bf16.msra.mxu0 %v4234
    %5523 = vmatprep.subr.bf16.mxu0 0
    %5524 = vmatpush1.bf16.msra.mxu0 %v4235
    %5525 = vmatprep.subr.bf16.mxu0 0
    %5526 = vmatpush1.bf16.msra.mxu0 %v4236
    %5527 = vmatprep.subr.bf16.mxu0 0
    %5528 = vmatpush1.bf16.msra.mxu0 %v4237
    %5529 = vmatprep.subr.bf16.mxu0 0
    %5530 = vmatpush1.bf16.msra.mxu0 %v4238
    %5531 = vmatprep.subr.bf16.mxu0 0
    %5532 = vmatpush1.bf16.msra.mxu0 %v4239
    %5533 = vmatprep.subr.bf16.mxu0 0
    %5534 = vmatpush1.bf16.msra.mxu0 %v4240
    %5535 = vmatprep.subr.bf16.mxu0 0
    %5536 = vmatpush1.bf16.msra.mxu0 %v4241
    %5537 = vmatprep.subr.bf16.mxu0 0
    %5538 = vmatpush1.bf16.msra.mxu0 %v4242
    %5539 = vmatprep.mubr.bf16.mxu0 %v1610
    %5540 = vmatmul.mubr.bf16.gmra.mrb[0].mxu0 %v1609
    %v5541 = vpop.f32.mrb[0].mxu0
    %v5542 = vadd.f32 %v5502, %v5541
    %v5543 = vpop.f32.mrb[0].mxu0
    %v5544 = vpop.f32.mrb[0].mxu0
    %v5545 = vpop.f32.mrb[0].mxu0
    %5546 = vdwg.mxu0
    %5547 = vmatprep.subr.bf16.mxu0 0
    %5548 = vmatpush1.bf16.msra.mxu0 %v4243
    %5549 = vmatprep.subr.bf16.mxu0 0
    %5550 = vmatpush1.bf16.msra.mxu0 %v4244
    %5551 = vmatprep.subr.bf16.mxu0 0
    %5552 = vmatpush1.bf16.msra.mxu0 %v4245
    %5553 = vmatprep.subr.bf16.mxu0 0
    %5554 = vmatpush1.bf16.msra.mxu0 %v4246
    %5555 = vmatprep.subr.bf16.mxu0 0
    %5556 = vmatpush1.bf16.msra.mxu0 %v4247
    %5557 = vmatprep.subr.bf16.mxu0 0
    %5558 = vmatpush1.bf16.msra.mxu0 %v4248
    %5559 = vmatprep.subr.bf16.mxu0 0
    %5560 = vmatpush1.bf16.msra.mxu0 %v4249
    %5561 = vmatprep.subr.bf16.mxu0 0
    %5562 = vmatpush1.bf16.msra.mxu0 %v4250
    %5563 = vmatprep.subr.bf16.mxu0 0
    %5564 = vmatpush1.bf16.msra.mxu0 0
    %5565 = vmatprep.subr.bf16.mxu0 0
    %5566 = vmatpush1.bf16.msra.mxu0 0
    %5567 = vmatprep.subr.bf16.mxu0 0
    %5568 = vmatpush1.bf16.msra.mxu0 0
    %5569 = vmatprep.subr.bf16.mxu0 0
    %5570 = vmatpush1.bf16.msra.mxu0 0
    %5571 = vmatprep.subr.bf16.mxu0 0
    %5572 = vmatpush1.bf16.msra.mxu0 0
    %5573 = vmatprep.subr.bf16.mxu0 0
    %5574 = vmatpush1.bf16.msra.mxu0 0
    %5575 = vmatprep.subr.bf16.mxu0 0
    %5576 = vmatpush1.bf16.msra.mxu0 0
    %5577 = vmatprep.subr.bf16.mxu0 0
    %5578 = vmatpush1.bf16.msra.mxu0 0
    %5579 = vmatprep.mubr.bf16.mxu0 0
    %5580 = vmatmul.mubr.bf16.gmra.mrb[0].mxu0 %v1611
    %v5581 = vpop.f32.mrb[0].mxu0
    %v5582 = vadd.f32 %v5542, %v5581
    %v5583 = vpop.f32.mrb[0].mxu0
    %v5584 = vpop.f32.mrb[0].mxu0
    %v5585 = vpop.f32.mrb[0].mxu0
    %5586 = vdwg.mxu0
    %5587 = vst [vmem:[%s4] sm:$0xff] %v5582
  $region25: #{ensemble_three_forward.1} parent=0 // pred_fallthru
    _
  // Predicated region
  $region26: #{ensemble_three_forward.1} parent=0 // pred_check
    _
  $region27: #{ensemble_three_forward.1} parent=0 // pred_check_branch
    %5589 = sbr.rel (0) target = $region29
  $region28: #{ensemble_three_forward.1} parent=0 // pred_region
    _
  $region29: #{ensemble_three_forward.1} parent=0 // pred_fallthru
    _
  // Predicated region
  $region30: #{ensemble_three_forward.1} parent=0 // pred_check
    _
  $region31: #{ensemble_three_forward.1} parent=0 // pred_check_branch
    %5591 = sbr.rel (0) target = $region33
  $region32: #{ensemble_three_forward.1} parent=0 // pred_region
    _
  $region33: #{ensemble_three_forward.1} parent=0 // pred_fallthru
    _

</llo_original>
